<compile_context>
chip_gen: v5e
topology: v5e:2x2
jax: 0.10.0
libtpu: 0.0.40
codegen_flags: <defaults>
</compile_context>

<pallas_src>
import functools

import jax
import jax.numpy as jnp
from jax import lax
from jax.experimental import pallas as pl
from jax.experimental.pallas import tpu as pltpu

LANE = 128
SUBLANE = 8


def _round_up(x, m):
    return (x + m - 1) // m * m


def _pick_time_tile(T):
    # Largest divisor of T in [1, 32], preferring one in [4, 16].  Never pad T:
    # padding changes the backward-through-padding state (dense nn.LSTM semantics).
    divs = [d for d in range(1, min(T, 32) + 1) if T % d == 0]
    pref = [d for d in divs if 4 <= d <= 16]
    return max(pref) if pref else max(divs)


# ---------------------------------------------------------------------------
# Fused kernel: per-tile input projection + interleaved bidirectional recurrence
#               + last-valid-step gather + FC + masked log_softmax.
#
# Gate lane layout (interleaved, each slot HP = multiple-of-128 lanes wide):
#   [ i_f | i_b | f_f | f_b | g_f | g_b | o_f | o_b ]          (8*HP lanes)
# State lane layout:
#   [ h_f | h_b ]  /  [ c_f | c_b ]  /  [ sel_f | sel_b ]      (2*HP lanes)
# ---------------------------------------------------------------------------
def _bilstm_kernel(num_classes,
                   len_ref, xf_ref, xb_ref,
                   wihf_ref, wihb_ref, bias_ref, whh_ref, fcw_ref, fcb_ref,
                   out_ref,
                   h_ref, c_ref, sel_ref, pf_ref, pb_ref):
    t_idx = pl.program_id(1)
    nt = pl.num_programs(1)
    TT, BB, E = xf_ref.shape
    G8 = pf_ref.shape[-1]            # 8 * HP
    HP = G8 // 8
    H2 = 2 * HP

    @pl.when(t_idx == 0)
    def _init():
        z = jnp.zeros((BB, H2), jnp.float32)
        h_ref[...] = z
        c_ref[...] = z
        sel_ref[...] = z

    # ---- fused input projection for the whole time tile (both directions) ----
    # xf tile is in forward time order, xb tile is the time-reversed tile (via the
    # index_map).  W_ih is pre-scattered so forward gates land in the even HP slots
    # and backward gates in the odd HP slots; the zero columns cost negligible MXU
    # work and let the serial loop consume one interleaved (BB, 8*HP) preact per step.
    xf = xf_ref[...].reshape(TT * BB, E)
    xb = xb_ref[...].reshape(TT * BB, E)
    pf_ref[...] = (jnp.dot(xf, wihf_ref[...], preferred_element_type=jnp.float32)
                   + bias_ref[...]).reshape(TT, BB, G8)
    pb_ref[...] = jnp.dot(xb, wihb_ref[...],
                          preferred_element_type=jnp.float32).reshape(TT, BB, G8)

    last = len_ref[...].astype(jnp.int32) - 1        # (BB, 1): last valid step index
    base_f = t_idx * TT                              # global t at local i = 0 (forward)
    base_b = (nt - 1 - t_idx) * TT + TT - 1          # global t at local i = 0 (backward)

    # Per-lane-half "current time" bookkeeping for the last-valid-step capture,
    # hoisted out of the serial loop.
    lane = lax.broadcasted_iota(jnp.int32, (1, H2), 1)
    is_fwd = lane < HP
    t_base = jnp.where(is_fwd, base_f, base_b)       # (1, 2*HP)
    t_dir = jnp.where(is_fwd, 1, -1)                 # (1, 2*HP)

    def step(i, carry):
        h, c, sel = carry                            # each (BB, 2*HP) f32
        # One block-diagonal matmul covers both directions (K = 2*HP fills the
        # 256-deep MXU on v6e/v7x); preactivations are just VMEM reads + adds.
        gates = (jnp.dot(h.astype(jnp.bfloat16), whh_ref[...],
                         preferred_element_type=jnp.float32)
                 + pf_ref[i] + pb_ref[TT - 1 - i])    # (BB, 8*HP)
        # Fused fwd+bwd cell math: 2*HP-wide, lane-tile-aligned gate slices.
        i_g = jax.nn.sigmoid(gates[:, 0 * H2:1 * H2])
        f_g = jax.nn.sigmoid(gates[:, 1 * H2:2 * H2])
        g_g = jnp.tanh(gates[:, 2 * H2:3 * H2])
        o_g = jax.nn.sigmoid(gates[:, 3 * H2:4 * H2])
        c = f_g * c + i_g * g_g
        h = o_g * jnp.tanh(c)
        t_lane = t_base + t_dir * i                  # fwd time | bwd time per lane half
        sel = jnp.where(last == t_lane, h, sel)      # hidden at the last valid step
        return h, c, sel

    carry0 = (h_ref[...], c_ref[...], sel_ref[...])
    h, c, sel = lax.fori_loop(0, TT, step, carry0, unroll=True)
    h_ref[...] = h
    c_ref[...] = c
    sel_ref[...] = sel

    @pl.when(t_idx == nt - 1)
    def _finalize():
        # Single FC matmul over the stacked [sel_f | sel_b] state, then a lane-dense,
        # class-padded log_softmax.
        logits = (jnp.dot(sel.astype(jnp.bfloat16), fcw_ref[...],
                          preferred_element_type=jnp.float32) + fcb_ref[...])
        col = lax.broadcasted_iota(jnp.int32, logits.shape, 1)
        valid = col < num_classes
        logits = jnp.where(valid, logits, -1e30)     # mask padded classes
        m = jnp.max(logits, axis=1, keepdims=True)
        z = logits - m
        lse = jnp.log(jnp.sum(jnp.exp(z), axis=1, keepdims=True))
        out_ref[...] = jnp.where(valid, z - lse, 0.0)


# ---------------------------------------------------------------------------
# Wrapper: one-time parameter repacking + one pallas_call
# ---------------------------------------------------------------------------
def _scatter_gate_cols(w, H, HP, first_slot):
    """(rows, 4H) -> (rows, 8*HP): gate k placed at lanes (first_slot + 2k)*HP .. +H."""
    out = jnp.zeros((w.shape[0], 8 * HP), w.dtype)
    for k in range(4):
        s = (first_slot + 2 * k) * HP
        out = out.at[:, s:s + H].set(w[:, k * H:(k + 1) * H])
    return out


def textrnn_forward(tokens, lengths, params):
    """tokens: (B, T) int32 padded ids; lengths: (B,) int32 valid lengths
    (the `pad_packed_sequence` representation of the module's packed input)."""
    B, T = tokens.shape
    E = params["embedding"].shape[1]
    H = params["whh_f"].shape[0]
    C = params["fc_b"].shape[-1]

    # TODO(synk): for H < 128 each gate is padded to a full 128-lane slot; packing
    # multiple gates per lane tile would shrink per-step EUP/VPU work further but needs
    # non-tile-aligned slicing on the serial critical path, so it is not done here.
    HP = _round_up(H, LANE)           # lane-aligned per-gate width
    CP = _round_up(C, LANE)           # lane-dense output width
    TT = _pick_time_tile(T)
    NT = T // TT

    Bp = _round_up(B, SUBLANE)
    # Aim for >= 2 batch tiles when possible so the "parallel" axis can shard across
    # v7x's two TensorCores; at Bp <= 8 a single tile is all there is.
    BB = Bp if Bp <= SUBLANE else _round_up((Bp + 1) // 2, SUBLANE)
    Bp = _round_up(Bp, BB)
    NB = Bp // BB

    # ---- one-time parameter repacking (interleaved gate slots, bf16 for the MXU) ----
    wih_f = _scatter_gate_cols(params["wih_f"], H, HP, 0).astype(jnp.bfloat16)   # (E, 8HP)
    wih_b = _scatter_gate_cols(params["wih_b"], H, HP, 1).astype(jnp.bfloat16)   # (E, 8HP)
    b_wide = (_scatter_gate_cols(params["b_f"], H, HP, 0)
              + _scatter_gate_cols(params["b_b"], H, HP, 1)).astype(jnp.float32)  # (1, 8HP)

    whh_bd = jnp.zeros((2 * HP, 8 * HP), jnp.float32)
    whh_bd = whh_bd.at[:H].set(_scatter_gate_cols(params["whh_f"], H, HP, 0))
    whh_bd = whh_bd.at[HP:HP + H].set(_scatter_gate_cols(params["whh_b"], H, HP, 1))
    whh_bd = whh_bd.astype(jnp.bfloat16)                                          # (2HP, 8HP)

    fcw = params["fc_w"]                                                          # (2H, C)
    fcw_cat = jnp.zeros((2 * HP, CP), jnp.float32)
    fcw_cat = fcw_cat.at[:H, :C].set(fcw[:H]).at[HP:HP + H, :C].set(fcw[H:])
    fcw_cat = fcw_cat.astype(jnp.bfloat16)                                        # (2HP, CP)
    fcb = jnp.pad(params["fc_b"], ((0, 0), (0, CP - C))).astype(jnp.float32)      # (1, CP)

    # ---- batch padding ----
    tokens_p = jnp.pad(tokens, ((0, Bp - B), (0, 0)))
    len_p = jnp.pad(lengths.astype(jnp.int32), (0, Bp - B), constant_values=1)
    len2d = len_p.reshape(Bp, 1)

    # ---- embedding gather, built time-major, bf16 (streamed twice by the kernel) ----
    # TODO(synk): the gather itself could be fused into the kernel with a pl.Element /
    # scalar-prefetch row gather to avoid materializing emb in HBM (modest win, v5e).
    emb = jnp.take(params["embedding"], tokens_p.T, axis=0).astype(jnp.bfloat16)  # (T, Bp, E)

    out_p = pl.pallas_call(
        functools.partial(_bilstm_kernel, C),
        out_shape=jax.ShapeDtypeStruct((Bp, CP), jnp.float32),
        grid_spec=pltpu.PrefetchScalarGridSpec(
            num_scalar_prefetch=0,
            grid=(NB, NT),
            in_specs=[
                pl.BlockSpec((BB, 1), lambda b, t: (b, 0)),                   # lengths
                pl.BlockSpec((TT, BB, E), lambda b, t: (t, b, 0)),            # x, fwd order
                pl.BlockSpec((TT, BB, E), lambda b, t: (NT - 1 - t, b, 0)),   # x, bwd order
                pl.BlockSpec((E, 8 * HP), lambda b, t: (0, 0)),               # W_ih fwd (wide)
                pl.BlockSpec((E, 8 * HP), lambda b, t: (0, 0)),               # W_ih bwd (wide)
                pl.BlockSpec((1, 8 * HP), lambda b, t: (0, 0)),               # biases
                pl.BlockSpec((2 * HP, 8 * HP), lambda b, t: (0, 0)),          # blockdiag W_hh
                pl.BlockSpec((2 * HP, CP), lambda b, t: (0, 0)),              # fc weight
                pl.BlockSpec((1, CP), lambda b, t: (0, 0)),                   # fc bias
            ],
            out_specs=pl.BlockSpec((BB, CP), lambda b, t: (b, 0)),
            scratch_shapes=[pltpu.VMEM((BB, 2 * HP), jnp.float32)] * 3          # h, c, sel
                         + [pltpu.VMEM((TT, BB, 8 * HP), jnp.float32)] * 2),    # pf, pb tiles
        compiler_params=pltpu.CompilerParams(
            dimension_semantics=("parallel", "arbitrary"),
            vmem_limit_bytes=32 * 1024 * 1024),
    )(len2d, emb, emb, wih_f, wih_b, b_wide, whh_bd, fcw_cat, fcb)

    return out_p[:B, :C]


# ---------------------------------------------------------------------------
# Pure-JAX f32 reference (dense padded nn.LSTM semantics) for a tolerance check.
# ---------------------------------------------------------------------------
def _reference_forward(tokens, lengths, params):
    B, T = tokens.shape
    H = params["whh_f"].shape[0]
    emb = jnp.take(params["embedding"], tokens, axis=0)            # (B, T, E)
    x_tm = jnp.transpose(emb, (1, 0, 2))                           # (T, B, E)

    def run(x_seq, wih, whh, b):
        def cell(carry, x_t):
            h, c = carry
            g = x_t @ wih + h @ whh + b
            i = jax.nn.sigmoid(g[:, 0 * H:1 * H])
            f = jax.nn.sigmoid(g[:, 1 * H:2 * H])
            gg = jnp.tanh(g[:, 2 * H:3 * H])
            o = jax.nn.sigmoid(g[:, 3 * H:4 * H])
            c = f * c + i * gg
            h = o * jnp.tanh(c)
            return (h, c), h
        h0 = jnp.zeros((B, H), jnp.float32)
        _, hs = lax.scan(cell, (h0, h0), x_seq)
        return hs                                                  # (T, B, H)

    hf = run(x_tm, params["wih_f"], params["whh_f"], params["b_f"])
    hb = run(x_tm[::-1], params["wih_b"], params["whh_b"], params["b_b"])[::-1]
    seq = jnp.concatenate([hf, hb], axis=-1)                       # (T, B, 2H)
    sel = seq[lengths - 1, jnp.arange(B)]                          # (B, 2H)
    logits = sel @ params["fc_w"] + params["fc_b"]
    return jax.nn.log_softmax(logits, axis=1)


if __name__ == "__main__":
    # Small deterministic configuration consistent with the module.
    vocab_size, embedding_dim, hidden_size, output_size = 50, 16, 32, 14
    B, T = 2, 8

    key = jax.random.PRNGKey(0)
    ks = jax.random.split(key, 10)
    s = 0.1
    params = {
        # nn.Embedding(vocab_size, embedding_dim)
        "embedding": jax.random.normal(ks[0], (vocab_size, embedding_dim), jnp.float32) * s,
        # bidirectional LSTM, weights stored transposed (in_dim, 4H) for x @ W, gate order [i,f,g,o]
        "wih_f": jax.random.normal(ks[1], (embedding_dim, 4 * hidden_size), jnp.float32) * s,
        "whh_f": jax.random.normal(ks[2], (hidden_size, 4 * hidden_size), jnp.float32) * s,
        "b_f":   jax.random.normal(ks[3], (1, 4 * hidden_size), jnp.float32) * s,  # b_ih + b_hh
        "wih_b": jax.random.normal(ks[4], (embedding_dim, 4 * hidden_size), jnp.float32) * s,
        "whh_b": jax.random.normal(ks[5], (hidden_size, 4 * hidden_size), jnp.float32) * s,
        "b_b":   jax.random.normal(ks[6], (1, 4 * hidden_size), jnp.float32) * s,
        # nn.Linear(2H, output_size), stored transposed (2H, C)
        "fc_w": jax.random.normal(ks[7], (2 * hidden_size, output_size), jnp.float32) * s,
        "fc_b": jax.random.normal(ks[8], (1, output_size), jnp.float32) * s,
    }

    tokens = jax.random.randint(ks[9], (B, T), 0, vocab_size, dtype=jnp.int32)
    lengths = jnp.array([5, T], dtype=jnp.int32)   # variable-length padded batch

    # TODO(synk): self.dropout is declared in __init__ but never applied in
    # forward(), so no dropout is implemented here (matches reference semantics).

    out = textrnn_forward(tokens, lengths, params)
    out = jax.block_until_ready(out)
    assert out.shape == (B, output_size)

    # log_softmax rows must exponentiate to probability distributions.
    row_sums = jnp.sum(jnp.exp(out), axis=1)
    assert bool(jnp.all(jnp.abs(row_sums - 1.0) < 1e-3)), row_sums

    # Parity against a full-f32 pure-JAX reference (bf16 MXU drift tolerance).
    ref = _reference_forward(tokens, lengths, params)
    assert bool(jnp.max(jnp.abs(out - ref)) < 5e-2), (out, ref)

    print("KERNEL_OK")
</pallas_src>

<mosaic_0001>
module attributes {stable_mosaic.version = 11 : i64} {
  func.func @_bilstm_kernel(%arg0: i32, %arg1: i32, %arg2: memref<8x1xi32, #tpu.memory_space<vmem>>, %arg3: memref<8x8x16xbf16, #tpu.memory_space<vmem>>, %arg4: memref<8x8x16xbf16, #tpu.memory_space<vmem>>, %arg5: memref<16x1024xbf16, #tpu.memory_space<vmem>>, %arg6: memref<16x1024xbf16, #tpu.memory_space<vmem>>, %arg7: memref<1x1024xf32, #tpu.memory_space<vmem>>, %arg8: memref<256x1024xbf16, #tpu.memory_space<vmem>>, %arg9: memref<256x128xbf16, #tpu.memory_space<vmem>>, %arg10: memref<1x128xf32, #tpu.memory_space<vmem>>, %arg11: memref<8x128xf32, #tpu.memory_space<vmem>>, %arg12: memref<8x256xf32, #tpu.memory_space<vmem>>, %arg13: memref<8x256xf32, #tpu.memory_space<vmem>>, %arg14: memref<8x256xf32, #tpu.memory_space<vmem>>, %arg15: memref<8x8x1024xf32, #tpu.memory_space<vmem>>, %arg16: memref<8x8x1024xf32, #tpu.memory_space<vmem>>) attributes {dimension_semantics = [#tpu.dimension_semantics<parallel>, #tpu.dimension_semantics<arbitrary>], iteration_bounds = array<i64: 1, 1>, scalar_prefetch = 0 : i64, scratch_operands = 5 : i64, tpu.core_type = #tpu.core_type<tc>, window_params = [{transform_indices = @transform_0, window_bounds = array<i64: 8, 1>}, {transform_indices = @transform_1, window_bounds = array<i64: 8, 8, 16>}, {transform_indices = @transform_2, window_bounds = array<i64: 8, 8, 16>}, {pipeline_mode = #tpu.pipeline_mode<synchronous>, transform_indices = @transform_3, window_bounds = array<i64: 16, 1024>}, {pipeline_mode = #tpu.pipeline_mode<synchronous>, transform_indices = @transform_4, window_bounds = array<i64: 16, 1024>}, {pipeline_mode = #tpu.pipeline_mode<synchronous>, transform_indices = @transform_5, window_bounds = array<i64: 1, 1024>}, {pipeline_mode = #tpu.pipeline_mode<synchronous>, transform_indices = @transform_6, window_bounds = array<i64: 256, 1024>}, {pipeline_mode = #tpu.pipeline_mode<synchronous>, transform_indices = @transform_7, window_bounds = array<i64: 256, 128>}, {pipeline_mode = #tpu.pipeline_mode<synchronous>, transform_indices = @transform_8, window_bounds = array<i64: 1, 128>}, {transform_indices = @transform_9, window_bounds = array<i64: 8, 128>}]} {
    %c0_i32 = arith.constant 0 : i32
    %0 = arith.cmpi eq, %arg1, %c0_i32 : i32
    %1 = arith.extui %0 : i1 to i32
    %c0_i32_0 = arith.constant 0 : i32
    %2 = arith.cmpi ne, %1, %c0_i32_0 : i32
    scf.if %2 {
      %cst_131 = arith.constant 0.000000e+00 : f32
      %396 = vector.broadcast %cst_131 : f32 to vector<8x256xf32>
      %c0_132 = arith.constant 0 : index
      %c0_133 = arith.constant 0 : index
      %397 = vector.load %arg12[%c0_132, %c0_133] : memref<8x256xf32, #tpu.memory_space<vmem>>, vector<8x256xf32>
      tpu.vector_store %arg12[%c0_132, %c0_133], %396 {strides = array<i32>} : memref<8x256xf32, #tpu.memory_space<vmem>>, vector<8x256xf32>,
      %c0_134 = arith.constant 0 : index
      %c0_135 = arith.constant 0 : index
      %398 = vector.load %arg13[%c0_134, %c0_135] : memref<8x256xf32, #tpu.memory_space<vmem>>, vector<8x256xf32>
      tpu.vector_store %arg13[%c0_134, %c0_135], %396 {strides = array<i32>} : memref<8x256xf32, #tpu.memory_space<vmem>>, vector<8x256xf32>,
      %c0_136 = arith.constant 0 : index
      %c0_137 = arith.constant 0 : index
      %399 = vector.load %arg14[%c0_136, %c0_137] : memref<8x256xf32, #tpu.memory_space<vmem>>, vector<8x256xf32>
      tpu.vector_store %arg14[%c0_136, %c0_137], %396 {strides = array<i32>} : memref<8x256xf32, #tpu.memory_space<vmem>>, vector<8x256xf32>,
    } else {
    }
    %c0 = arith.constant 0 : index
    %c0_1 = arith.constant 0 : index
    %c0_2 = arith.constant 0 : index
    %3 = vector.load %arg3[%c0, %c0_1, %c0_2] : memref<8x8x16xbf16, #tpu.memory_space<vmem>>, vector<8x8x16xbf16>
    %4 = vector.shape_cast %3 : vector<8x8x16xbf16> to vector<64x16xbf16>
    %c0_3 = arith.constant 0 : index
    %c0_4 = arith.constant 0 : index
    %c0_5 = arith.constant 0 : index
    %5 = vector.load %arg4[%c0_3, %c0_4, %c0_5] : memref<8x8x16xbf16, #tpu.memory_space<vmem>>, vector<8x8x16xbf16>
    %6 = vector.shape_cast %5 : vector<8x8x16xbf16> to vector<64x16xbf16>
    %c0_6 = arith.constant 0 : index
    %c0_7 = arith.constant 0 : index
    %7 = vector.load %arg5[%c0_6, %c0_7] : memref<16x1024xbf16, #tpu.memory_space<vmem>>, vector<16x1024xbf16>
    %cst = arith.constant dense<0.000000e+00> : vector<64x1024xf32>
    %8 = tpu.matmul %4, %7, %cst {dimension_numbers = #tpu.dot_dimension_numbers<[1], [0], [0], [1], [0, 0, 1, 1], [], []>} : vector<64x16xbf16>, vector<16x1024xbf16>, vector<64x1024xf32> -> vector<64x1024xf32>
    %c0_8 = arith.constant 0 : index
    %c0_9 = arith.constant 0 : index
    %9 = vector.load %arg7[%c0_8, %c0_9] : memref<1x1024xf32, #tpu.memory_space<vmem>>, vector<1x1024xf32>
    %10 = vector.broadcast %9 : vector<1x1024xf32> to vector<64x1024xf32>
    %11 = arith.addf %8, %10 : vector<64x1024xf32>
    %12 = vector.shape_cast %11 : vector<64x1024xf32> to vector<8x8x1024xf32>
    %c0_10 = arith.constant 0 : index
    %c0_11 = arith.constant 0 : index
    %c0_12 = arith.constant 0 : index
    %13 = vector.load %arg15[%c0_10, %c0_11, %c0_12] : memref<8x8x1024xf32, #tpu.memory_space<vmem>>, vector<8x8x1024xf32>
    tpu.vector_store %arg15[%c0_10, %c0_11, %c0_12], %12 {strides = array<i32>} : memref<8x8x1024xf32, #tpu.memory_space<vmem>>, vector<8x8x1024xf32>,
    %c0_13 = arith.constant 0 : index
    %c0_14 = arith.constant 0 : index
    %14 = vector.load %arg6[%c0_13, %c0_14] : memref<16x1024xbf16, #tpu.memory_space<vmem>>, vector<16x1024xbf16>
    %cst_15 = arith.constant dense<0.000000e+00> : vector<64x1024xf32>
    %15 = tpu.matmul %6, %14, %cst_15 {dimension_numbers = #tpu.dot_dimension_numbers<[1], [0], [0], [1], [0, 0, 1, 1], [], []>} : vector<64x16xbf16>, vector<16x1024xbf16>, vector<64x1024xf32> -> vector<64x1024xf32>
    %16 = vector.shape_cast %15 : vector<64x1024xf32> to vector<8x8x1024xf32>
    %c0_16 = arith.constant 0 : index
    %c0_17 = arith.constant 0 : index
    %c0_18 = arith.constant 0 : index
    %17 = vector.load %arg16[%c0_16, %c0_17, %c0_18] : memref<8x8x1024xf32, #tpu.memory_space<vmem>>, vector<8x8x1024xf32>
    tpu.vector_store %arg16[%c0_16, %c0_17, %c0_18], %16 {strides = array<i32>} : memref<8x8x1024xf32, #tpu.memory_space<vmem>>, vector<8x8x1024xf32>,
    %c0_19 = arith.constant 0 : index
    %c0_20 = arith.constant 0 : index
    %18 = vector.load %arg2[%c0_19, %c0_20] : memref<8x1xi32, #tpu.memory_space<vmem>>, vector<8x1xi32>
    %c1_i32 = arith.constant 1 : i32
    %19 = vector.broadcast %c1_i32 : i32 to vector<8x1xi32>
    %20 = arith.subi %18, %19 : vector<8x1xi32>
    %c8_i32 = arith.constant 8 : i32
    %21 = arith.muli %arg1, %c8_i32 : i32
    %c0_i32_21 = arith.constant 0 : i32
    %22 = arith.subi %c0_i32_21, %arg1 : i32
    %c8_i32_22 = arith.constant 8 : i32
    %23 = arith.muli %22, %c8_i32_22 : i32
    %c8_i32_23 = arith.constant 8 : i32
    %24 = arith.addi %23, %c8_i32_23 : i32
    %c1_i32_24 = arith.constant 1 : i32
    %25 = arith.subi %24, %c1_i32_24 : i32
    %26 = tpu.iota {dimensions = array<i32: 1>} : vector<1x256xi32>
    %c128_i32 = arith.constant 128 : i32
    %27 = vector.broadcast %c128_i32 : i32 to vector<1x256xi32>
    %28 = arith.cmpi slt, %26, %27 : vector<1x256xi32>
    %29 = vector.broadcast %21 : i32 to vector<1x256xi32>
    %30 = vector.broadcast %25 : i32 to vector<1x256xi32>
    %31 = arith.select %28, %29, %30 : vector<1x256xi1>, vector<1x256xi32>
    %c1_i32_25 = arith.constant 1 : i32
    %c-1_i32 = arith.constant -1 : i32
    %32 = vector.broadcast %c1_i32_25 : i32 to vector<1x256xi32>
    %33 = vector.broadcast %c-1_i32 : i32 to vector<1x256xi32>
    %34 = arith.select %28, %32, %33 : vector<1x256xi1>, vector<1x256xi32>
    %c0_26 = arith.constant 0 : index
    %c0_27 = arith.constant 0 : index
    %35 = vector.load %arg12[%c0_26, %c0_27] : memref<8x256xf32, #tpu.memory_space<vmem>>, vector<8x256xf32>
    %c0_28 = arith.constant 0 : index
    %c0_29 = arith.constant 0 : index
    %36 = vector.load %arg13[%c0_28, %c0_29] : memref<8x256xf32, #tpu.memory_space<vmem>>, vector<8x256xf32>
    %c0_30 = arith.constant 0 : index
    %c0_31 = arith.constant 0 : index
    %37 = vector.load %arg14[%c0_30, %c0_31] : memref<8x256xf32, #tpu.memory_space<vmem>>, vector<8x256xf32>
    %c0_i32_32 = arith.constant 0 : i32
    %38 = arith.truncf %35 : vector<8x256xf32> to vector<8x256xbf16>
    %c0_33 = arith.constant 0 : index
    %c0_34 = arith.constant 0 : index
    %39 = vector.load %arg8[%c0_33, %c0_34] : memref<256x1024xbf16, #tpu.memory_space<vmem>>, vector<256x1024xbf16>
    %cst_35 = arith.constant dense<0.000000e+00> : vector<8x1024xf32>
    %40 = tpu.matmul %38, %39, %cst_35 {dimension_numbers = #tpu.dot_dimension_numbers<[1], [0], [0], [1], [0, 0, 1, 1], [], []>} : vector<8x256xbf16>, vector<256x1024xbf16>, vector<8x1024xf32> -> vector<8x1024xf32>
    %41 = arith.index_cast %c0_i32_32 : i32 to index
    %c0_36 = arith.constant 0 : index
    %c0_37 = arith.constant 0 : index
    %42 = vector.load %arg15[%41, %c0_36, %c0_37] : memref<8x8x1024xf32, #tpu.memory_space<vmem>>, vector<1x8x1024xf32>
    %43 = vector.shape_cast %42 : vector<1x8x1024xf32> to vector<8x1024xf32>
    %44 = arith.addf %40, %43 : vector<8x1024xf32>
    %c7_i32 = arith.constant 7 : i32
    %45 = arith.subi %c7_i32, %c0_i32_32 : i32
    %46 = arith.index_cast %45 : i32 to index
    %c0_38 = arith.constant 0 : index
    %c0_39 = arith.constant 0 : index
    %47 = vector.load %arg16[%46, %c0_38, %c0_39] : memref<8x8x1024xf32, #tpu.memory_space<vmem>>, vector<1x8x1024xf32>
    %48 = vector.shape_cast %47 : vector<1x8x1024xf32> to vector<8x1024xf32>
    %49 = arith.addf %44, %48 : vector<8x1024xf32>
    %50 = vector.extract_strided_slice %49 {offsets = [0, 0], sizes = [8, 256], strides = [1, 1]} : vector<8x1024xf32> to vector<8x256xf32>
    %51 = arith.negf %50 : vector<8x256xf32>
    %52 = math.exp %51 : vector<8x256xf32>
    %cst_40 = arith.constant 1.000000e+00 : f32
    %53 = vector.broadcast %cst_40 : f32 to vector<8x256xf32>
    %54 = arith.addf %53, %52 : vector<8x256xf32>
    %55 = arith.divf %53, %54 : vector<8x256xf32>
    %56 = vector.extract_strided_slice %49 {offsets = [0, 256], sizes = [8, 256], strides = [1, 1]} : vector<8x1024xf32> to vector<8x256xf32>
    %57 = arith.negf %56 : vector<8x256xf32>
    %58 = math.exp %57 : vector<8x256xf32>
    %cst_41 = arith.constant 1.000000e+00 : f32
    %59 = vector.broadcast %cst_41 : f32 to vector<8x256xf32>
    %60 = arith.addf %59, %58 : vector<8x256xf32>
    %61 = arith.divf %59, %60 : vector<8x256xf32>
    %62 = vector.extract_strided_slice %49 {offsets = [0, 512], sizes = [8, 256], strides = [1, 1]} : vector<8x1024xf32> to vector<8x256xf32>
    %63 = math.tanh %62 : vector<8x256xf32>
    %64 = vector.extract_strided_slice %49 {offsets = [0, 768], sizes = [8, 256], strides = [1, 1]} : vector<8x1024xf32> to vector<8x256xf32>
    %65 = arith.negf %64 : vector<8x256xf32>
    %66 = math.exp %65 : vector<8x256xf32>
    %cst_42 = arith.constant 1.000000e+00 : f32
    %67 = vector.broadcast %cst_42 : f32 to vector<8x256xf32>
    %68 = arith.addf %67, %66 : vector<8x256xf32>
    %69 = arith.divf %67, %68 : vector<8x256xf32>
    %70 = arith.mulf %61, %36 : vector<8x256xf32>
    %71 = arith.mulf %55, %63 : vector<8x256xf32>
    %72 = arith.addf %70, %71 : vector<8x256xf32>
    %73 = math.tanh %72 : vector<8x256xf32>
    %74 = arith.mulf %69, %73 : vector<8x256xf32>
    %75 = vector.broadcast %c0_i32_32 : i32 to vector<1x256xi32>
    %76 = arith.muli %34, %75 : vector<1x256xi32>
    %77 = arith.addi %31, %76 : vector<1x256xi32>
    %78 = vector.broadcast %20 : vector<8x1xi32> to vector<8x256xi32>
    %79 = vector.broadcast %77 : vector<1x256xi32> to vector<8x256xi32>
    %80 = arith.cmpi eq, %78, %79 : vector<8x256xi32>
    %81 = arith.select %80, %74, %37 : vector<8x256xi1>, vector<8x256xf32>
    %c1_i32_43 = arith.constant 1 : i32
    %82 = arith.truncf %74 : vector<8x256xf32> to vector<8x256xbf16>
    %c0_44 = arith.constant 0 : index
    %c0_45 = arith.constant 0 : index
    %83 = vector.load %arg8[%c0_44, %c0_45] : memref<256x1024xbf16, #tpu.memory_space<vmem>>, vector<256x1024xbf16>
    %cst_46 = arith.constant dense<0.000000e+00> : vector<8x1024xf32>
    %84 = tpu.matmul %82, %83, %cst_46 {dimension_numbers = #tpu.dot_dimension_numbers<[1], [0], [0], [1], [0, 0, 1, 1], [], []>} : vector<8x256xbf16>, vector<256x1024xbf16>, vector<8x1024xf32> -> vector<8x1024xf32>
    %85 = arith.index_cast %c1_i32_43 : i32 to index
    %c0_47 = arith.constant 0 : index
    %c0_48 = arith.constant 0 : index
    %86 = vector.load %arg15[%85, %c0_47, %c0_48] : memref<8x8x1024xf32, #tpu.memory_space<vmem>>, vector<1x8x1024xf32>
    %87 = vector.shape_cast %86 : vector<1x8x1024xf32> to vector<8x1024xf32>
    %88 = arith.addf %84, %87 : vector<8x1024xf32>
    %c7_i32_49 = arith.constant 7 : i32
    %89 = arith.subi %c7_i32_49, %c1_i32_43 : i32
    %90 = arith.index_cast %89 : i32 to index
    %c0_50 = arith.constant 0 : index
    %c0_51 = arith.constant 0 : index
    %91 = vector.load %arg16[%90, %c0_50, %c0_51] : memref<8x8x1024xf32, #tpu.memory_space<vmem>>, vector<1x8x1024xf32>
    %92 = vector.shape_cast %91 : vector<1x8x1024xf32> to vector<8x1024xf32>
    %93 = arith.addf %88, %92 : vector<8x1024xf32>
    %94 = vector.extract_strided_slice %93 {offsets = [0, 0], sizes = [8, 256], strides = [1, 1]} : vector<8x1024xf32> to vector<8x256xf32>
    %95 = arith.negf %94 : vector<8x256xf32>
    %96 = math.exp %95 : vector<8x256xf32>
    %cst_52 = arith.constant 1.000000e+00 : f32
    %97 = vector.broadcast %cst_52 : f32 to vector<8x256xf32>
    %98 = arith.addf %97, %96 : vector<8x256xf32>
    %99 = arith.divf %97, %98 : vector<8x256xf32>
    %100 = vector.extract_strided_slice %93 {offsets = [0, 256], sizes = [8, 256], strides = [1, 1]} : vector<8x1024xf32> to vector<8x256xf32>
    %101 = arith.negf %100 : vector<8x256xf32>
    %102 = math.exp %101 : vector<8x256xf32>
    %cst_53 = arith.constant 1.000000e+00 : f32
    %103 = vector.broadcast %cst_53 : f32 to vector<8x256xf32>
    %104 = arith.addf %103, %102 : vector<8x256xf32>
    %105 = arith.divf %103, %104 : vector<8x256xf32>
    %106 = vector.extract_strided_slice %93 {offsets = [0, 512], sizes = [8, 256], strides = [1, 1]} : vector<8x1024xf32> to vector<8x256xf32>
    %107 = math.tanh %106 : vector<8x256xf32>
    %108 = vector.extract_strided_slice %93 {offsets = [0, 768], sizes = [8, 256], strides = [1, 1]} : vector<8x1024xf32> to vector<8x256xf32>
    %109 = arith.negf %108 : vector<8x256xf32>
    %110 = math.exp %109 : vector<8x256xf32>
    %cst_54 = arith.constant 1.000000e+00 : f32
    %111 = vector.broadcast %cst_54 : f32 to vector<8x256xf32>
    %112 = arith.addf %111, %110 : vector<8x256xf32>
    %113 = arith.divf %111, %112 : vector<8x256xf32>
    %114 = arith.mulf %105, %72 : vector<8x256xf32>
    %115 = arith.mulf %99, %107 : vector<8x256xf32>
    %116 = arith.addf %114, %115 : vector<8x256xf32>
    %117 = math.tanh %116 : vector<8x256xf32>
    %118 = arith.mulf %113, %117 : vector<8x256xf32>
    %119 = vector.broadcast %c1_i32_43 : i32 to vector<1x256xi32>
    %120 = arith.muli %34, %119 : vector<1x256xi32>
    %121 = arith.addi %31, %120 : vector<1x256xi32>
    %122 = vector.broadcast %20 : vector<8x1xi32> to vector<8x256xi32>
    %123 = vector.broadcast %121 : vector<1x256xi32> to vector<8x256xi32>
    %124 = arith.cmpi eq, %122, %123 : vector<8x256xi32>
    %125 = arith.select %124, %118, %81 : vector<8x256xi1>, vector<8x256xf32>
    %c2_i32 = arith.constant 2 : i32
    %126 = arith.truncf %118 : vector<8x256xf32> to vector<8x256xbf16>
    %c0_55 = arith.constant 0 : index
    %c0_56 = arith.constant 0 : index
    %127 = vector.load %arg8[%c0_55, %c0_56] : memref<256x1024xbf16, #tpu.memory_space<vmem>>, vector<256x1024xbf16>
    %cst_57 = arith.constant dense<0.000000e+00> : vector<8x1024xf32>
    %128 = tpu.matmul %126, %127, %cst_57 {dimension_numbers = #tpu.dot_dimension_numbers<[1], [0], [0], [1], [0, 0, 1, 1], [], []>} : vector<8x256xbf16>, vector<256x1024xbf16>, vector<8x1024xf32> -> vector<8x1024xf32>
    %129 = arith.index_cast %c2_i32 : i32 to index
    %c0_58 = arith.constant 0 : index
    %c0_59 = arith.constant 0 : index
    %130 = vector.load %arg15[%129, %c0_58, %c0_59] : memref<8x8x1024xf32, #tpu.memory_space<vmem>>, vector<1x8x1024xf32>
    %131 = vector.shape_cast %130 : vector<1x8x1024xf32> to vector<8x1024xf32>
    %132 = arith.addf %128, %131 : vector<8x1024xf32>
    %c7_i32_60 = arith.constant 7 : i32
    %133 = arith.subi %c7_i32_60, %c2_i32 : i32
    %134 = arith.index_cast %133 : i32 to index
    %c0_61 = arith.constant 0 : index
    %c0_62 = arith.constant 0 : index
    %135 = vector.load %arg16[%134, %c0_61, %c0_62] : memref<8x8x1024xf32, #tpu.memory_space<vmem>>, vector<1x8x1024xf32>
    %136 = vector.shape_cast %135 : vector<1x8x1024xf32> to vector<8x1024xf32>
    %137 = arith.addf %132, %136 : vector<8x1024xf32>
    %138 = vector.extract_strided_slice %137 {offsets = [0, 0], sizes = [8, 256], strides = [1, 1]} : vector<8x1024xf32> to vector<8x256xf32>
    %139 = arith.negf %138 : vector<8x256xf32>
    %140 = math.exp %139 : vector<8x256xf32>
    %cst_63 = arith.constant 1.000000e+00 : f32
    %141 = vector.broadcast %cst_63 : f32 to vector<8x256xf32>
    %142 = arith.addf %141, %140 : vector<8x256xf32>
    %143 = arith.divf %141, %142 : vector<8x256xf32>
    %144 = vector.extract_strided_slice %137 {offsets = [0, 256], sizes = [8, 256], strides = [1, 1]} : vector<8x1024xf32> to vector<8x256xf32>
    %145 = arith.negf %144 : vector<8x256xf32>
    %146 = math.exp %145 : vector<8x256xf32>
    %cst_64 = arith.constant 1.000000e+00 : f32
    %147 = vector.broadcast %cst_64 : f32 to vector<8x256xf32>
    %148 = arith.addf %147, %146 : vector<8x256xf32>
    %149 = arith.divf %147, %148 : vector<8x256xf32>
    %150 = vector.extract_strided_slice %137 {offsets = [0, 512], sizes = [8, 256], strides = [1, 1]} : vector<8x1024xf32> to vector<8x256xf32>
    %151 = math.tanh %150 : vector<8x256xf32>
    %152 = vector.extract_strided_slice %137 {offsets = [0, 768], sizes = [8, 256], strides = [1, 1]} : vector<8x1024xf32> to vector<8x256xf32>
    %153 = arith.negf %152 : vector<8x256xf32>
    %154 = math.exp %153 : vector<8x256xf32>
    %cst_65 = arith.constant 1.000000e+00 : f32
    %155 = vector.broadcast %cst_65 : f32 to vector<8x256xf32>
    %156 = arith.addf %155, %154 : vector<8x256xf32>
    %157 = arith.divf %155, %156 : vector<8x256xf32>
    %158 = arith.mulf %149, %116 : vector<8x256xf32>
    %159 = arith.mulf %143, %151 : vector<8x256xf32>
    %160 = arith.addf %158, %159 : vector<8x256xf32>
    %161 = math.tanh %160 : vector<8x256xf32>
    %162 = arith.mulf %157, %161 : vector<8x256xf32>
    %163 = vector.broadcast %c2_i32 : i32 to vector<1x256xi32>
    %164 = arith.muli %34, %163 : vector<1x256xi32>
    %165 = arith.addi %31, %164 : vector<1x256xi32>
    %166 = vector.broadcast %20 : vector<8x1xi32> to vector<8x256xi32>
    %167 = vector.broadcast %165 : vector<1x256xi32> to vector<8x256xi32>
    %168 = arith.cmpi eq, %166, %167 : vector<8x256xi32>
    %169 = arith.select %168, %162, %125 : vector<8x256xi1>, vector<8x256xf32>
    %c3_i32 = arith.constant 3 : i32
    %170 = arith.truncf %162 : vector<8x256xf32> to vector<8x256xbf16>
    %c0_66 = arith.constant 0 : index
    %c0_67 = arith.constant 0 : index
    %171 = vector.load %arg8[%c0_66, %c0_67] : memref<256x1024xbf16, #tpu.memory_space<vmem>>, vector<256x1024xbf16>
    %cst_68 = arith.constant dense<0.000000e+00> : vector<8x1024xf32>
    %172 = tpu.matmul %170, %171, %cst_68 {dimension_numbers = #tpu.dot_dimension_numbers<[1], [0], [0], [1], [0, 0, 1, 1], [], []>} : vector<8x256xbf16>, vector<256x1024xbf16>, vector<8x1024xf32> -> vector<8x1024xf32>
    %173 = arith.index_cast %c3_i32 : i32 to index
    %c0_69 = arith.constant 0 : index
    %c0_70 = arith.constant 0 : index
    %174 = vector.load %arg15[%173, %c0_69, %c0_70] : memref<8x8x1024xf32, #tpu.memory_space<vmem>>, vector<1x8x1024xf32>
    %175 = vector.shape_cast %174 : vector<1x8x1024xf32> to vector<8x1024xf32>
    %176 = arith.addf %172, %175 : vector<8x1024xf32>
    %c7_i32_71 = arith.constant 7 : i32
    %177 = arith.subi %c7_i32_71, %c3_i32 : i32
    %178 = arith.index_cast %177 : i32 to index
    %c0_72 = arith.constant 0 : index
    %c0_73 = arith.constant 0 : index
    %179 = vector.load %arg16[%178, %c0_72, %c0_73] : memref<8x8x1024xf32, #tpu.memory_space<vmem>>, vector<1x8x1024xf32>
    %180 = vector.shape_cast %179 : vector<1x8x1024xf32> to vector<8x1024xf32>
    %181 = arith.addf %176, %180 : vector<8x1024xf32>
    %182 = vector.extract_strided_slice %181 {offsets = [0, 0], sizes = [8, 256], strides = [1, 1]} : vector<8x1024xf32> to vector<8x256xf32>
    %183 = arith.negf %182 : vector<8x256xf32>
    %184 = math.exp %183 : vector<8x256xf32>
    %cst_74 = arith.constant 1.000000e+00 : f32
    %185 = vector.broadcast %cst_74 : f32 to vector<8x256xf32>
    %186 = arith.addf %185, %184 : vector<8x256xf32>
    %187 = arith.divf %185, %186 : vector<8x256xf32>
    %188 = vector.extract_strided_slice %181 {offsets = [0, 256], sizes = [8, 256], strides = [1, 1]} : vector<8x1024xf32> to vector<8x256xf32>
    %189 = arith.negf %188 : vector<8x256xf32>
    %190 = math.exp %189 : vector<8x256xf32>
    %cst_75 = arith.constant 1.000000e+00 : f32
    %191 = vector.broadcast %cst_75 : f32 to vector<8x256xf32>
    %192 = arith.addf %191, %190 : vector<8x256xf32>
    %193 = arith.divf %191, %192 : vector<8x256xf32>
    %194 = vector.extract_strided_slice %181 {offsets = [0, 512], sizes = [8, 256], strides = [1, 1]} : vector<8x1024xf32> to vector<8x256xf32>
    %195 = math.tanh %194 : vector<8x256xf32>
    %196 = vector.extract_strided_slice %181 {offsets = [0, 768], sizes = [8, 256], strides = [1, 1]} : vector<8x1024xf32> to vector<8x256xf32>
    %197 = arith.negf %196 : vector<8x256xf32>
    %198 = math.exp %197 : vector<8x256xf32>
    %cst_76 = arith.constant 1.000000e+00 : f32
    %199 = vector.broadcast %cst_76 : f32 to vector<8x256xf32>
    %200 = arith.addf %199, %198 : vector<8x256xf32>
    %201 = arith.divf %199, %200 : vector<8x256xf32>
    %202 = arith.mulf %193, %160 : vector<8x256xf32>
    %203 = arith.mulf %187, %195 : vector<8x256xf32>
    %204 = arith.addf %202, %203 : vector<8x256xf32>
    %205 = math.tanh %204 : vector<8x256xf32>
    %206 = arith.mulf %201, %205 : vector<8x256xf32>
    %207 = vector.broadcast %c3_i32 : i32 to vector<1x256xi32>
    %208 = arith.muli %34, %207 : vector<1x256xi32>
    %209 = arith.addi %31, %208 : vector<1x256xi32>
    %210 = vector.broadcast %20 : vector<8x1xi32> to vector<8x256xi32>
    %211 = vector.broadcast %209 : vector<1x256xi32> to vector<8x256xi32>
    %212 = arith.cmpi eq, %210, %211 : vector<8x256xi32>
    %213 = arith.select %212, %206, %169 : vector<8x256xi1>, vector<8x256xf32>
    %c4_i32 = arith.constant 4 : i32
    %214 = arith.truncf %206 : vector<8x256xf32> to vector<8x256xbf16>
    %c0_77 = arith.constant 0 : index
    %c0_78 = arith.constant 0 : index
    %215 = vector.load %arg8[%c0_77, %c0_78] : memref<256x1024xbf16, #tpu.memory_space<vmem>>, vector<256x1024xbf16>
    %cst_79 = arith.constant dense<0.000000e+00> : vector<8x1024xf32>
    %216 = tpu.matmul %214, %215, %cst_79 {dimension_numbers = #tpu.dot_dimension_numbers<[1], [0], [0], [1], [0, 0, 1, 1], [], []>} : vector<8x256xbf16>, vector<256x1024xbf16>, vector<8x1024xf32> -> vector<8x1024xf32>
    %217 = arith.index_cast %c4_i32 : i32 to index
    %c0_80 = arith.constant 0 : index
    %c0_81 = arith.constant 0 : index
    %218 = vector.load %arg15[%217, %c0_80, %c0_81] : memref<8x8x1024xf32, #tpu.memory_space<vmem>>, vector<1x8x1024xf32>
    %219 = vector.shape_cast %218 : vector<1x8x1024xf32> to vector<8x1024xf32>
    %220 = arith.addf %216, %219 : vector<8x1024xf32>
    %c7_i32_82 = arith.constant 7 : i32
    %221 = arith.subi %c7_i32_82, %c4_i32 : i32
    %222 = arith.index_cast %221 : i32 to index
    %c0_83 = arith.constant 0 : index
    %c0_84 = arith.constant 0 : index
    %223 = vector.load %arg16[%222, %c0_83, %c0_84] : memref<8x8x1024xf32, #tpu.memory_space<vmem>>, vector<1x8x1024xf32>
    %224 = vector.shape_cast %223 : vector<1x8x1024xf32> to vector<8x1024xf32>
    %225 = arith.addf %220, %224 : vector<8x1024xf32>
    %226 = vector.extract_strided_slice %225 {offsets = [0, 0], sizes = [8, 256], strides = [1, 1]} : vector<8x1024xf32> to vector<8x256xf32>
    %227 = arith.negf %226 : vector<8x256xf32>
    %228 = math.exp %227 : vector<8x256xf32>
    %cst_85 = arith.constant 1.000000e+00 : f32
    %229 = vector.broadcast %cst_85 : f32 to vector<8x256xf32>
    %230 = arith.addf %229, %228 : vector<8x256xf32>
    %231 = arith.divf %229, %230 : vector<8x256xf32>
    %232 = vector.extract_strided_slice %225 {offsets = [0, 256], sizes = [8, 256], strides = [1, 1]} : vector<8x1024xf32> to vector<8x256xf32>
    %233 = arith.negf %232 : vector<8x256xf32>
    %234 = math.exp %233 : vector<8x256xf32>
    %cst_86 = arith.constant 1.000000e+00 : f32
    %235 = vector.broadcast %cst_86 : f32 to vector<8x256xf32>
    %236 = arith.addf %235, %234 : vector<8x256xf32>
    %237 = arith.divf %235, %236 : vector<8x256xf32>
    %238 = vector.extract_strided_slice %225 {offsets = [0, 512], sizes = [8, 256], strides = [1, 1]} : vector<8x1024xf32> to vector<8x256xf32>
    %239 = math.tanh %238 : vector<8x256xf32>
    %240 = vector.extract_strided_slice %225 {offsets = [0, 768], sizes = [8, 256], strides = [1, 1]} : vector<8x1024xf32> to vector<8x256xf32>
    %241 = arith.negf %240 : vector<8x256xf32>
    %242 = math.exp %241 : vector<8x256xf32>
    %cst_87 = arith.constant 1.000000e+00 : f32
    %243 = vector.broadcast %cst_87 : f32 to vector<8x256xf32>
    %244 = arith.addf %243, %242 : vector<8x256xf32>
    %245 = arith.divf %243, %244 : vector<8x256xf32>
    %246 = arith.mulf %237, %204 : vector<8x256xf32>
    %247 = arith.mulf %231, %239 : vector<8x256xf32>
    %248 = arith.addf %246, %247 : vector<8x256xf32>
    %249 = math.tanh %248 : vector<8x256xf32>
    %250 = arith.mulf %245, %249 : vector<8x256xf32>
    %251 = vector.broadcast %c4_i32 : i32 to vector<1x256xi32>
    %252 = arith.muli %34, %251 : vector<1x256xi32>
    %253 = arith.addi %31, %252 : vector<1x256xi32>
    %254 = vector.broadcast %20 : vector<8x1xi32> to vector<8x256xi32>
    %255 = vector.broadcast %253 : vector<1x256xi32> to vector<8x256xi32>
    %256 = arith.cmpi eq, %254, %255 : vector<8x256xi32>
    %257 = arith.select %256, %250, %213 : vector<8x256xi1>, vector<8x256xf32>
    %c5_i32 = arith.constant 5 : i32
    %258 = arith.truncf %250 : vector<8x256xf32> to vector<8x256xbf16>
    %c0_88 = arith.constant 0 : index
    %c0_89 = arith.constant 0 : index
    %259 = vector.load %arg8[%c0_88, %c0_89] : memref<256x1024xbf16, #tpu.memory_space<vmem>>, vector<256x1024xbf16>
    %cst_90 = arith.constant dense<0.000000e+00> : vector<8x1024xf32>
    %260 = tpu.matmul %258, %259, %cst_90 {dimension_numbers = #tpu.dot_dimension_numbers<[1], [0], [0], [1], [0, 0, 1, 1], [], []>} : vector<8x256xbf16>, vector<256x1024xbf16>, vector<8x1024xf32> -> vector<8x1024xf32>
    %261 = arith.index_cast %c5_i32 : i32 to index
    %c0_91 = arith.constant 0 : index
    %c0_92 = arith.constant 0 : index
    %262 = vector.load %arg15[%261, %c0_91, %c0_92] : memref<8x8x1024xf32, #tpu.memory_space<vmem>>, vector<1x8x1024xf32>
    %263 = vector.shape_cast %262 : vector<1x8x1024xf32> to vector<8x1024xf32>
    %264 = arith.addf %260, %263 : vector<8x1024xf32>
    %c7_i32_93 = arith.constant 7 : i32
    %265 = arith.subi %c7_i32_93, %c5_i32 : i32
    %266 = arith.index_cast %265 : i32 to index
    %c0_94 = arith.constant 0 : index
    %c0_95 = arith.constant 0 : index
    %267 = vector.load %arg16[%266, %c0_94, %c0_95] : memref<8x8x1024xf32, #tpu.memory_space<vmem>>, vector<1x8x1024xf32>
    %268 = vector.shape_cast %267 : vector<1x8x1024xf32> to vector<8x1024xf32>
    %269 = arith.addf %264, %268 : vector<8x1024xf32>
    %270 = vector.extract_strided_slice %269 {offsets = [0, 0], sizes = [8, 256], strides = [1, 1]} : vector<8x1024xf32> to vector<8x256xf32>
    %271 = arith.negf %270 : vector<8x256xf32>
    %272 = math.exp %271 : vector<8x256xf32>
    %cst_96 = arith.constant 1.000000e+00 : f32
    %273 = vector.broadcast %cst_96 : f32 to vector<8x256xf32>
    %274 = arith.addf %273, %272 : vector<8x256xf32>
    %275 = arith.divf %273, %274 : vector<8x256xf32>
    %276 = vector.extract_strided_slice %269 {offsets = [0, 256], sizes = [8, 256], strides = [1, 1]} : vector<8x1024xf32> to vector<8x256xf32>
    %277 = arith.negf %276 : vector<8x256xf32>
    %278 = math.exp %277 : vector<8x256xf32>
    %cst_97 = arith.constant 1.000000e+00 : f32
    %279 = vector.broadcast %cst_97 : f32 to vector<8x256xf32>
    %280 = arith.addf %279, %278 : vector<8x256xf32>
    %281 = arith.divf %279, %280 : vector<8x256xf32>
    %282 = vector.extract_strided_slice %269 {offsets = [0, 512], sizes = [8, 256], strides = [1, 1]} : vector<8x1024xf32> to vector<8x256xf32>
    %283 = math.tanh %282 : vector<8x256xf32>
    %284 = vector.extract_strided_slice %269 {offsets = [0, 768], sizes = [8, 256], strides = [1, 1]} : vector<8x1024xf32> to vector<8x256xf32>
    %285 = arith.negf %284 : vector<8x256xf32>
    %286 = math.exp %285 : vector<8x256xf32>
    %cst_98 = arith.constant 1.000000e+00 : f32
    %287 = vector.broadcast %cst_98 : f32 to vector<8x256xf32>
    %288 = arith.addf %287, %286 : vector<8x256xf32>
    %289 = arith.divf %287, %288 : vector<8x256xf32>
    %290 = arith.mulf %281, %248 : vector<8x256xf32>
    %291 = arith.mulf %275, %283 : vector<8x256xf32>
    %292 = arith.addf %290, %291 : vector<8x256xf32>
    %293 = math.tanh %292 : vector<8x256xf32>
    %294 = arith.mulf %289, %293 : vector<8x256xf32>
    %295 = vector.broadcast %c5_i32 : i32 to vector<1x256xi32>
    %296 = arith.muli %34, %295 : vector<1x256xi32>
    %297 = arith.addi %31, %296 : vector<1x256xi32>
    %298 = vector.broadcast %20 : vector<8x1xi32> to vector<8x256xi32>
    %299 = vector.broadcast %297 : vector<1x256xi32> to vector<8x256xi32>
    %300 = arith.cmpi eq, %298, %299 : vector<8x256xi32>
    %301 = arith.select %300, %294, %257 : vector<8x256xi1>, vector<8x256xf32>
    %c6_i32 = arith.constant 6 : i32
    %302 = arith.truncf %294 : vector<8x256xf32> to vector<8x256xbf16>
    %c0_99 = arith.constant 0 : index
    %c0_100 = arith.constant 0 : index
    %303 = vector.load %arg8[%c0_99, %c0_100] : memref<256x1024xbf16, #tpu.memory_space<vmem>>, vector<256x1024xbf16>
    %cst_101 = arith.constant dense<0.000000e+00> : vector<8x1024xf32>
    %304 = tpu.matmul %302, %303, %cst_101 {dimension_numbers = #tpu.dot_dimension_numbers<[1], [0], [0], [1], [0, 0, 1, 1], [], []>} : vector<8x256xbf16>, vector<256x1024xbf16>, vector<8x1024xf32> -> vector<8x1024xf32>
    %305 = arith.index_cast %c6_i32 : i32 to index
    %c0_102 = arith.constant 0 : index
    %c0_103 = arith.constant 0 : index
    %306 = vector.load %arg15[%305, %c0_102, %c0_103] : memref<8x8x1024xf32, #tpu.memory_space<vmem>>, vector<1x8x1024xf32>
    %307 = vector.shape_cast %306 : vector<1x8x1024xf32> to vector<8x1024xf32>
    %308 = arith.addf %304, %307 : vector<8x1024xf32>
    %c7_i32_104 = arith.constant 7 : i32
    %309 = arith.subi %c7_i32_104, %c6_i32 : i32
    %310 = arith.index_cast %309 : i32 to index
    %c0_105 = arith.constant 0 : index
    %c0_106 = arith.constant 0 : index
    %311 = vector.load %arg16[%310, %c0_105, %c0_106] : memref<8x8x1024xf32, #tpu.memory_space<vmem>>, vector<1x8x1024xf32>
    %312 = vector.shape_cast %311 : vector<1x8x1024xf32> to vector<8x1024xf32>
    %313 = arith.addf %308, %312 : vector<8x1024xf32>
    %314 = vector.extract_strided_slice %313 {offsets = [0, 0], sizes = [8, 256], strides = [1, 1]} : vector<8x1024xf32> to vector<8x256xf32>
    %315 = arith.negf %314 : vector<8x256xf32>
    %316 = math.exp %315 : vector<8x256xf32>
    %cst_107 = arith.constant 1.000000e+00 : f32
    %317 = vector.broadcast %cst_107 : f32 to vector<8x256xf32>
    %318 = arith.addf %317, %316 : vector<8x256xf32>
    %319 = arith.divf %317, %318 : vector<8x256xf32>
    %320 = vector.extract_strided_slice %313 {offsets = [0, 256], sizes = [8, 256], strides = [1, 1]} : vector<8x1024xf32> to vector<8x256xf32>
    %321 = arith.negf %320 : vector<8x256xf32>
    %322 = math.exp %321 : vector<8x256xf32>
    %cst_108 = arith.constant 1.000000e+00 : f32
    %323 = vector.broadcast %cst_108 : f32 to vector<8x256xf32>
    %324 = arith.addf %323, %322 : vector<8x256xf32>
    %325 = arith.divf %323, %324 : vector<8x256xf32>
    %326 = vector.extract_strided_slice %313 {offsets = [0, 512], sizes = [8, 256], strides = [1, 1]} : vector<8x1024xf32> to vector<8x256xf32>
    %327 = math.tanh %326 : vector<8x256xf32>
    %328 = vector.extract_strided_slice %313 {offsets = [0, 768], sizes = [8, 256], strides = [1, 1]} : vector<8x1024xf32> to vector<8x256xf32>
    %329 = arith.negf %328 : vector<8x256xf32>
    %330 = math.exp %329 : vector<8x256xf32>
    %cst_109 = arith.constant 1.000000e+00 : f32
    %331 = vector.broadcast %cst_109 : f32 to vector<8x256xf32>
    %332 = arith.addf %331, %330 : vector<8x256xf32>
    %333 = arith.divf %331, %332 : vector<8x256xf32>
    %334 = arith.mulf %325, %292 : vector<8x256xf32>
    %335 = arith.mulf %319, %327 : vector<8x256xf32>
    %336 = arith.addf %334, %335 : vector<8x256xf32>
    %337 = math.tanh %336 : vector<8x256xf32>
    %338 = arith.mulf %333, %337 : vector<8x256xf32>
    %339 = vector.broadcast %c6_i32 : i32 to vector<1x256xi32>
    %340 = arith.muli %34, %339 : vector<1x256xi32>
    %341 = arith.addi %31, %340 : vector<1x256xi32>
    %342 = vector.broadcast %20 : vector<8x1xi32> to vector<8x256xi32>
    %343 = vector.broadcast %341 : vector<1x256xi32> to vector<8x256xi32>
    %344 = arith.cmpi eq, %342, %343 : vector<8x256xi32>
    %345 = arith.select %344, %338, %301 : vector<8x256xi1>, vector<8x256xf32>
    %c7_i32_110 = arith.constant 7 : i32
    %346 = arith.truncf %338 : vector<8x256xf32> to vector<8x256xbf16>
    %c0_111 = arith.constant 0 : index
    %c0_112 = arith.constant 0 : index
    %347 = vector.load %arg8[%c0_111, %c0_112] : memref<256x1024xbf16, #tpu.memory_space<vmem>>, vector<256x1024xbf16>
    %cst_113 = arith.constant dense<0.000000e+00> : vector<8x1024xf32>
    %348 = tpu.matmul %346, %347, %cst_113 {dimension_numbers = #tpu.dot_dimension_numbers<[1], [0], [0], [1], [0, 0, 1, 1], [], []>} : vector<8x256xbf16>, vector<256x1024xbf16>, vector<8x1024xf32> -> vector<8x1024xf32>
    %349 = arith.index_cast %c7_i32_110 : i32 to index
    %c0_114 = arith.constant 0 : index
    %c0_115 = arith.constant 0 : index
    %350 = vector.load %arg15[%349, %c0_114, %c0_115] : memref<8x8x1024xf32, #tpu.memory_space<vmem>>, vector<1x8x1024xf32>
    %351 = vector.shape_cast %350 : vector<1x8x1024xf32> to vector<8x1024xf32>
    %352 = arith.addf %348, %351 : vector<8x1024xf32>
    %c7_i32_116 = arith.constant 7 : i32
    %353 = arith.subi %c7_i32_116, %c7_i32_110 : i32
    %354 = arith.index_cast %353 : i32 to index
    %c0_117 = arith.constant 0 : index
    %c0_118 = arith.constant 0 : index
    %355 = vector.load %arg16[%354, %c0_117, %c0_118] : memref<8x8x1024xf32, #tpu.memory_space<vmem>>, vector<1x8x1024xf32>
    %356 = vector.shape_cast %355 : vector<1x8x1024xf32> to vector<8x1024xf32>
    %357 = arith.addf %352, %356 : vector<8x1024xf32>
    %358 = vector.extract_strided_slice %357 {offsets = [0, 0], sizes = [8, 256], strides = [1, 1]} : vector<8x1024xf32> to vector<8x256xf32>
    %359 = arith.negf %358 : vector<8x256xf32>
    %360 = math.exp %359 : vector<8x256xf32>
    %cst_119 = arith.constant 1.000000e+00 : f32
    %361 = vector.broadcast %cst_119 : f32 to vector<8x256xf32>
    %362 = arith.addf %361, %360 : vector<8x256xf32>
    %363 = arith.divf %361, %362 : vector<8x256xf32>
    %364 = vector.extract_strided_slice %357 {offsets = [0, 256], sizes = [8, 256], strides = [1, 1]} : vector<8x1024xf32> to vector<8x256xf32>
    %365 = arith.negf %364 : vector<8x256xf32>
    %366 = math.exp %365 : vector<8x256xf32>
    %cst_120 = arith.constant 1.000000e+00 : f32
    %367 = vector.broadcast %cst_120 : f32 to vector<8x256xf32>
    %368 = arith.addf %367, %366 : vector<8x256xf32>
    %369 = arith.divf %367, %368 : vector<8x256xf32>
    %370 = vector.extract_strided_slice %357 {offsets = [0, 512], sizes = [8, 256], strides = [1, 1]} : vector<8x1024xf32> to vector<8x256xf32>
    %371 = math.tanh %370 : vector<8x256xf32>
    %372 = vector.extract_strided_slice %357 {offsets = [0, 768], sizes = [8, 256], strides = [1, 1]} : vector<8x1024xf32> to vector<8x256xf32>
    %373 = arith.negf %372 : vector<8x256xf32>
    %374 = math.exp %373 : vector<8x256xf32>
    %cst_121 = arith.constant 1.000000e+00 : f32
    %375 = vector.broadcast %cst_121 : f32 to vector<8x256xf32>
    %376 = arith.addf %375, %374 : vector<8x256xf32>
    %377 = arith.divf %375, %376 : vector<8x256xf32>
    %378 = arith.mulf %369, %336 : vector<8x256xf32>
    %379 = arith.mulf %363, %371 : vector<8x256xf32>
    %380 = arith.addf %378, %379 : vector<8x256xf32>
    %381 = math.tanh %380 : vector<8x256xf32>
    %382 = arith.mulf %377, %381 : vector<8x256xf32>
    %383 = vector.broadcast %c7_i32_110 : i32 to vector<1x256xi32>
    %384 = arith.muli %34, %383 : vector<1x256xi32>
    %385 = arith.addi %31, %384 : vector<1x256xi32>
    %386 = vector.broadcast %20 : vector<8x1xi32> to vector<8x256xi32>
    %387 = vector.broadcast %385 : vector<1x256xi32> to vector<8x256xi32>
    %388 = arith.cmpi eq, %386, %387 : vector<8x256xi32>
    %389 = arith.select %388, %382, %345 : vector<8x256xi1>, vector<8x256xf32>
    %c8_i32_122 = arith.constant 8 : i32
    %c0_123 = arith.constant 0 : index
    %c0_124 = arith.constant 0 : index
    %390 = vector.load %arg12[%c0_123, %c0_124] : memref<8x256xf32, #tpu.memory_space<vmem>>, vector<8x256xf32>
    tpu.vector_store %arg12[%c0_123, %c0_124], %382 {strides = array<i32>} : memref<8x256xf32, #tpu.memory_space<vmem>>, vector<8x256xf32>,
    %c0_125 = arith.constant 0 : index
    %c0_126 = arith.constant 0 : index
    %391 = vector.load %arg13[%c0_125, %c0_126] : memref<8x256xf32, #tpu.memory_space<vmem>>, vector<8x256xf32>
    tpu.vector_store %arg13[%c0_125, %c0_126], %380 {strides = array<i32>} : memref<8x256xf32, #tpu.memory_space<vmem>>, vector<8x256xf32>,
    %c0_127 = arith.constant 0 : index
    %c0_128 = arith.constant 0 : index
    %392 = vector.load %arg14[%c0_127, %c0_128] : memref<8x256xf32, #tpu.memory_space<vmem>>, vector<8x256xf32>
    tpu.vector_store %arg14[%c0_127, %c0_128], %389 {strides = array<i32>} : memref<8x256xf32, #tpu.memory_space<vmem>>, vector<8x256xf32>,
    %c0_i32_129 = arith.constant 0 : i32
    %393 = arith.cmpi eq, %arg1, %c0_i32_129 : i32
    %394 = arith.extui %393 : i1 to i32
    %c0_i32_130 = arith.constant 0 : i32
    %395 = arith.cmpi ne, %394, %c0_i32_130 : i32
    scf.if %395 {
      %396 = arith.truncf %389 : vector<8x256xf32> to vector<8x256xbf16>
      %c0_131 = arith.constant 0 : index
      %c0_132 = arith.constant 0 : index
      %397 = vector.load %arg9[%c0_131, %c0_132] : memref<256x128xbf16, #tpu.memory_space<vmem>>, vector<256x128xbf16>
      %cst_133 = arith.constant dense<0.000000e+00> : vector<8x128xf32>
      %398 = tpu.matmul %396, %397, %cst_133 {dimension_numbers = #tpu.dot_dimension_numbers<[1], [0], [0], [1], [0, 0, 1, 1], [], []>} : vector<8x256xbf16>, vector<256x128xbf16>, vector<8x128xf32> -> vector<8x128xf32>
      %c0_134 = arith.constant 0 : index
      %c0_135 = arith.constant 0 : index
      %399 = vector.load %arg10[%c0_134, %c0_135] : memref<1x128xf32, #tpu.memory_space<vmem>>, vector<1x128xf32>
      %400 = vector.broadcast %399 : vector<1x128xf32> to vector<8x128xf32>
      %401 = arith.addf %398, %400 : vector<8x128xf32>
      %402 = tpu.iota {dimensions = array<i32: 1>} : vector<8x128xi32>
      %c14_i32 = arith.constant 14 : i32
      %403 = vector.broadcast %c14_i32 : i32 to vector<8x128xi32>
      %404 = arith.cmpi slt, %402, %403 : vector<8x128xi32>
      %cst_136 = arith.constant -1.000000e+30 : f32
      %405 = vector.broadcast %cst_136 : f32 to vector<8x128xf32>
      %406 = arith.select %404, %401, %405 : vector<8x128xi1>, vector<8x128xf32>
      %cst_137 = arith.constant dense<0xFF800000> : vector<8xf32>
      %407 = vector.multi_reduction <maximumf>, %406, %cst_137 [1] : vector<8x128xf32> to vector<8xf32>
      %408 = vector.shape_cast %407 : vector<8xf32> to vector<8x1xf32>
      %409 = vector.broadcast %408 : vector<8x1xf32> to vector<8x128xf32>
      %410 = arith.subf %406, %409 : vector<8x128xf32>
      %411 = math.exp %410 : vector<8x128xf32>
      %cst_138 = arith.constant dense<0.000000e+00> : vector<8xf32>
      %412 = vector.multi_reduction <add>, %411, %cst_138 [1] : vector<8x128xf32> to vector<8xf32>
      %413 = vector.shape_cast %412 : vector<8xf32> to vector<8x1xf32>
      %414 = math.log %413 : vector<8x1xf32>
      %415 = vector.broadcast %414 : vector<8x1xf32> to vector<8x128xf32>
      %416 = arith.subf %410, %415 : vector<8x128xf32>
      %cst_139 = arith.constant 0.000000e+00 : f32
      %417 = vector.broadcast %cst_139 : f32 to vector<8x128xf32>
      %418 = arith.select %404, %416, %417 : vector<8x128xi1>, vector<8x128xf32>
      %c0_140 = arith.constant 0 : index
      %c0_141 = arith.constant 0 : index
      %419 = vector.load %arg11[%c0_140, %c0_141] : memref<8x128xf32, #tpu.memory_space<vmem>>, vector<8x128xf32>
      tpu.vector_store %arg11[%c0_140, %c0_141], %418 {strides = array<i32>} : memref<8x128xf32, #tpu.memory_space<vmem>>, vector<8x128xf32>,
    } else {
    }
    return
  }
  func.func @transform_0(%arg0: i32, %arg1: i32) -> (i32, i32) {
    %c0_i32 = arith.constant 0 : i32
    %c0_i32_0 = arith.constant 0 : i32
    return %arg0, %c0_i32 : i32, i32
  }
  func.func @transform_1(%arg0: i32, %arg1: i32) -> (i32, i32, i32) {
    %c0_i32 = arith.constant 0 : i32
    %c0_i32_0 = arith.constant 0 : i32
    return %arg1, %arg0, %c0_i32 : i32, i32, i32
  }
  func.func @transform_2(%arg0: i32, %arg1: i32) -> (i32, i32, i32) {
    %c0_i32 = arith.constant 0 : i32
    %0 = arith.subi %c0_i32, %arg1 : i32
    %c0_i32_0 = arith.constant 0 : i32
    %c0_i32_1 = arith.constant 0 : i32
    return %0, %arg0, %c0_i32_0 : i32, i32, i32
  }
  func.func @transform_3(%arg0: i32, %arg1: i32) -> (i32, i32) {
    %c0_i32 = arith.constant 0 : i32
    %c0_i32_0 = arith.constant 0 : i32
    %c0_i32_1 = arith.constant 0 : i32
    return %c0_i32, %c0_i32_0 : i32, i32
  }
  func.func @transform_4(%arg0: i32, %arg1: i32) -> (i32, i32) {
    %c0_i32 = arith.constant 0 : i32
    %c0_i32_0 = arith.constant 0 : i32
    %c0_i32_1 = arith.constant 0 : i32
    return %c0_i32, %c0_i32_0 : i32, i32
  }
  func.func @transform_5(%arg0: i32, %arg1: i32) -> (i32, i32) {
    %c0_i32 = arith.constant 0 : i32
    %c0_i32_0 = arith.constant 0 : i32
    %c0_i32_1 = arith.constant 0 : i32
    return %c0_i32, %c0_i32_0 : i32, i32
  }
  func.func @transform_6(%arg0: i32, %arg1: i32) -> (i32, i32) {
    %c0_i32 = arith.constant 0 : i32
    %c0_i32_0 = arith.constant 0 : i32
    %c0_i32_1 = arith.constant 0 : i32
    return %c0_i32, %c0_i32_0 : i32, i32
  }
  func.func @transform_7(%arg0: i32, %arg1: i32) -> (i32, i32) {
    %c0_i32 = arith.constant 0 : i32
    %c0_i32_0 = arith.constant 0 : i32
    %c0_i32_1 = arith.constant 0 : i32
    return %c0_i32, %c0_i32_0 : i32, i32
  }
  func.func @transform_8(%arg0: i32, %arg1: i32) -> (i32, i32) {
    %c0_i32 = arith.constant 0 : i32
    %c0_i32_0 = arith.constant 0 : i32
    %c0_i32_1 = arith.constant 0 : i32
    return %c0_i32, %c0_i32_0 : i32, i32
  }
  func.func @transform_9(%arg0: i32, %arg1: i32) -> (i32, i32) {
    %c0_i32 = arith.constant 0 : i32
    %c0_i32_0 = arith.constant 0 : i32
    return %arg0, %c0_i32 : i32, i32
  }
}

</mosaic_0001>

<llo_original>
// kernel: tpu_custom_call.1
$region0: #{tpu_custom_call.1}
  #allocation0 [shape = 'u32[]', space=smem, size = 0x4, offset = 0x4, fixed_abs, tag = 'smem constant byte address 0x4 - core index']
  #allocation1 [shape = 'u32[72,128]{1,0:T(1,128)}', space=vmem, size = 0x9000, scoped, tag = 'internal scratch']
  #allocation2 [shape = 'f32[8,256]{1,0:T(8,128)}', space=vmem, size = 0x2000, scoped, tag = 'scratch operand']
  #allocation3 [shape = 'f32[8,256]{1,0:T(8,128)}', space=vmem, size = 0x2000, scoped, tag = 'scratch operand']
  #allocation4 [shape = 'f32[8,256]{1,0:T(8,128)}', space=vmem, size = 0x2000, scoped, tag = 'scratch operand']
  #allocation5 [shape = 'f32[8,8,1024]{2,1,0:T(8,128)}', space=vmem, size = 0x40000, scoped, tag = 'scratch operand']
  #allocation6 [shape = 'f32[8,8,1024]{2,1,0:T(8,128)}', space=vmem, size = 0x40000, scoped, tag = 'scratch operand']
  %s0 = inlined_call_operand.vmem [shape: s32[8,1], index: 0, kind: input, shape index: {}]
  %s1 = inlined_call_operand.hbm [shape: bf16[8,8,16], index: 1, kind: input, shape index: {}]
  %s2 = inlined_call_operand.hbm [shape: bf16[8,8,16], index: 2, kind: input, shape index: {}]
  %s3 = inlined_call_operand.hbm [shape: bf16[16,1024], index: 3, kind: input, shape index: {}]
  %s4 = inlined_call_operand.hbm [shape: bf16[16,1024], index: 4, kind: input, shape index: {}]
  %s5 = inlined_call_operand.vmem [shape: f32[1,1024], index: 5, kind: input, shape index: {}]
  %s6 = inlined_call_operand.hbm [shape: bf16[256,1024], index: 6, kind: input, shape index: {}]
  %s7 = inlined_call_operand.hbm [shape: bf16[256,128], index: 7, kind: input, shape index: {}]
  %s8 = inlined_call_operand.vmem [shape: f32[1,128], index: 8, kind: input, shape index: {}]
  %s9 = inlined_call_operand.hbm [shape: f32[8,128], index: 9, kind: output, shape index: {}]
  %s10 = sld [smem:[#allocation0]]
  $region78: #{tpu_custom_call.1} parent=0
    _
  %s12 = ssub.s32 1, %s10
  %s13 = scalar_select 0, %s12, %s10
  $region1: #{tpu_custom_call.1} parent=0
    #allocation7 [shape = 'u8[16384]{0}', space=vmem, size = 0x4000, scoped, tag = 'input window, operand 1, single buffered']
    #allocation8 [shape = 's32[1]{0}', space=sflag, size = 0x4, scoped, tag = 'scoped memory for tpu_custom_call.1']
    #allocation9 [shape = 's32[1]{0}', space=sflag, size = 0x4, scoped, tag = 'scoped memory for tpu_custom_call.1']
    #allocation10 [shape = 'u8[16384]{0}', space=vmem, size = 0x4000, scoped, tag = 'input window, operand 2, single buffered']
    #allocation11 [shape = 's32[1]{0}', space=sflag, size = 0x4, scoped, tag = 'scoped memory for tpu_custom_call.1']
    #allocation12 [shape = 'u8[32768]{0}', space=vmem, size = 0x8000, scoped, tag = 'input window, operand 3, single buffered']
    #allocation13 [shape = 'u8[32768]{0}', space=vmem, size = 0x8000, scoped, tag = 'input window, operand 4, single buffered']
    #allocation14 [shape = 's32[1]{0}', space=sflag, size = 0x4, scoped, tag = 'scoped memory for tpu_custom_call.1']
    #allocation15 [shape = 'u8[524288]{0}', space=vmem, size = 0x80000, scoped, tag = 'input window, operand 6, single buffered']
    #allocation16 [shape = 'u8[65536]{0}', space=vmem, size = 0x10000, scoped, tag = 'input window, operand 7, single buffered']
    #allocation17 [shape = 's32[1]{0}', space=sflag, size = 0x4, scoped, tag = 'scoped memory for tpu_custom_call.1']
    #allocation18 [shape = 'u8[4096]{0}', space=vmem, size = 0x1000, scoped, tag = 'output window, operand 0, single buffered']
    %14 = vsyncpa [#allocation8], 0
    %15 = vsyncpa [#allocation11], 0
    %16 = vsyncpa [#allocation14], 0
    %17 = vsyncpa [#allocation17], 0
    %18 = vsyncpa [#allocation9], 0
    // Predicated region
    $region2: #{tpu_custom_call.1} parent=1 // pred_check
      _
    $region3: #{tpu_custom_call.1} parent=1 // pred_check_branch
      %20 = sbr.rel (0) target = $region5
    $region4: #{tpu_custom_call.1} parent=1 // pred_region
      _
    $region5: #{tpu_custom_call.1} parent=1 // pred_fallthru
      _
    // Predicated region
    $region6: #{tpu_custom_call.1} parent=1 // pred_check
      _
    $region7: #{tpu_custom_call.1} parent=1 // pred_check_branch
      %22 = sbr.rel (0) target = $region9
    $region8: #{tpu_custom_call.1} parent=1 // pred_region
      %24 = vsyncadd [#allocation8], 0
      %s25 = sshll.u32 %s1, 4
      %s26 = int_to_ptr.hbm [resolvable:$true] %s25
      %s27 = sshll.u32 [#allocation7], 4
      %s28 = int_to_ptr.vmem [resolvable:$true] %s27
      %33 = dma.hbm_to_vmem [thread:$0]  %s26, 512, %s28, [#allocation8], 64, 64, 4
    $region9: #{tpu_custom_call.1} parent=1 // pred_fallthru
      _
    // Predicated region
    $region10: #{tpu_custom_call.1} parent=1 // pred_check
      _
    $region11: #{tpu_custom_call.1} parent=1 // pred_check_branch
      %35 = sbr.rel (0) target = $region13
    $region12: #{tpu_custom_call.1} parent=1 // pred_region
      %s36 = ssub.s32 0, 0
      %s37 = smul.u32 8, %s36
      %39 = vsyncadd [#allocation11], 0
      %s40 = smul.addr %s37, 4
      %s41 = scalar_lea.hbm %s2, %s40
      %s42 = sshll.u32 %s41, 4
      %s43 = int_to_ptr.hbm [resolvable:$true] %s42
      %s44 = sshll.u32 [#allocation10], 4
      %s45 = int_to_ptr.vmem [resolvable:$true] %s44
      %50 = dma.hbm_to_vmem [thread:$0]  %s43, 512, %s45, [#allocation11], 64, 64, 4
    $region13: #{tpu_custom_call.1} parent=1 // pred_fallthru
      _
    // Predicated region
    $region14: #{tpu_custom_call.1} parent=1 // pred_check
      _
    $region15: #{tpu_custom_call.1} parent=1 // pred_check_branch
      %52 = sbr.rel (0) target = $region17
    $region16: #{tpu_custom_call.1} parent=1 // pred_region
      %54 = vsyncadd [#allocation11], 0
      %s55 = sshll.u32 %s3, 4
      %s56 = int_to_ptr.hbm [resolvable:$true] %s55
      %s57 = sshll.u32 [#allocation12], 4
      %s58 = int_to_ptr.vmem [resolvable:$true] %s57
      %63 = dma.hbm_to_vmem [thread:$0]  %s56, 1024, %s58, [#allocation11], 512, 512, 32
    $region17: #{tpu_custom_call.1} parent=1 // pred_fallthru
      _
    // Predicated region
    $region18: #{tpu_custom_call.1} parent=1 // pred_check
      _
    $region19: #{tpu_custom_call.1} parent=1 // pred_check_branch
      %65 = sbr.rel (0) target = $region21
    $region20: #{tpu_custom_call.1} parent=1 // pred_region
      %67 = vsyncadd [#allocation14], 0
      %s68 = sshll.u32 %s4, 4
      %s69 = int_to_ptr.hbm [resolvable:$true] %s68
      %s70 = sshll.u32 [#allocation13], 4
      %s71 = int_to_ptr.vmem [resolvable:$true] %s70
      %76 = dma.hbm_to_vmem [thread:$0]  %s69, 1024, %s71, [#allocation14], 512, 512, 32
    $region21: #{tpu_custom_call.1} parent=1 // pred_fallthru
      _
    // Predicated region
    $region22: #{tpu_custom_call.1} parent=1 // pred_check
      _
    $region23: #{tpu_custom_call.1} parent=1 // pred_check_branch
      %78 = sbr.rel (0) target = $region25
    $region24: #{tpu_custom_call.1} parent=1 // pred_region
      _
    $region25: #{tpu_custom_call.1} parent=1 // pred_fallthru
      _
    // Predicated region
    $region26: #{tpu_custom_call.1} parent=1 // pred_check
      _
    $region27: #{tpu_custom_call.1} parent=1 // pred_check_branch
      %80 = sbr.rel (0) target = $region29
    $region28: #{tpu_custom_call.1} parent=1 // pred_region
      %82 = vsyncadd [#allocation14], 0
      %s83 = sshll.u32 %s6, 4
      %s84 = int_to_ptr.hbm [resolvable:$true] %s83
      %s85 = sshll.u32 [#allocation15], 4
      %s86 = int_to_ptr.vmem [resolvable:$true] %s85
      %91 = dma.hbm_to_vmem [thread:$0]  %s84, 16384, %s86, [#allocation14], 512, 512, 32
    $region29: #{tpu_custom_call.1} parent=1 // pred_fallthru
      _
    // Predicated region
    $region30: #{tpu_custom_call.1} parent=1 // pred_check
      _
    $region31: #{tpu_custom_call.1} parent=1 // pred_check_branch
      %93 = sbr.rel (0) target = $region33
    $region32: #{tpu_custom_call.1} parent=1 // pred_region
      %95 = vsyncadd [#allocation17], 0
      %s96 = sshll.u32 %s7, 4
      %s97 = int_to_ptr.hbm [resolvable:$true] %s96
      %s98 = sshll.u32 [#allocation16], 4
      %s99 = int_to_ptr.vmem [resolvable:$true] %s98
      %104 = dma.hbm_to_vmem [thread:$0]  %s97, 2048, %s99, [#allocation17], 64, 64, 4
    $region33: #{tpu_custom_call.1} parent=1 // pred_fallthru
      _
    // Predicated region
    $region34: #{tpu_custom_call.1} parent=1 // pred_check
      _
    $region35: #{tpu_custom_call.1} parent=1 // pred_check_branch
      %106 = sbr.rel (0) target = $region37
    $region36: #{tpu_custom_call.1} parent=1 // pred_region
      _
    $region37: #{tpu_custom_call.1} parent=1 // pred_fallthru
      _
    // Predicated region
    $region38: #{tpu_custom_call.1} parent=1 // pred_check
      _
    $region39: #{tpu_custom_call.1} parent=1 // pred_check_branch
      %108 = sbr.rel (0) target = $region41
    $region40: #{tpu_custom_call.1} parent=1 // pred_region
      %110 = dma.done [#allocation8], 512
    $region41: #{tpu_custom_call.1} parent=1 // pred_fallthru
      _
    // Predicated region
    $region42: #{tpu_custom_call.1} parent=1 // pred_check
      _
    $region43: #{tpu_custom_call.1} parent=1 // pred_check_branch
      %112 = sbr.rel (0) target = $region45
    $region44: #{tpu_custom_call.1} parent=1 // pred_region
      %114 = dma.done [#allocation11], 512
    $region45: #{tpu_custom_call.1} parent=1 // pred_fallthru
      _
    // Predicated region
    $region46: #{tpu_custom_call.1} parent=1 // pred_check
      _
    $region47: #{tpu_custom_call.1} parent=1 // pred_check_branch
      %116 = sbr.rel (0) target = $region49
    $region48: #{tpu_custom_call.1} parent=1 // pred_region
      %118 = dma.done [#allocation11], 1024
    $region49: #{tpu_custom_call.1} parent=1 // pred_fallthru
      _
    // Predicated region
    $region50: #{tpu_custom_call.1} parent=1 // pred_check
      _
    $region51: #{tpu_custom_call.1} parent=1 // pred_check_branch
      %120 = sbr.rel (0) target = $region53
    $region52: #{tpu_custom_call.1} parent=1 // pred_region
      %122 = dma.done [#allocation14], 1024
    $region53: #{tpu_custom_call.1} parent=1 // pred_fallthru
      _
    // Predicated region
    $region54: #{tpu_custom_call.1} parent=1 // pred_check
      _
    $region55: #{tpu_custom_call.1} parent=1 // pred_check_branch
      %124 = sbr.rel (0) target = $region57
    $region56: #{tpu_custom_call.1} parent=1 // pred_region
      %126 = dma.done [#allocation14], 16384
    $region57: #{tpu_custom_call.1} parent=1 // pred_fallthru
      _
    // Predicated region
    $region58: #{tpu_custom_call.1} parent=1 // pred_check
      _
    $region59: #{tpu_custom_call.1} parent=1 // pred_check_branch
      %128 = sbr.rel (0) target = $region61
    $region60: #{tpu_custom_call.1} parent=1 // pred_region
      %130 = dma.done [#allocation17], 2048
    $region61: #{tpu_custom_call.1} parent=1 // pred_fallthru
      _
    %s131 = ssub.s32 0, 0
    %s132 = smul.u32 8, %s131
    %p134 = scmp.eq.s32.totalorder 0, 0
    // Predicated region
    $region62: #{tpu_custom_call.1} parent=1 // pred_check
      %p135 = pneg %p134
    $region63: #{tpu_custom_call.1} parent=1 // pred_check_branch
      %137 = sbr.rel (%p135) target = $region65
    $region64: #{tpu_custom_call.1} parent=1 // pred_region
      %138 = vst [vmem:[#allocation2] sm:$0xff] 0.0
      %139 = vst [vmem:[#allocation2 + $0x8] sm:$0xff] 0.0
      %140 = vst [vmem:[#allocation3] sm:$0xff] 0.0
      %141 = vst [vmem:[#allocation3 + $0x8] sm:$0xff] 0.0
      %142 = vst [vmem:[#allocation4] sm:$0xff] 0.0
      %143 = vst [vmem:[#allocation4 + $0x8] sm:$0xff] 0.0
    $region65: #{tpu_custom_call.1} parent=1 // pred_fallthru
      _
    %v144 = vld [vmem:[#allocation7] sm:$0xf]
    %v145 = vld [vmem:[#allocation7 + $0x4] sm:$0xf]
    %v146 = vld [vmem:[#allocation7 + $0x8] sm:$0xf]
    %v147 = vld [vmem:[#allocation7 + $0xc] sm:$0xf]
    %v148 = vld [vmem:[#allocation7 + $0x10] sm:$0xf]
    %v149 = vld [vmem:[#allocation7 + $0x14] sm:$0xf]
    %v150 = vld [vmem:[#allocation7 + $0x18] sm:$0xf]
    %v151 = vld [vmem:[#allocation7 + $0x1c] sm:$0xf]
    %v152 = vld [vmem:[#allocation10] sm:$0xf]
    %v153 = vld [vmem:[#allocation10 + $0x4] sm:$0xf]
    %v154 = vld [vmem:[#allocation10 + $0x8] sm:$0xf]
    %v155 = vld [vmem:[#allocation10 + $0xc] sm:$0xf]
    %v156 = vld [vmem:[#allocation10 + $0x10] sm:$0xf]
    %v157 = vld [vmem:[#allocation10 + $0x14] sm:$0xf]
    %v158 = vld [vmem:[#allocation10 + $0x18] sm:$0xf]
    %v159 = vld [vmem:[#allocation10 + $0x1c] sm:$0xf]
    %v160 = vld [vmem:[#allocation12] sm:$0xff]
    %v161 = vld [vmem:[#allocation12 + $0x8] sm:$0xff]
    %v162 = vld [vmem:[#allocation12 + $0x10] sm:$0xff]
    %v163 = vld [vmem:[#allocation12 + $0x18] sm:$0xff]
    %v164 = vld [vmem:[#allocation12 + $0x20] sm:$0xff]
    %v165 = vld [vmem:[#allocation12 + $0x28] sm:$0xff]
    %v166 = vld [vmem:[#allocation12 + $0x30] sm:$0xff]
    %v167 = vld [vmem:[#allocation12 + $0x38] sm:$0xff]
    %v168 = vld [vmem:[%s5] sm:$0xff]
    %v170 = vperm.slane %v168, 0
    %v171 = vperm.slane %v168, 1
    %v172 = vperm.slane %v168, 2
    %v173 = vperm.slane %v168, 3
    %v174 = vperm.slane %v168, 4
    %v175 = vperm.slane %v168, 5
    %v176 = vperm.slane %v168, 6
    %v177 = vperm.slane %v168, 7
    %v194 = vunpack.c.l.b16 %v144
    %v195 = vunpack.c.l.b16 %v145
    %v196 = vunpack.c.l.b16 %v146
    %v197 = vunpack.c.l.b16 %v147
    %v198 = vunpack.c.l.b16 %v148
    %v199 = vunpack.c.l.b16 %v149
    %v200 = vunpack.c.l.b16 %v150
    %v201 = vunpack.c.l.b16 %v151
    %v202 = vpack.c.b16 %v195, %v194
    %v203 = vpack.c.b16 %v197, %v196
    %v204 = vpack.c.b16 %v199, %v198
    %v205 = vpack.c.b16 %v201, %v200
    %v214 = vunpack.c.l.b16 %v160
    %v215 = vunpack.c.h.b16 %v160
    %v216 = vunpack.c.l.b16 %v161
    %v217 = vunpack.c.h.b16 %v161
    %v218 = vunpack.c.l.b16 %v162
    %v219 = vunpack.c.h.b16 %v162
    %v220 = vunpack.c.l.b16 %v163
    %v221 = vunpack.c.h.b16 %v163
    %v222 = vunpack.c.l.b16 %v164
    %v223 = vunpack.c.h.b16 %v164
    %v224 = vunpack.c.l.b16 %v165
    %v225 = vunpack.c.h.b16 %v165
    %v226 = vunpack.c.l.b16 %v166
    %v227 = vunpack.c.h.b16 %v166
    %v228 = vunpack.c.l.b16 %v167
    %v229 = vunpack.c.h.b16 %v167
    %v230 = vpack.c.b16 %v222, %v214
    %v231 = vpack.c.b16 %v223, %v215
    %v232 = vpack.c.b16 %v224, %v216
    %v233 = vpack.c.b16 %v225, %v217
    %v234 = vpack.c.b16 %v226, %v218
    %v235 = vpack.c.b16 %v227, %v219
    %v236 = vpack.c.b16 %v228, %v220
    %v237 = vpack.c.b16 %v229, %v221
    %vm246 = vcmask 130048
    %v248 = vsel %vm246, %v202, 0
    %v251 = vsel %vm246, %v203, 0
    %v254 = vsel %vm246, %v204, 0
    %v257 = vsel %vm246, %v205, 0
    %259 = vmatpush.bf16.msra.mxu0 0
    %260 = vmatpush.bf16.msra.mxu0 0
    %261 = vmatpush.bf16.msra.mxu0 0
    %262 = vmatpush.bf16.msra.mxu0 0
    %263 = vmatpush.bf16.msra.mxu0 0
    %264 = vmatpush.bf16.msra.mxu0 0
    %265 = vmatpush.bf16.msra.mxu0 0
    %266 = vmatpush.bf16.msra.mxu0 %v230
    %267 = vmatmul.bf16.gmra.mxu0 %v248
    %v268 = vpop.f32.mrf.mxu0
    %v269 = vadd.f32 %v170, %v268
    %v270 = vpop.f32.mrf.mxu0
    %v271 = vadd.f32 %v170, %v270
    %272 = vmatmul.bf16.gmra.mxu0 %v251
    %v273 = vpop.f32.mrf.mxu0
    %v274 = vadd.f32 %v170, %v273
    %v275 = vpop.f32.mrf.mxu0
    %v276 = vadd.f32 %v170, %v275
    %277 = vmatmul.bf16.gmra.mxu0 %v254
    %v278 = vpop.f32.mrf.mxu0
    %v279 = vadd.f32 %v170, %v278
    %v280 = vpop.f32.mrf.mxu0
    %v281 = vadd.f32 %v170, %v280
    %282 = vmatmul.bf16.gmra.mxu0 %v257
    %v283 = vpop.f32.mrf.mxu0
    %v284 = vadd.f32 %v170, %v283
    %v285 = vpop.f32.mrf.mxu0
    %v286 = vadd.f32 %v170, %v285
    %287 = vdwg.mxu0
    %288 = vmatpush.bf16.msra.mxu0 0
    %289 = vmatpush.bf16.msra.mxu0 0
    %290 = vmatpush.bf16.msra.mxu0 0
    %291 = vmatpush.bf16.msra.mxu0 0
    %292 = vmatpush.bf16.msra.mxu0 0
    %293 = vmatpush.bf16.msra.mxu0 0
    %294 = vmatpush.bf16.msra.mxu0 0
    %295 = vmatpush.bf16.msra.mxu0 %v231
    %296 = vmatmul.bf16.gmra.mxu0 %v248
    %v297 = vpop.f32.mrf.mxu0
    %v298 = vadd.f32 %v171, %v297
    %v299 = vpop.f32.mrf.mxu0
    %v300 = vadd.f32 %v171, %v299
    %301 = vmatmul.bf16.gmra.mxu0 %v251
    %v302 = vpop.f32.mrf.mxu0
    %v303 = vadd.f32 %v171, %v302
    %v304 = vpop.f32.mrf.mxu0
    %v305 = vadd.f32 %v171, %v304
    %306 = vmatmul.bf16.gmra.mxu0 %v254
    %v307 = vpop.f32.mrf.mxu0
    %v308 = vadd.f32 %v171, %v307
    %v309 = vpop.f32.mrf.mxu0
    %v310 = vadd.f32 %v171, %v309
    %311 = vmatmul.bf16.gmra.mxu0 %v257
    %v312 = vpop.f32.mrf.mxu0
    %v313 = vadd.f32 %v171, %v312
    %v314 = vpop.f32.mrf.mxu0
    %v315 = vadd.f32 %v171, %v314
    %316 = vdwg.mxu0
    %317 = vmatpush.bf16.msra.mxu0 0
    %318 = vmatpush.bf16.msra.mxu0 0
    %319 = vmatpush.bf16.msra.mxu0 0
    %320 = vmatpush.bf16.msra.mxu0 0
    %321 = vmatpush.bf16.msra.mxu0 0
    %322 = vmatpush.bf16.msra.mxu0 0
    %323 = vmatpush.bf16.msra.mxu0 0
    %324 = vmatpush.bf16.msra.mxu0 %v232
    %325 = vmatmul.bf16.gmra.mxu0 %v248
    %v326 = vpop.f32.mrf.mxu0
    %v327 = vadd.f32 %v172, %v326
    %v328 = vpop.f32.mrf.mxu0
    %v329 = vadd.f32 %v172, %v328
    %330 = vmatmul.bf16.gmra.mxu0 %v251
    %v331 = vpop.f32.mrf.mxu0
    %v332 = vadd.f32 %v172, %v331
    %v333 = vpop.f32.mrf.mxu0
    %v334 = vadd.f32 %v172, %v333
    %335 = vmatmul.bf16.gmra.mxu0 %v254
    %v336 = vpop.f32.mrf.mxu0
    %v337 = vadd.f32 %v172, %v336
    %v338 = vpop.f32.mrf.mxu0
    %v339 = vadd.f32 %v172, %v338
    %340 = vmatmul.bf16.gmra.mxu0 %v257
    %v341 = vpop.f32.mrf.mxu0
    %v342 = vadd.f32 %v172, %v341
    %v343 = vpop.f32.mrf.mxu0
    %v344 = vadd.f32 %v172, %v343
    %345 = vdwg.mxu0
    %346 = vmatpush.bf16.msra.mxu0 0
    %347 = vmatpush.bf16.msra.mxu0 0
    %348 = vmatpush.bf16.msra.mxu0 0
    %349 = vmatpush.bf16.msra.mxu0 0
    %350 = vmatpush.bf16.msra.mxu0 0
    %351 = vmatpush.bf16.msra.mxu0 0
    %352 = vmatpush.bf16.msra.mxu0 0
    %353 = vmatpush.bf16.msra.mxu0 %v233
    %354 = vmatmul.bf16.gmra.mxu0 %v248
    %v355 = vpop.f32.mrf.mxu0
    %v356 = vadd.f32 %v173, %v355
    %v357 = vpop.f32.mrf.mxu0
    %v358 = vadd.f32 %v173, %v357
    %359 = vmatmul.bf16.gmra.mxu0 %v251
    %v360 = vpop.f32.mrf.mxu0
    %v361 = vadd.f32 %v173, %v360
    %v362 = vpop.f32.mrf.mxu0
    %v363 = vadd.f32 %v173, %v362
    %364 = vmatmul.bf16.gmra.mxu0 %v254
    %v365 = vpop.f32.mrf.mxu0
    %v366 = vadd.f32 %v173, %v365
    %v367 = vpop.f32.mrf.mxu0
    %v368 = vadd.f32 %v173, %v367
    %369 = vmatmul.bf16.gmra.mxu0 %v257
    %v370 = vpop.f32.mrf.mxu0
    %v371 = vadd.f32 %v173, %v370
    %v372 = vpop.f32.mrf.mxu0
    %v373 = vadd.f32 %v173, %v372
    %374 = vdwg.mxu0
    %375 = vmatpush.bf16.msra.mxu0 0
    %376 = vmatpush.bf16.msra.mxu0 0
    %377 = vmatpush.bf16.msra.mxu0 0
    %378 = vmatpush.bf16.msra.mxu0 0
    %379 = vmatpush.bf16.msra.mxu0 0
    %380 = vmatpush.bf16.msra.mxu0 0
    %381 = vmatpush.bf16.msra.mxu0 0
    %382 = vmatpush.bf16.msra.mxu0 %v234
    %383 = vmatmul.bf16.gmra.mxu0 %v248
    %v384 = vpop.f32.mrf.mxu0
    %v385 = vadd.f32 %v174, %v384
    %v386 = vpop.f32.mrf.mxu0
    %v387 = vadd.f32 %v174, %v386
    %388 = vmatmul.bf16.gmra.mxu0 %v251
    %v389 = vpop.f32.mrf.mxu0
    %v390 = vadd.f32 %v174, %v389
    %v391 = vpop.f32.mrf.mxu0
    %v392 = vadd.f32 %v174, %v391
    %393 = vmatmul.bf16.gmra.mxu0 %v254
    %v394 = vpop.f32.mrf.mxu0
    %v395 = vadd.f32 %v174, %v394
    %v396 = vpop.f32.mrf.mxu0
    %v397 = vadd.f32 %v174, %v396
    %398 = vmatmul.bf16.gmra.mxu0 %v257
    %v399 = vpop.f32.mrf.mxu0
    %v400 = vadd.f32 %v174, %v399
    %v401 = vpop.f32.mrf.mxu0
    %v402 = vadd.f32 %v174, %v401
    %403 = vdwg.mxu0
    %404 = vmatpush.bf16.msra.mxu0 0
    %405 = vmatpush.bf16.msra.mxu0 0
    %406 = vmatpush.bf16.msra.mxu0 0
    %407 = vmatpush.bf16.msra.mxu0 0
    %408 = vmatpush.bf16.msra.mxu0 0
    %409 = vmatpush.bf16.msra.mxu0 0
    %410 = vmatpush.bf16.msra.mxu0 0
    %411 = vmatpush.bf16.msra.mxu0 %v235
    %412 = vmatmul.bf16.gmra.mxu0 %v248
    %v413 = vpop.f32.mrf.mxu0
    %v414 = vadd.f32 %v175, %v413
    %v415 = vpop.f32.mrf.mxu0
    %v416 = vadd.f32 %v175, %v415
    %417 = vmatmul.bf16.gmra.mxu0 %v251
    %v418 = vpop.f32.mrf.mxu0
    %v419 = vadd.f32 %v175, %v418
    %v420 = vpop.f32.mrf.mxu0
    %v421 = vadd.f32 %v175, %v420
    %422 = vmatmul.bf16.gmra.mxu0 %v254
    %v423 = vpop.f32.mrf.mxu0
    %v424 = vadd.f32 %v175, %v423
    %v425 = vpop.f32.mrf.mxu0
    %v426 = vadd.f32 %v175, %v425
    %427 = vmatmul.bf16.gmra.mxu0 %v257
    %v428 = vpop.f32.mrf.mxu0
    %v429 = vadd.f32 %v175, %v428
    %v430 = vpop.f32.mrf.mxu0
    %v431 = vadd.f32 %v175, %v430
    %432 = vdwg.mxu0
    %433 = vmatpush.bf16.msra.mxu0 0
    %434 = vmatpush.bf16.msra.mxu0 0
    %435 = vmatpush.bf16.msra.mxu0 0
    %436 = vmatpush.bf16.msra.mxu0 0
    %437 = vmatpush.bf16.msra.mxu0 0
    %438 = vmatpush.bf16.msra.mxu0 0
    %439 = vmatpush.bf16.msra.mxu0 0
    %440 = vmatpush.bf16.msra.mxu0 %v236
    %441 = vmatmul.bf16.gmra.mxu0 %v248
    %v442 = vpop.f32.mrf.mxu0
    %v443 = vadd.f32 %v176, %v442
    %v444 = vpop.f32.mrf.mxu0
    %v445 = vadd.f32 %v176, %v444
    %446 = vmatmul.bf16.gmra.mxu0 %v251
    %v447 = vpop.f32.mrf.mxu0
    %v448 = vadd.f32 %v176, %v447
    %v449 = vpop.f32.mrf.mxu0
    %v450 = vadd.f32 %v176, %v449
    %451 = vmatmul.bf16.gmra.mxu0 %v254
    %v452 = vpop.f32.mrf.mxu0
    %v453 = vadd.f32 %v176, %v452
    %v454 = vpop.f32.mrf.mxu0
    %v455 = vadd.f32 %v176, %v454
    %456 = vmatmul.bf16.gmra.mxu0 %v257
    %v457 = vpop.f32.mrf.mxu0
    %v458 = vadd.f32 %v176, %v457
    %v459 = vpop.f32.mrf.mxu0
    %v460 = vadd.f32 %v176, %v459
    %461 = vdwg.mxu0
    %462 = vmatpush.bf16.msra.mxu0 0
    %463 = vmatpush.bf16.msra.mxu0 0
    %464 = vmatpush.bf16.msra.mxu0 0
    %465 = vmatpush.bf16.msra.mxu0 0
    %466 = vmatpush.bf16.msra.mxu0 0
    %467 = vmatpush.bf16.msra.mxu0 0
    %468 = vmatpush.bf16.msra.mxu0 0
    %469 = vmatpush.bf16.msra.mxu0 %v237
    %470 = vmatmul.bf16.gmra.mxu0 %v248
    %v471 = vpop.f32.mrf.mxu0
    %v472 = vadd.f32 %v177, %v471
    %v473 = vpop.f32.mrf.mxu0
    %v474 = vadd.f32 %v177, %v473
    %475 = vmatmul.bf16.gmra.mxu0 %v251
    %v476 = vpop.f32.mrf.mxu0
    %v477 = vadd.f32 %v177, %v476
    %v478 = vpop.f32.mrf.mxu0
    %v479 = vadd.f32 %v177, %v478
    %480 = vmatmul.bf16.gmra.mxu0 %v254
    %v481 = vpop.f32.mrf.mxu0
    %v482 = vadd.f32 %v177, %v481
    %v483 = vpop.f32.mrf.mxu0
    %v484 = vadd.f32 %v177, %v483
    %485 = vmatmul.bf16.gmra.mxu0 %v257
    %v486 = vpop.f32.mrf.mxu0
    %v487 = vadd.f32 %v177, %v486
    %v488 = vpop.f32.mrf.mxu0
    %v489 = vadd.f32 %v177, %v488
    %490 = vdwg.mxu0
    %491 = vst [vmem:[#allocation5] sm:$0xff] %v269
    %492 = vst [vmem:[#allocation5 + $0x8] sm:$0xff] %v298
    %493 = vst [vmem:[#allocation5 + $0x10] sm:$0xff] %v327
    %494 = vst [vmem:[#allocation5 + $0x18] sm:$0xff] %v356
    %495 = vst [vmem:[#allocation5 + $0x20] sm:$0xff] %v385
    %496 = vst [vmem:[#allocation5 + $0x28] sm:$0xff] %v414
    %497 = vst [vmem:[#allocation5 + $0x30] sm:$0xff] %v443
    %498 = vst [vmem:[#allocation5 + $0x38] sm:$0xff] %v472
    %499 = vst [vmem:[#allocation5 + $0x40] sm:$0xff] %v271
    %500 = vst [vmem:[#allocation5 + $0x48] sm:$0xff] %v300
    %501 = vst [vmem:[#allocation5 + $0x50] sm:$0xff] %v329
    %502 = vst [vmem:[#allocation5 + $0x58] sm:$0xff] %v358
    %503 = vst [vmem:[#allocation5 + $0x60] sm:$0xff] %v387
    %504 = vst [vmem:[#allocation5 + $0x68] sm:$0xff] %v416
    %505 = vst [vmem:[#allocation5 + $0x70] sm:$0xff] %v445
    %506 = vst [vmem:[#allocation5 + $0x78] sm:$0xff] %v474
    %507 = vst [vmem:[#allocation5 + $0x80] sm:$0xff] %v274
    %508 = vst [vmem:[#allocation5 + $0x88] sm:$0xff] %v303
    %509 = vst [vmem:[#allocation5 + $0x90] sm:$0xff] %v332
    %510 = vst [vmem:[#allocation5 + $0x98] sm:$0xff] %v361
    %511 = vst [vmem:[#allocation5 + $0xa0] sm:$0xff] %v390
    %512 = vst [vmem:[#allocation5 + $0xa8] sm:$0xff] %v419
    %513 = vst [vmem:[#allocation5 + $0xb0] sm:$0xff] %v448
    %514 = vst [vmem:[#allocation5 + $0xb8] sm:$0xff] %v477
    %515 = vst [vmem:[#allocation5 + $0xc0] sm:$0xff] %v276
    %516 = vst [vmem:[#allocation5 + $0xc8] sm:$0xff] %v305
    %517 = vst [vmem:[#allocation5 + $0xd0] sm:$0xff] %v334
    %518 = vst [vmem:[#allocation5 + $0xd8] sm:$0xff] %v363
    %519 = vst [vmem:[#allocation5 + $0xe0] sm:$0xff] %v392
    %520 = vst [vmem:[#allocation5 + $0xe8] sm:$0xff] %v421
    %521 = vst [vmem:[#allocation5 + $0xf0] sm:$0xff] %v450
    %522 = vst [vmem:[#allocation5 + $0xf8] sm:$0xff] %v479
    %523 = vst [vmem:[#allocation5 + $0x100] sm:$0xff] %v279
    %524 = vst [vmem:[#allocation5 + $0x108] sm:$0xff] %v308
    %525 = vst [vmem:[#allocation5 + $0x110] sm:$0xff] %v337
    %526 = vst [vmem:[#allocation5 + $0x118] sm:$0xff] %v366
    %527 = vst [vmem:[#allocation5 + $0x120] sm:$0xff] %v395
    %528 = vst [vmem:[#allocation5 + $0x128] sm:$0xff] %v424
    %529 = vst [vmem:[#allocation5 + $0x130] sm:$0xff] %v453
    %530 = vst [vmem:[#allocation5 + $0x138] sm:$0xff] %v482
    %531 = vst [vmem:[#allocation5 + $0x140] sm:$0xff] %v281
    %532 = vst [vmem:[#allocation5 + $0x148] sm:$0xff] %v310
    %533 = vst [vmem:[#allocation5 + $0x150] sm:$0xff] %v339
    %534 = vst [vmem:[#allocation5 + $0x158] sm:$0xff] %v368
    %535 = vst [vmem:[#allocation5 + $0x160] sm:$0xff] %v397
    %536 = vst [vmem:[#allocation5 + $0x168] sm:$0xff] %v426
    %537 = vst [vmem:[#allocation5 + $0x170] sm:$0xff] %v455
    %538 = vst [vmem:[#allocation5 + $0x178] sm:$0xff] %v484
    %539 = vst [vmem:[#allocation5 + $0x180] sm:$0xff] %v284
    %540 = vst [vmem:[#allocation5 + $0x188] sm:$0xff] %v313
    %541 = vst [vmem:[#allocation5 + $0x190] sm:$0xff] %v342
    %542 = vst [vmem:[#allocation5 + $0x198] sm:$0xff] %v371
    %543 = vst [vmem:[#allocation5 + $0x1a0] sm:$0xff] %v400
    %544 = vst [vmem:[#allocation5 + $0x1a8] sm:$0xff] %v429
    %545 = vst [vmem:[#allocation5 + $0x1b0] sm:$0xff] %v458
    %546 = vst [vmem:[#allocation5 + $0x1b8] sm:$0xff] %v487
    %547 = vst [vmem:[#allocation5 + $0x1c0] sm:$0xff] %v286
    %548 = vst [vmem:[#allocation5 + $0x1c8] sm:$0xff] %v315
    %549 = vst [vmem:[#allocation5 + $0x1d0] sm:$0xff] %v344
    %550 = vst [vmem:[#allocation5 + $0x1d8] sm:$0xff] %v373
    %551 = vst [vmem:[#allocation5 + $0x1e0] sm:$0xff] %v402
    %552 = vst [vmem:[#allocation5 + $0x1e8] sm:$0xff] %v431
    %553 = vst [vmem:[#allocation5 + $0x1f0] sm:$0xff] %v460
    %554 = vst [vmem:[#allocation5 + $0x1f8] sm:$0xff] %v489
    %v555 = vld [vmem:[#allocation13] sm:$0xff]
    %v556 = vld [vmem:[#allocation13 + $0x8] sm:$0xff]
    %v557 = vld [vmem:[#allocation13 + $0x10] sm:$0xff]
    %v558 = vld [vmem:[#allocation13 + $0x18] sm:$0xff]
    %v559 = vld [vmem:[#allocation13 + $0x20] sm:$0xff]
    %v560 = vld [vmem:[#allocation13 + $0x28] sm:$0xff]
    %v561 = vld [vmem:[#allocation13 + $0x30] sm:$0xff]
    %v562 = vld [vmem:[#allocation13 + $0x38] sm:$0xff]
    %v571 = vunpack.c.l.b16 %v152
    %v572 = vunpack.c.l.b16 %v153
    %v573 = vunpack.c.l.b16 %v154
    %v574 = vunpack.c.l.b16 %v155
    %v575 = vunpack.c.l.b16 %v156
    %v576 = vunpack.c.l.b16 %v157
    %v577 = vunpack.c.l.b16 %v158
    %v578 = vunpack.c.l.b16 %v159
    %v579 = vpack.c.b16 %v572, %v571
    %v580 = vpack.c.b16 %v574, %v573
    %v581 = vpack.c.b16 %v576, %v575
    %v582 = vpack.c.b16 %v578, %v577
    %v591 = vunpack.c.l.b16 %v555
    %v592 = vunpack.c.h.b16 %v555
    %v593 = vunpack.c.l.b16 %v556
    %v594 = vunpack.c.h.b16 %v556
    %v595 = vunpack.c.l.b16 %v557
    %v596 = vunpack.c.h.b16 %v557
    %v597 = vunpack.c.l.b16 %v558
    %v598 = vunpack.c.h.b16 %v558
    %v599 = vunpack.c.l.b16 %v559
    %v600 = vunpack.c.h.b16 %v559
    %v601 = vunpack.c.l.b16 %v560
    %v602 = vunpack.c.h.b16 %v560
    %v603 = vunpack.c.l.b16 %v561
    %v604 = vunpack.c.h.b16 %v561
    %v605 = vunpack.c.l.b16 %v562
    %v606 = vunpack.c.h.b16 %v562
    %v607 = vpack.c.b16 %v599, %v591
    %v608 = vpack.c.b16 %v600, %v592
    %v609 = vpack.c.b16 %v601, %v593
    %v610 = vpack.c.b16 %v602, %v594
    %v611 = vpack.c.b16 %v603, %v595
    %v612 = vpack.c.b16 %v604, %v596
    %v613 = vpack.c.b16 %v605, %v597
    %v614 = vpack.c.b16 %v606, %v598
    %v624 = vsel %vm246, %v579, 0
    %v627 = vsel %vm246, %v580, 0
    %v630 = vsel %vm246, %v581, 0
    %v633 = vsel %vm246, %v582, 0
    %635 = vmatpush.bf16.msra.mxu0 0
    %636 = vmatpush.bf16.msra.mxu0 0
    %637 = vmatpush.bf16.msra.mxu0 0
    %638 = vmatpush.bf16.msra.mxu0 0
    %639 = vmatpush.bf16.msra.mxu0 0
    %640 = vmatpush.bf16.msra.mxu0 0
    %641 = vmatpush.bf16.msra.mxu0 0
    %642 = vmatpush.bf16.msra.mxu0 %v607
    %643 = vmatmul.bf16.gmra.mxu0 %v624
    %v644 = vpop.f32.mrf.mxu0
    %v645 = vadd.f32 0.0, %v644
    %v646 = vpop.f32.mrf.mxu0
    %v647 = vadd.f32 0.0, %v646
    %648 = vmatmul.bf16.gmra.mxu0 %v627
    %v649 = vpop.f32.mrf.mxu0
    %v650 = vadd.f32 0.0, %v649
    %v651 = vpop.f32.mrf.mxu0
    %v652 = vadd.f32 0.0, %v651
    %653 = vmatmul.bf16.gmra.mxu0 %v630
    %v654 = vpop.f32.mrf.mxu0
    %v655 = vadd.f32 0.0, %v654
    %v656 = vpop.f32.mrf.mxu0
    %v657 = vadd.f32 0.0, %v656
    %658 = vmatmul.bf16.gmra.mxu0 %v633
    %v659 = vpop.f32.mrf.mxu0
    %v660 = vadd.f32 0.0, %v659
    %v661 = vpop.f32.mrf.mxu0
    %v662 = vadd.f32 0.0, %v661
    %663 = vdwg.mxu0
    %664 = vmatpush.bf16.msra.mxu0 0
    %665 = vmatpush.bf16.msra.mxu0 0
    %666 = vmatpush.bf16.msra.mxu0 0
    %667 = vmatpush.bf16.msra.mxu0 0
    %668 = vmatpush.bf16.msra.mxu0 0
    %669 = vmatpush.bf16.msra.mxu0 0
    %670 = vmatpush.bf16.msra.mxu0 0
    %671 = vmatpush.bf16.msra.mxu0 %v608
    %672 = vmatmul.bf16.gmra.mxu0 %v624
    %v673 = vpop.f32.mrf.mxu0
    %v674 = vadd.f32 0.0, %v673
    %v675 = vpop.f32.mrf.mxu0
    %v676 = vadd.f32 0.0, %v675
    %677 = vmatmul.bf16.gmra.mxu0 %v627
    %v678 = vpop.f32.mrf.mxu0
    %v679 = vadd.f32 0.0, %v678
    %v680 = vpop.f32.mrf.mxu0
    %v681 = vadd.f32 0.0, %v680
    %682 = vmatmul.bf16.gmra.mxu0 %v630
    %v683 = vpop.f32.mrf.mxu0
    %v684 = vadd.f32 0.0, %v683
    %v685 = vpop.f32.mrf.mxu0
    %v686 = vadd.f32 0.0, %v685
    %687 = vmatmul.bf16.gmra.mxu0 %v633
    %v688 = vpop.f32.mrf.mxu0
    %v689 = vadd.f32 0.0, %v688
    %v690 = vpop.f32.mrf.mxu0
    %v691 = vadd.f32 0.0, %v690
    %692 = vdwg.mxu0
    %693 = vmatpush.bf16.msra.mxu0 0
    %694 = vmatpush.bf16.msra.mxu0 0
    %695 = vmatpush.bf16.msra.mxu0 0
    %696 = vmatpush.bf16.msra.mxu0 0
    %697 = vmatpush.bf16.msra.mxu0 0
    %698 = vmatpush.bf16.msra.mxu0 0
    %699 = vmatpush.bf16.msra.mxu0 0
    %700 = vmatpush.bf16.msra.mxu0 %v609
    %701 = vmatmul.bf16.gmra.mxu0 %v624
    %v702 = vpop.f32.mrf.mxu0
    %v703 = vadd.f32 0.0, %v702
    %v704 = vpop.f32.mrf.mxu0
    %v705 = vadd.f32 0.0, %v704
    %706 = vmatmul.bf16.gmra.mxu0 %v627
    %v707 = vpop.f32.mrf.mxu0
    %v708 = vadd.f32 0.0, %v707
    %v709 = vpop.f32.mrf.mxu0
    %v710 = vadd.f32 0.0, %v709
    %711 = vmatmul.bf16.gmra.mxu0 %v630
    %v712 = vpop.f32.mrf.mxu0
    %v713 = vadd.f32 0.0, %v712
    %v714 = vpop.f32.mrf.mxu0
    %v715 = vadd.f32 0.0, %v714
    %716 = vmatmul.bf16.gmra.mxu0 %v633
    %v717 = vpop.f32.mrf.mxu0
    %v718 = vadd.f32 0.0, %v717
    %v719 = vpop.f32.mrf.mxu0
    %v720 = vadd.f32 0.0, %v719
    %721 = vdwg.mxu0
    %722 = vmatpush.bf16.msra.mxu0 0
    %723 = vmatpush.bf16.msra.mxu0 0
    %724 = vmatpush.bf16.msra.mxu0 0
    %725 = vmatpush.bf16.msra.mxu0 0
    %726 = vmatpush.bf16.msra.mxu0 0
    %727 = vmatpush.bf16.msra.mxu0 0
    %728 = vmatpush.bf16.msra.mxu0 0
    %729 = vmatpush.bf16.msra.mxu0 %v610
    %730 = vmatmul.bf16.gmra.mxu0 %v624
    %v731 = vpop.f32.mrf.mxu0
    %v732 = vadd.f32 0.0, %v731
    %v733 = vpop.f32.mrf.mxu0
    %v734 = vadd.f32 0.0, %v733
    %735 = vmatmul.bf16.gmra.mxu0 %v627
    %v736 = vpop.f32.mrf.mxu0
    %v737 = vadd.f32 0.0, %v736
    %v738 = vpop.f32.mrf.mxu0
    %v739 = vadd.f32 0.0, %v738
    %740 = vmatmul.bf16.gmra.mxu0 %v630
    %v741 = vpop.f32.mrf.mxu0
    %v742 = vadd.f32 0.0, %v741
    %v743 = vpop.f32.mrf.mxu0
    %v744 = vadd.f32 0.0, %v743
    %745 = vmatmul.bf16.gmra.mxu0 %v633
    %v746 = vpop.f32.mrf.mxu0
    %v747 = vadd.f32 0.0, %v746
    %v748 = vpop.f32.mrf.mxu0
    %v749 = vadd.f32 0.0, %v748
    %750 = vdwg.mxu0
    %751 = vmatpush.bf16.msra.mxu0 0
    %752 = vmatpush.bf16.msra.mxu0 0
    %753 = vmatpush.bf16.msra.mxu0 0
    %754 = vmatpush.bf16.msra.mxu0 0
    %755 = vmatpush.bf16.msra.mxu0 0
    %756 = vmatpush.bf16.msra.mxu0 0
    %757 = vmatpush.bf16.msra.mxu0 0
    %758 = vmatpush.bf16.msra.mxu0 %v611
    %759 = vmatmul.bf16.gmra.mxu0 %v624
    %v760 = vpop.f32.mrf.mxu0
    %v761 = vadd.f32 0.0, %v760
    %v762 = vpop.f32.mrf.mxu0
    %v763 = vadd.f32 0.0, %v762
    %764 = vmatmul.bf16.gmra.mxu0 %v627
    %v765 = vpop.f32.mrf.mxu0
    %v766 = vadd.f32 0.0, %v765
    %v767 = vpop.f32.mrf.mxu0
    %v768 = vadd.f32 0.0, %v767
    %769 = vmatmul.bf16.gmra.mxu0 %v630
    %v770 = vpop.f32.mrf.mxu0
    %v771 = vadd.f32 0.0, %v770
    %v772 = vpop.f32.mrf.mxu0
    %v773 = vadd.f32 0.0, %v772
    %774 = vmatmul.bf16.gmra.mxu0 %v633
    %v775 = vpop.f32.mrf.mxu0
    %v776 = vadd.f32 0.0, %v775
    %v777 = vpop.f32.mrf.mxu0
    %v778 = vadd.f32 0.0, %v777
    %779 = vdwg.mxu0
    %780 = vmatpush.bf16.msra.mxu0 0
    %781 = vmatpush.bf16.msra.mxu0 0
    %782 = vmatpush.bf16.msra.mxu0 0
    %783 = vmatpush.bf16.msra.mxu0 0
    %784 = vmatpush.bf16.msra.mxu0 0
    %785 = vmatpush.bf16.msra.mxu0 0
    %786 = vmatpush.bf16.msra.mxu0 0
    %787 = vmatpush.bf16.msra.mxu0 %v612
    %788 = vmatmul.bf16.gmra.mxu0 %v624
    %v789 = vpop.f32.mrf.mxu0
    %v790 = vadd.f32 0.0, %v789
    %v791 = vpop.f32.mrf.mxu0
    %v792 = vadd.f32 0.0, %v791
    %793 = vmatmul.bf16.gmra.mxu0 %v627
    %v794 = vpop.f32.mrf.mxu0
    %v795 = vadd.f32 0.0, %v794
    %v796 = vpop.f32.mrf.mxu0
    %v797 = vadd.f32 0.0, %v796
    %798 = vmatmul.bf16.gmra.mxu0 %v630
    %v799 = vpop.f32.mrf.mxu0
    %v800 = vadd.f32 0.0, %v799
    %v801 = vpop.f32.mrf.mxu0
    %v802 = vadd.f32 0.0, %v801
    %803 = vmatmul.bf16.gmra.mxu0 %v633
    %v804 = vpop.f32.mrf.mxu0
    %v805 = vadd.f32 0.0, %v804
    %v806 = vpop.f32.mrf.mxu0
    %v807 = vadd.f32 0.0, %v806
    %808 = vdwg.mxu0
    %809 = vmatpush.bf16.msra.mxu0 0
    %810 = vmatpush.bf16.msra.mxu0 0
    %811 = vmatpush.bf16.msra.mxu0 0
    %812 = vmatpush.bf16.msra.mxu0 0
    %813 = vmatpush.bf16.msra.mxu0 0
    %814 = vmatpush.bf16.msra.mxu0 0
    %815 = vmatpush.bf16.msra.mxu0 0
    %816 = vmatpush.bf16.msra.mxu0 %v613
    %817 = vmatmul.bf16.gmra.mxu0 %v624
    %v818 = vpop.f32.mrf.mxu0
    %v819 = vadd.f32 0.0, %v818
    %v820 = vpop.f32.mrf.mxu0
    %v821 = vadd.f32 0.0, %v820
    %822 = vmatmul.bf16.gmra.mxu0 %v627
    %v823 = vpop.f32.mrf.mxu0
    %v824 = vadd.f32 0.0, %v823
    %v825 = vpop.f32.mrf.mxu0
    %v826 = vadd.f32 0.0, %v825
    %827 = vmatmul.bf16.gmra.mxu0 %v630
    %v828 = vpop.f32.mrf.mxu0
    %v829 = vadd.f32 0.0, %v828
    %v830 = vpop.f32.mrf.mxu0
    %v831 = vadd.f32 0.0, %v830
    %832 = vmatmul.bf16.gmra.mxu0 %v633
    %v833 = vpop.f32.mrf.mxu0
    %v834 = vadd.f32 0.0, %v833
    %v835 = vpop.f32.mrf.mxu0
    %v836 = vadd.f32 0.0, %v835
    %837 = vdwg.mxu0
    %838 = vmatpush.bf16.msra.mxu0 0
    %839 = vmatpush.bf16.msra.mxu0 0
    %840 = vmatpush.bf16.msra.mxu0 0
    %841 = vmatpush.bf16.msra.mxu0 0
    %842 = vmatpush.bf16.msra.mxu0 0
    %843 = vmatpush.bf16.msra.mxu0 0
    %844 = vmatpush.bf16.msra.mxu0 0
    %845 = vmatpush.bf16.msra.mxu0 %v614
    %846 = vmatmul.bf16.gmra.mxu0 %v624
    %v847 = vpop.f32.mrf.mxu0
    %v848 = vadd.f32 0.0, %v847
    %v849 = vpop.f32.mrf.mxu0
    %v850 = vadd.f32 0.0, %v849
    %851 = vmatmul.bf16.gmra.mxu0 %v627
    %v852 = vpop.f32.mrf.mxu0
    %v853 = vadd.f32 0.0, %v852
    %v854 = vpop.f32.mrf.mxu0
    %v855 = vadd.f32 0.0, %v854
    %856 = vmatmul.bf16.gmra.mxu0 %v630
    %v857 = vpop.f32.mrf.mxu0
    %v858 = vadd.f32 0.0, %v857
    %v859 = vpop.f32.mrf.mxu0
    %v860 = vadd.f32 0.0, %v859
    %861 = vmatmul.bf16.gmra.mxu0 %v633
    %v862 = vpop.f32.mrf.mxu0
    %v863 = vadd.f32 0.0, %v862
    %v864 = vpop.f32.mrf.mxu0
    %v865 = vadd.f32 0.0, %v864
    %866 = vdwg.mxu0
    %867 = vst [vmem:[#allocation6] sm:$0xff] %v645
    %868 = vst [vmem:[#allocation6 + $0x8] sm:$0xff] %v674
    %869 = vst [vmem:[#allocation6 + $0x10] sm:$0xff] %v703
    %870 = vst [vmem:[#allocation6 + $0x18] sm:$0xff] %v732
    %871 = vst [vmem:[#allocation6 + $0x20] sm:$0xff] %v761
    %872 = vst [vmem:[#allocation6 + $0x28] sm:$0xff] %v790
    %873 = vst [vmem:[#allocation6 + $0x30] sm:$0xff] %v819
    %874 = vst [vmem:[#allocation6 + $0x38] sm:$0xff] %v848
    %875 = vst [vmem:[#allocation6 + $0x40] sm:$0xff] %v647
    %876 = vst [vmem:[#allocation6 + $0x48] sm:$0xff] %v676
    %877 = vst [vmem:[#allocation6 + $0x50] sm:$0xff] %v705
    %878 = vst [vmem:[#allocation6 + $0x58] sm:$0xff] %v734
    %879 = vst [vmem:[#allocation6 + $0x60] sm:$0xff] %v763
    %880 = vst [vmem:[#allocation6 + $0x68] sm:$0xff] %v792
    %881 = vst [vmem:[#allocation6 + $0x70] sm:$0xff] %v821
    %882 = vst [vmem:[#allocation6 + $0x78] sm:$0xff] %v850
    %883 = vst [vmem:[#allocation6 + $0x80] sm:$0xff] %v650
    %884 = vst [vmem:[#allocation6 + $0x88] sm:$0xff] %v679
    %885 = vst [vmem:[#allocation6 + $0x90] sm:$0xff] %v708
    %886 = vst [vmem:[#allocation6 + $0x98] sm:$0xff] %v737
    %887 = vst [vmem:[#allocation6 + $0xa0] sm:$0xff] %v766
    %888 = vst [vmem:[#allocation6 + $0xa8] sm:$0xff] %v795
    %889 = vst [vmem:[#allocation6 + $0xb0] sm:$0xff] %v824
    %890 = vst [vmem:[#allocation6 + $0xb8] sm:$0xff] %v853
    %891 = vst [vmem:[#allocation6 + $0xc0] sm:$0xff] %v652
    %892 = vst [vmem:[#allocation6 + $0xc8] sm:$0xff] %v681
    %893 = vst [vmem:[#allocation6 + $0xd0] sm:$0xff] %v710
    %894 = vst [vmem:[#allocation6 + $0xd8] sm:$0xff] %v739
    %895 = vst [vmem:[#allocation6 + $0xe0] sm:$0xff] %v768
    %896 = vst [vmem:[#allocation6 + $0xe8] sm:$0xff] %v797
    %897 = vst [vmem:[#allocation6 + $0xf0] sm:$0xff] %v826
    %898 = vst [vmem:[#allocation6 + $0xf8] sm:$0xff] %v855
    %899 = vst [vmem:[#allocation6 + $0x100] sm:$0xff] %v655
    %900 = vst [vmem:[#allocation6 + $0x108] sm:$0xff] %v684
    %901 = vst [vmem:[#allocation6 + $0x110] sm:$0xff] %v713
    %902 = vst [vmem:[#allocation6 + $0x118] sm:$0xff] %v742
    %903 = vst [vmem:[#allocation6 + $0x120] sm:$0xff] %v771
    %904 = vst [vmem:[#allocation6 + $0x128] sm:$0xff] %v800
    %905 = vst [vmem:[#allocation6 + $0x130] sm:$0xff] %v829
    %906 = vst [vmem:[#allocation6 + $0x138] sm:$0xff] %v858
    %907 = vst [vmem:[#allocation6 + $0x140] sm:$0xff] %v657
    %908 = vst [vmem:[#allocation6 + $0x148] sm:$0xff] %v686
    %909 = vst [vmem:[#allocation6 + $0x150] sm:$0xff] %v715
    %910 = vst [vmem:[#allocation6 + $0x158] sm:$0xff] %v744
    %911 = vst [vmem:[#allocation6 + $0x160] sm:$0xff] %v773
    %912 = vst [vmem:[#allocation6 + $0x168] sm:$0xff] %v802
    %913 = vst [vmem:[#allocation6 + $0x170] sm:$0xff] %v831
    %914 = vst [vmem:[#allocation6 + $0x178] sm:$0xff] %v860
    %915 = vst [vmem:[#allocation6 + $0x180] sm:$0xff] %v660
    %916 = vst [vmem:[#allocation6 + $0x188] sm:$0xff] %v689
    %917 = vst [vmem:[#allocation6 + $0x190] sm:$0xff] %v718
    %918 = vst [vmem:[#allocation6 + $0x198] sm:$0xff] %v747
    %919 = vst [vmem:[#allocation6 + $0x1a0] sm:$0xff] %v776
    %920 = vst [vmem:[#allocation6 + $0x1a8] sm:$0xff] %v805
    %921 = vst [vmem:[#allocation6 + $0x1b0] sm:$0xff] %v834
    %922 = vst [vmem:[#allocation6 + $0x1b8] sm:$0xff] %v863
    %923 = vst [vmem:[#allocation6 + $0x1c0] sm:$0xff] %v662
    %924 = vst [vmem:[#allocation6 + $0x1c8] sm:$0xff] %v691
    %925 = vst [vmem:[#allocation6 + $0x1d0] sm:$0xff] %v720
    %926 = vst [vmem:[#allocation6 + $0x1d8] sm:$0xff] %v749
    %927 = vst [vmem:[#allocation6 + $0x1e0] sm:$0xff] %v778
    %928 = vst [vmem:[#allocation6 + $0x1e8] sm:$0xff] %v807
    %929 = vst [vmem:[#allocation6 + $0x1f0] sm:$0xff] %v836
    %930 = vst [vmem:[#allocation6 + $0x1f8] sm:$0xff] %v865
    %v931 = vld [vmem:[%s0] sm:$0xff]
    %v932 = vsub.s32 %v931, 1
    %s933 = smul.u32 0, 8
    %s934 = ssub.s32 0, 0
    %s935 = smul.u32 %s934, 8
    %s936 = sadd.s32 %s935, 7
    %v937 = vlaneseq
    %v938 = vand.u32 %v937, 127
    %v939 = vadd.s32 %v938, 128
    %vm940 = vcmp.lt.s32.totalorder %v938, 128
    %vm941 = vcmp.lt.s32.totalorder %v939, 128
    %v942 = vstv %s933
    %v943 = vstv %s936
    %v944 = vsel %vm940, %v942, %v943
    %v945 = vsel %vm941, %v942, %v943
    %v946 = vsel %vm940, 1, 4294967295
    %v947 = vsel %vm941, 1, 4294967295
    %v948 = vld [vmem:[#allocation2] sm:$0xff]
    %v949 = vld [vmem:[#allocation2 + $0x8] sm:$0xff]
    %v950 = vld [vmem:[#allocation3] sm:$0xff]
    %v951 = vld [vmem:[#allocation3 + $0x8] sm:$0xff]
    %v952 = vld [vmem:[#allocation4] sm:$0xff]
    %v953 = vld [vmem:[#allocation4 + $0x8] sm:$0xff]
    %v954 = vpack.c.bf16 %v948, %v948
    %v955 = vpack.c.bf16 %v949, %v949
    %v956 = vld [vmem:[#allocation15] sm:$0xff]
    %v957 = vld [vmem:[#allocation15 + $0x8] sm:$0xff]
    %v958 = vld [vmem:[#allocation15 + $0x10] sm:$0xff]
    %v959 = vld [vmem:[#allocation15 + $0x18] sm:$0xff]
    %v960 = vld [vmem:[#allocation15 + $0x20] sm:$0xff]
    %v961 = vld [vmem:[#allocation15 + $0x28] sm:$0xff]
    %v962 = vld [vmem:[#allocation15 + $0x30] sm:$0xff]
    %v963 = vld [vmem:[#allocation15 + $0x38] sm:$0xff]
    %v964 = vld [vmem:[#allocation15 + $0x40] sm:$0xff]
    %v965 = vld [vmem:[#allocation15 + $0x48] sm:$0xff]
    %v966 = vld [vmem:[#allocation15 + $0x50] sm:$0xff]
    %v967 = vld [vmem:[#allocation15 + $0x58] sm:$0xff]
    %v968 = vld [vmem:[#allocation15 + $0x60] sm:$0xff]
    %v969 = vld [vmem:[#allocation15 + $0x68] sm:$0xff]
    %v970 = vld [vmem:[#allocation15 + $0x70] sm:$0xff]
    %v971 = vld [vmem:[#allocation15 + $0x78] sm:$0xff]
    %v972 = vld [vmem:[#allocation15 + $0x80] sm:$0xff]
    %v973 = vld [vmem:[#allocation15 + $0x88] sm:$0xff]
    %v974 = vld [vmem:[#allocation15 + $0x90] sm:$0xff]
    %v975 = vld [vmem:[#allocation15 + $0x98] sm:$0xff]
    %v976 = vld [vmem:[#allocation15 + $0xa0] sm:$0xff]
    %v977 = vld [vmem:[#allocation15 + $0xa8] sm:$0xff]
    %v978 = vld [vmem:[#allocation15 + $0xb0] sm:$0xff]
    %v979 = vld [vmem:[#allocation15 + $0xb8] sm:$0xff]
    %v980 = vld [vmem:[#allocation15 + $0xc0] sm:$0xff]
    %v981 = vld [vmem:[#allocation15 + $0xc8] sm:$0xff]
    %v982 = vld [vmem:[#allocation15 + $0xd0] sm:$0xff]
    %v983 = vld [vmem:[#allocation15 + $0xd8] sm:$0xff]
    %v984 = vld [vmem:[#allocation15 + $0xe0] sm:$0xff]
    %v985 = vld [vmem:[#allocation15 + $0xe8] sm:$0xff]
    %v986 = vld [vmem:[#allocation15 + $0xf0] sm:$0xff]
    %v987 = vld [vmem:[#allocation15 + $0xf8] sm:$0xff]
    %v988 = vld [vmem:[#allocation15 + $0x100] sm:$0xff]
    %v989 = vld [vmem:[#allocation15 + $0x108] sm:$0xff]
    %v990 = vld [vmem:[#allocation15 + $0x110] sm:$0xff]
    %v991 = vld [vmem:[#allocation15 + $0x118] sm:$0xff]
    %v992 = vld [vmem:[#allocation15 + $0x120] sm:$0xff]
    %v993 = vld [vmem:[#allocation15 + $0x128] sm:$0xff]
    %v994 = vld [vmem:[#allocation15 + $0x130] sm:$0xff]
    %v995 = vld [vmem:[#allocation15 + $0x138] sm:$0xff]
    %v996 = vld [vmem:[#allocation15 + $0x140] sm:$0xff]
    %v997 = vld [vmem:[#allocation15 + $0x148] sm:$0xff]
    %v998 = vld [vmem:[#allocation15 + $0x150] sm:$0xff]
    %v999 = vld [vmem:[#allocation15 + $0x158] sm:$0xff]
    %v1000 = vld [vmem:[#allocation15 + $0x160] sm:$0xff]
    %v1001 = vld [vmem:[#allocation15 + $0x168] sm:$0xff]
    %v1002 = vld [vmem:[#allocation15 + $0x170] sm:$0xff]
    %v1003 = vld [vmem:[#allocation15 + $0x178] sm:$0xff]
    %v1004 = vld [vmem:[#allocation15 + $0x180] sm:$0xff]
    %v1005 = vld [vmem:[#allocation15 + $0x188] sm:$0xff]
    %v1006 = vld [vmem:[#allocation15 + $0x190] sm:$0xff]
    %v1007 = vld [vmem:[#allocation15 + $0x198] sm:$0xff]
    %v1008 = vld [vmem:[#allocation15 + $0x1a0] sm:$0xff]
    %v1009 = vld [vmem:[#allocation15 + $0x1a8] sm:$0xff]
    %v1010 = vld [vmem:[#allocation15 + $0x1b0] sm:$0xff]
    %v1011 = vld [vmem:[#allocation15 + $0x1b8] sm:$0xff]
    %v1012 = vld [vmem:[#allocation15 + $0x1c0] sm:$0xff]
    %v1013 = vld [vmem:[#allocation15 + $0x1c8] sm:$0xff]
    %v1014 = vld [vmem:[#allocation15 + $0x1d0] sm:$0xff]
    %v1015 = vld [vmem:[#allocation15 + $0x1d8] sm:$0xff]
    %v1016 = vld [vmem:[#allocation15 + $0x1e0] sm:$0xff]
    %v1017 = vld [vmem:[#allocation15 + $0x1e8] sm:$0xff]
    %v1018 = vld [vmem:[#allocation15 + $0x1f0] sm:$0xff]
    %v1019 = vld [vmem:[#allocation15 + $0x1f8] sm:$0xff]
    %v1020 = vld [vmem:[#allocation15 + $0x200] sm:$0xff]
    %v1021 = vld [vmem:[#allocation15 + $0x208] sm:$0xff]
    %v1022 = vld [vmem:[#allocation15 + $0x210] sm:$0xff]
    %v1023 = vld [vmem:[#allocation15 + $0x218] sm:$0xff]
    %v1024 = vld [vmem:[#allocation15 + $0x220] sm:$0xff]
    %v1025 = vld [vmem:[#allocation15 + $0x228] sm:$0xff]
    %v1026 = vld [vmem:[#allocation15 + $0x230] sm:$0xff]
    %v1027 = vld [vmem:[#allocation15 + $0x238] sm:$0xff]
    %v1028 = vld [vmem:[#allocation15 + $0x240] sm:$0xff]
    %v1029 = vld [vmem:[#allocation15 + $0x248] sm:$0xff]
    %v1030 = vld [vmem:[#allocation15 + $0x250] sm:$0xff]
    %v1031 = vld [vmem:[#allocation15 + $0x258] sm:$0xff]
    %v1032 = vld [vmem:[#allocation15 + $0x260] sm:$0xff]
    %v1033 = vld [vmem:[#allocation15 + $0x268] sm:$0xff]
    %v1034 = vld [vmem:[#allocation15 + $0x270] sm:$0xff]
    %v1035 = vld [vmem:[#allocation15 + $0x278] sm:$0xff]
    %v1036 = vld [vmem:[#allocation15 + $0x280] sm:$0xff]
    %v1037 = vld [vmem:[#allocation15 + $0x288] sm:$0xff]
    %v1038 = vld [vmem:[#allocation15 + $0x290] sm:$0xff]
    %v1039 = vld [vmem:[#allocation15 + $0x298] sm:$0xff]
    %v1040 = vld [vmem:[#allocation15 + $0x2a0] sm:$0xff]
    %v1041 = vld [vmem:[#allocation15 + $0x2a8] sm:$0xff]
    %v1042 = vld [vmem:[#allocation15 + $0x2b0] sm:$0xff]
    %v1043 = vld [vmem:[#allocation15 + $0x2b8] sm:$0xff]
    %v1044 = vld [vmem:[#allocation15 + $0x2c0] sm:$0xff]
    %v1045 = vld [vmem:[#allocation15 + $0x2c8] sm:$0xff]
    %v1046 = vld [vmem:[#allocation15 + $0x2d0] sm:$0xff]
    %v1047 = vld [vmem:[#allocation15 + $0x2d8] sm:$0xff]
    %v1048 = vld [vmem:[#allocation15 + $0x2e0] sm:$0xff]
    %v1049 = vld [vmem:[#allocation15 + $0x2e8] sm:$0xff]
    %v1050 = vld [vmem:[#allocation15 + $0x2f0] sm:$0xff]
    %v1051 = vld [vmem:[#allocation15 + $0x2f8] sm:$0xff]
    %v1052 = vld [vmem:[#allocation15 + $0x300] sm:$0xff]
    %v1053 = vld [vmem:[#allocation15 + $0x308] sm:$0xff]
    %v1054 = vld [vmem:[#allocation15 + $0x310] sm:$0xff]
    %v1055 = vld [vmem:[#allocation15 + $0x318] sm:$0xff]
    %v1056 = vld [vmem:[#allocation15 + $0x320] sm:$0xff]
    %v1057 = vld [vmem:[#allocation15 + $0x328] sm:$0xff]
    %v1058 = vld [vmem:[#allocation15 + $0x330] sm:$0xff]
    %v1059 = vld [vmem:[#allocation15 + $0x338] sm:$0xff]
    %v1060 = vld [vmem:[#allocation15 + $0x340] sm:$0xff]
    %v1061 = vld [vmem:[#allocation15 + $0x348] sm:$0xff]
    %v1062 = vld [vmem:[#allocation15 + $0x350] sm:$0xff]
    %v1063 = vld [vmem:[#allocation15 + $0x358] sm:$0xff]
    %v1064 = vld [vmem:[#allocation15 + $0x360] sm:$0xff]
    %v1065 = vld [vmem:[#allocation15 + $0x368] sm:$0xff]
    %v1066 = vld [vmem:[#allocation15 + $0x370] sm:$0xff]
    %v1067 = vld [vmem:[#allocation15 + $0x378] sm:$0xff]
    %v1068 = vld [vmem:[#allocation15 + $0x380] sm:$0xff]
    %v1069 = vld [vmem:[#allocation15 + $0x388] sm:$0xff]
    %v1070 = vld [vmem:[#allocation15 + $0x390] sm:$0xff]
    %v1071 = vld [vmem:[#allocation15 + $0x398] sm:$0xff]
    %v1072 = vld [vmem:[#allocation15 + $0x3a0] sm:$0xff]
    %v1073 = vld [vmem:[#allocation15 + $0x3a8] sm:$0xff]
    %v1074 = vld [vmem:[#allocation15 + $0x3b0] sm:$0xff]
    %v1075 = vld [vmem:[#allocation15 + $0x3b8] sm:$0xff]
    %v1076 = vld [vmem:[#allocation15 + $0x3c0] sm:$0xff]
    %v1077 = vld [vmem:[#allocation15 + $0x3c8] sm:$0xff]
    %v1078 = vld [vmem:[#allocation15 + $0x3d0] sm:$0xff]
    %v1079 = vld [vmem:[#allocation15 + $0x3d8] sm:$0xff]
    %v1080 = vld [vmem:[#allocation15 + $0x3e0] sm:$0xff]
    %v1081 = vld [vmem:[#allocation15 + $0x3e8] sm:$0xff]
    %v1082 = vld [vmem:[#allocation15 + $0x3f0] sm:$0xff]
    %v1083 = vld [vmem:[#allocation15 + $0x3f8] sm:$0xff]
    %v1084 = vld [vmem:[#allocation5] sm:$0xff]
    %v1085 = vld [vmem:[#allocation5 + $0x8] sm:$0xff]
    %v1086 = vld [vmem:[#allocation5 + $0x10] sm:$0xff]
    %v1087 = vld [vmem:[#allocation5 + $0x18] sm:$0xff]
    %v1088 = vld [vmem:[#allocation5 + $0x20] sm:$0xff]
    %v1089 = vld [vmem:[#allocation5 + $0x28] sm:$0xff]
    %v1090 = vld [vmem:[#allocation5 + $0x30] sm:$0xff]
    %v1091 = vld [vmem:[#allocation5 + $0x38] sm:$0xff]
    %v1220 = vunpack.c.l.b16 %v956
    %v1221 = vunpack.c.h.b16 %v956
    %v1222 = vunpack.c.l.b16 %v957
    %v1223 = vunpack.c.h.b16 %v957
    %v1224 = vunpack.c.l.b16 %v958
    %v1225 = vunpack.c.h.b16 %v958
    %v1226 = vunpack.c.l.b16 %v959
    %v1227 = vunpack.c.h.b16 %v959
    %v1228 = vunpack.c.l.b16 %v960
    %v1229 = vunpack.c.h.b16 %v960
    %v1230 = vunpack.c.l.b16 %v961
    %v1231 = vunpack.c.h.b16 %v961
    %v1232 = vunpack.c.l.b16 %v962
    %v1233 = vunpack.c.h.b16 %v962
    %v1234 = vunpack.c.l.b16 %v963
    %v1235 = vunpack.c.h.b16 %v963
    %v1236 = vunpack.c.l.b16 %v964
    %v1237 = vunpack.c.h.b16 %v964
    %v1238 = vunpack.c.l.b16 %v965
    %v1239 = vunpack.c.h.b16 %v965
    %v1240 = vunpack.c.l.b16 %v966
    %v1241 = vunpack.c.h.b16 %v966
    %v1242 = vunpack.c.l.b16 %v967
    %v1243 = vunpack.c.h.b16 %v967
    %v1244 = vunpack.c.l.b16 %v968
    %v1245 = vunpack.c.h.b16 %v968
    %v1246 = vunpack.c.l.b16 %v969
    %v1247 = vunpack.c.h.b16 %v969
    %v1248 = vunpack.c.l.b16 %v970
    %v1249 = vunpack.c.h.b16 %v970
    %v1250 = vunpack.c.l.b16 %v971
    %v1251 = vunpack.c.h.b16 %v971
    %v1252 = vunpack.c.l.b16 %v972
    %v1253 = vunpack.c.h.b16 %v972
    %v1254 = vunpack.c.l.b16 %v973
    %v1255 = vunpack.c.h.b16 %v973
    %v1256 = vunpack.c.l.b16 %v974
    %v1257 = vunpack.c.h.b16 %v974
    %v1258 = vunpack.c.l.b16 %v975
    %v1259 = vunpack.c.h.b16 %v975
    %v1260 = vunpack.c.l.b16 %v976
    %v1261 = vunpack.c.h.b16 %v976
    %v1262 = vunpack.c.l.b16 %v977
    %v1263 = vunpack.c.h.b16 %v977
    %v1264 = vunpack.c.l.b16 %v978
    %v1265 = vunpack.c.h.b16 %v978
    %v1266 = vunpack.c.l.b16 %v979
    %v1267 = vunpack.c.h.b16 %v979
    %v1268 = vunpack.c.l.b16 %v980
    %v1269 = vunpack.c.h.b16 %v980
    %v1270 = vunpack.c.l.b16 %v981
    %v1271 = vunpack.c.h.b16 %v981
    %v1272 = vunpack.c.l.b16 %v982
    %v1273 = vunpack.c.h.b16 %v982
    %v1274 = vunpack.c.l.b16 %v983
    %v1275 = vunpack.c.h.b16 %v983
    %v1276 = vunpack.c.l.b16 %v984
    %v1277 = vunpack.c.h.b16 %v984
    %v1278 = vunpack.c.l.b16 %v985
    %v1279 = vunpack.c.h.b16 %v985
    %v1280 = vunpack.c.l.b16 %v986
    %v1281 = vunpack.c.h.b16 %v986
    %v1282 = vunpack.c.l.b16 %v987
    %v1283 = vunpack.c.h.b16 %v987
    %v1284 = vunpack.c.l.b16 %v988
    %v1285 = vunpack.c.h.b16 %v988
    %v1286 = vunpack.c.l.b16 %v989
    %v1287 = vunpack.c.h.b16 %v989
    %v1288 = vunpack.c.l.b16 %v990
    %v1289 = vunpack.c.h.b16 %v990
    %v1290 = vunpack.c.l.b16 %v991
    %v1291 = vunpack.c.h.b16 %v991
    %v1292 = vunpack.c.l.b16 %v992
    %v1293 = vunpack.c.h.b16 %v992
    %v1294 = vunpack.c.l.b16 %v993
    %v1295 = vunpack.c.h.b16 %v993
    %v1296 = vunpack.c.l.b16 %v994
    %v1297 = vunpack.c.h.b16 %v994
    %v1298 = vunpack.c.l.b16 %v995
    %v1299 = vunpack.c.h.b16 %v995
    %v1300 = vunpack.c.l.b16 %v996
    %v1301 = vunpack.c.h.b16 %v996
    %v1302 = vunpack.c.l.b16 %v997
    %v1303 = vunpack.c.h.b16 %v997
    %v1304 = vunpack.c.l.b16 %v998
    %v1305 = vunpack.c.h.b16 %v998
    %v1306 = vunpack.c.l.b16 %v999
    %v1307 = vunpack.c.h.b16 %v999
    %v1308 = vunpack.c.l.b16 %v1000
    %v1309 = vunpack.c.h.b16 %v1000
    %v1310 = vunpack.c.l.b16 %v1001
    %v1311 = vunpack.c.h.b16 %v1001
    %v1312 = vunpack.c.l.b16 %v1002
    %v1313 = vunpack.c.h.b16 %v1002
    %v1314 = vunpack.c.l.b16 %v1003
    %v1315 = vunpack.c.h.b16 %v1003
    %v1316 = vunpack.c.l.b16 %v1004
    %v1317 = vunpack.c.h.b16 %v1004
    %v1318 = vunpack.c.l.b16 %v1005
    %v1319 = vunpack.c.h.b16 %v1005
    %v1320 = vunpack.c.l.b16 %v1006
    %v1321 = vunpack.c.h.b16 %v1006
    %v1322 = vunpack.c.l.b16 %v1007
    %v1323 = vunpack.c.h.b16 %v1007
    %v1324 = vunpack.c.l.b16 %v1008
    %v1325 = vunpack.c.h.b16 %v1008
    %v1326 = vunpack.c.l.b16 %v1009
    %v1327 = vunpack.c.h.b16 %v1009
    %v1328 = vunpack.c.l.b16 %v1010
    %v1329 = vunpack.c.h.b16 %v1010
    %v1330 = vunpack.c.l.b16 %v1011
    %v1331 = vunpack.c.h.b16 %v1011
    %v1332 = vunpack.c.l.b16 %v1012
    %v1333 = vunpack.c.h.b16 %v1012
    %v1334 = vunpack.c.l.b16 %v1013
    %v1335 = vunpack.c.h.b16 %v1013
    %v1336 = vunpack.c.l.b16 %v1014
    %v1337 = vunpack.c.h.b16 %v1014
    %v1338 = vunpack.c.l.b16 %v1015
    %v1339 = vunpack.c.h.b16 %v1015
    %v1340 = vunpack.c.l.b16 %v1016
    %v1341 = vunpack.c.h.b16 %v1016
    %v1342 = vunpack.c.l.b16 %v1017
    %v1343 = vunpack.c.h.b16 %v1017
    %v1344 = vunpack.c.l.b16 %v1018
    %v1345 = vunpack.c.h.b16 %v1018
    %v1346 = vunpack.c.l.b16 %v1019
    %v1347 = vunpack.c.h.b16 %v1019
    %v1348 = vunpack.c.l.b16 %v1020
    %v1349 = vunpack.c.h.b16 %v1020
    %v1350 = vunpack.c.l.b16 %v1021
    %v1351 = vunpack.c.h.b16 %v1021
    %v1352 = vunpack.c.l.b16 %v1022
    %v1353 = vunpack.c.h.b16 %v1022
    %v1354 = vunpack.c.l.b16 %v1023
    %v1355 = vunpack.c.h.b16 %v1023
    %v1356 = vunpack.c.l.b16 %v1024
    %v1357 = vunpack.c.h.b16 %v1024
    %v1358 = vunpack.c.l.b16 %v1025
    %v1359 = vunpack.c.h.b16 %v1025
    %v1360 = vunpack.c.l.b16 %v1026
    %v1361 = vunpack.c.h.b16 %v1026
    %v1362 = vunpack.c.l.b16 %v1027
    %v1363 = vunpack.c.h.b16 %v1027
    %v1364 = vunpack.c.l.b16 %v1028
    %v1365 = vunpack.c.h.b16 %v1028
    %v1366 = vunpack.c.l.b16 %v1029
    %v1367 = vunpack.c.h.b16 %v1029
    %v1368 = vunpack.c.l.b16 %v1030
    %v1369 = vunpack.c.h.b16 %v1030
    %v1370 = vunpack.c.l.b16 %v1031
    %v1371 = vunpack.c.h.b16 %v1031
    %v1372 = vunpack.c.l.b16 %v1032
    %v1373 = vunpack.c.h.b16 %v1032
    %v1374 = vunpack.c.l.b16 %v1033
    %v1375 = vunpack.c.h.b16 %v1033
    %v1376 = vunpack.c.l.b16 %v1034
    %v1377 = vunpack.c.h.b16 %v1034
    %v1378 = vunpack.c.l.b16 %v1035
    %v1379 = vunpack.c.h.b16 %v1035
    %v1380 = vunpack.c.l.b16 %v1036
    %v1381 = vunpack.c.h.b16 %v1036
    %v1382 = vunpack.c.l.b16 %v1037
    %v1383 = vunpack.c.h.b16 %v1037
    %v1384 = vunpack.c.l.b16 %v1038
    %v1385 = vunpack.c.h.b16 %v1038
    %v1386 = vunpack.c.l.b16 %v1039
    %v1387 = vunpack.c.h.b16 %v1039
    %v1388 = vunpack.c.l.b16 %v1040
    %v1389 = vunpack.c.h.b16 %v1040
    %v1390 = vunpack.c.l.b16 %v1041
    %v1391 = vunpack.c.h.b16 %v1041
    %v1392 = vunpack.c.l.b16 %v1042
    %v1393 = vunpack.c.h.b16 %v1042
    %v1394 = vunpack.c.l.b16 %v1043
    %v1395 = vunpack.c.h.b16 %v1043
    %v1396 = vunpack.c.l.b16 %v1044
    %v1397 = vunpack.c.h.b16 %v1044
    %v1398 = vunpack.c.l.b16 %v1045
    %v1399 = vunpack.c.h.b16 %v1045
    %v1400 = vunpack.c.l.b16 %v1046
    %v1401 = vunpack.c.h.b16 %v1046
    %v1402 = vunpack.c.l.b16 %v1047
    %v1403 = vunpack.c.h.b16 %v1047
    %v1404 = vunpack.c.l.b16 %v1048
    %v1405 = vunpack.c.h.b16 %v1048
    %v1406 = vunpack.c.l.b16 %v1049
    %v1407 = vunpack.c.h.b16 %v1049
    %v1408 = vunpack.c.l.b16 %v1050
    %v1409 = vunpack.c.h.b16 %v1050
    %v1410 = vunpack.c.l.b16 %v1051
    %v1411 = vunpack.c.h.b16 %v1051
    %v1412 = vunpack.c.l.b16 %v1052
    %v1413 = vunpack.c.h.b16 %v1052
    %v1414 = vunpack.c.l.b16 %v1053
    %v1415 = vunpack.c.h.b16 %v1053
    %v1416 = vunpack.c.l.b16 %v1054
    %v1417 = vunpack.c.h.b16 %v1054
    %v1418 = vunpack.c.l.b16 %v1055
    %v1419 = vunpack.c.h.b16 %v1055
    %v1420 = vunpack.c.l.b16 %v1056
    %v1421 = vunpack.c.h.b16 %v1056
    %v1422 = vunpack.c.l.b16 %v1057
    %v1423 = vunpack.c.h.b16 %v1057
    %v1424 = vunpack.c.l.b16 %v1058
    %v1425 = vunpack.c.h.b16 %v1058
    %v1426 = vunpack.c.l.b16 %v1059
    %v1427 = vunpack.c.h.b16 %v1059
    %v1428 = vunpack.c.l.b16 %v1060
    %v1429 = vunpack.c.h.b16 %v1060
    %v1430 = vunpack.c.l.b16 %v1061
    %v1431 = vunpack.c.h.b16 %v1061
    %v1432 = vunpack.c.l.b16 %v1062
    %v1433 = vunpack.c.h.b16 %v1062
    %v1434 = vunpack.c.l.b16 %v1063
    %v1435 = vunpack.c.h.b16 %v1063
    %v1436 = vunpack.c.l.b16 %v1064
    %v1437 = vunpack.c.h.b16 %v1064
    %v1438 = vunpack.c.l.b16 %v1065
    %v1439 = vunpack.c.h.b16 %v1065
    %v1440 = vunpack.c.l.b16 %v1066
    %v1441 = vunpack.c.h.b16 %v1066
    %v1442 = vunpack.c.l.b16 %v1067
    %v1443 = vunpack.c.h.b16 %v1067
    %v1444 = vunpack.c.l.b16 %v1068
    %v1445 = vunpack.c.h.b16 %v1068
    %v1446 = vunpack.c.l.b16 %v1069
    %v1447 = vunpack.c.h.b16 %v1069
    %v1448 = vunpack.c.l.b16 %v1070
    %v1449 = vunpack.c.h.b16 %v1070
    %v1450 = vunpack.c.l.b16 %v1071
    %v1451 = vunpack.c.h.b16 %v1071
    %v1452 = vunpack.c.l.b16 %v1072
    %v1453 = vunpack.c.h.b16 %v1072
    %v1454 = vunpack.c.l.b16 %v1073
    %v1455 = vunpack.c.h.b16 %v1073
    %v1456 = vunpack.c.l.b16 %v1074
    %v1457 = vunpack.c.h.b16 %v1074
    %v1458 = vunpack.c.l.b16 %v1075
    %v1459 = vunpack.c.h.b16 %v1075
    %v1460 = vunpack.c.l.b16 %v1076
    %v1461 = vunpack.c.h.b16 %v1076
    %v1462 = vunpack.c.l.b16 %v1077
    %v1463 = vunpack.c.h.b16 %v1077
    %v1464 = vunpack.c.l.b16 %v1078
    %v1465 = vunpack.c.h.b16 %v1078
    %v1466 = vunpack.c.l.b16 %v1079
    %v1467 = vunpack.c.h.b16 %v1079
    %v1468 = vunpack.c.l.b16 %v1080
    %v1469 = vunpack.c.h.b16 %v1080
    %v1470 = vunpack.c.l.b16 %v1081
    %v1471 = vunpack.c.h.b16 %v1081
    %v1472 = vunpack.c.l.b16 %v1082
    %v1473 = vunpack.c.h.b16 %v1082
    %v1474 = vunpack.c.l.b16 %v1083
    %v1475 = vunpack.c.h.b16 %v1083
    %v1476 = vpack.c.b16 %v1228, %v1220
    %v1477 = vpack.c.b16 %v1229, %v1221
    %v1478 = vpack.c.b16 %v1230, %v1222
    %v1479 = vpack.c.b16 %v1231, %v1223
    %v1480 = vpack.c.b16 %v1232, %v1224
    %v1481 = vpack.c.b16 %v1233, %v1225
    %v1482 = vpack.c.b16 %v1234, %v1226
    %v1483 = vpack.c.b16 %v1235, %v1227
    %v1484 = vpack.c.b16 %v1244, %v1236
    %v1485 = vpack.c.b16 %v1245, %v1237
    %v1486 = vpack.c.b16 %v1246, %v1238
    %v1487 = vpack.c.b16 %v1247, %v1239
    %v1488 = vpack.c.b16 %v1248, %v1240
    %v1489 = vpack.c.b16 %v1249, %v1241
    %v1490 = vpack.c.b16 %v1250, %v1242
    %v1491 = vpack.c.b16 %v1251, %v1243
    %v1492 = vpack.c.b16 %v1260, %v1252
    %v1493 = vpack.c.b16 %v1261, %v1253
    %v1494 = vpack.c.b16 %v1262, %v1254
    %v1495 = vpack.c.b16 %v1263, %v1255
    %v1496 = vpack.c.b16 %v1264, %v1256
    %v1497 = vpack.c.b16 %v1265, %v1257
    %v1498 = vpack.c.b16 %v1266, %v1258
    %v1499 = vpack.c.b16 %v1267, %v1259
    %v1500 = vpack.c.b16 %v1276, %v1268
    %v1501 = vpack.c.b16 %v1277, %v1269
    %v1502 = vpack.c.b16 %v1278, %v1270
    %v1503 = vpack.c.b16 %v1279, %v1271
    %v1504 = vpack.c.b16 %v1280, %v1272
    %v1505 = vpack.c.b16 %v1281, %v1273
    %v1506 = vpack.c.b16 %v1282, %v1274
    %v1507 = vpack.c.b16 %v1283, %v1275
    %v1508 = vpack.c.b16 %v1292, %v1284
    %v1509 = vpack.c.b16 %v1293, %v1285
    %v1510 = vpack.c.b16 %v1294, %v1286
    %v1511 = vpack.c.b16 %v1295, %v1287
    %v1512 = vpack.c.b16 %v1296, %v1288
    %v1513 = vpack.c.b16 %v1297, %v1289
    %v1514 = vpack.c.b16 %v1298, %v1290
    %v1515 = vpack.c.b16 %v1299, %v1291
    %v1516 = vpack.c.b16 %v1308, %v1300
    %v1517 = vpack.c.b16 %v1309, %v1301
    %v1518 = vpack.c.b16 %v1310, %v1302
    %v1519 = vpack.c.b16 %v1311, %v1303
    %v1520 = vpack.c.b16 %v1312, %v1304
    %v1521 = vpack.c.b16 %v1313, %v1305
    %v1522 = vpack.c.b16 %v1314, %v1306
    %v1523 = vpack.c.b16 %v1315, %v1307
    %v1524 = vpack.c.b16 %v1324, %v1316
    %v1525 = vpack.c.b16 %v1325, %v1317
    %v1526 = vpack.c.b16 %v1326, %v1318
    %v1527 = vpack.c.b16 %v1327, %v1319
    %v1528 = vpack.c.b16 %v1328, %v1320
    %v1529 = vpack.c.b16 %v1329, %v1321
    %v1530 = vpack.c.b16 %v1330, %v1322
    %v1531 = vpack.c.b16 %v1331, %v1323
    %v1532 = vpack.c.b16 %v1340, %v1332
    %v1533 = vpack.c.b16 %v1341, %v1333
    %v1534 = vpack.c.b16 %v1342, %v1334
    %v1535 = vpack.c.b16 %v1343, %v1335
    %v1536 = vpack.c.b16 %v1344, %v1336
    %v1537 = vpack.c.b16 %v1345, %v1337
    %v1538 = vpack.c.b16 %v1346, %v1338
    %v1539 = vpack.c.b16 %v1347, %v1339
    %v1540 = vpack.c.b16 %v1356, %v1348
    %v1541 = vpack.c.b16 %v1357, %v1349
    %v1542 = vpack.c.b16 %v1358, %v1350
    %v1543 = vpack.c.b16 %v1359, %v1351
    %v1544 = vpack.c.b16 %v1360, %v1352
    %v1545 = vpack.c.b16 %v1361, %v1353
    %v1546 = vpack.c.b16 %v1362, %v1354
    %v1547 = vpack.c.b16 %v1363, %v1355
    %v1548 = vpack.c.b16 %v1372, %v1364
    %v1549 = vpack.c.b16 %v1373, %v1365
    %v1550 = vpack.c.b16 %v1374, %v1366
    %v1551 = vpack.c.b16 %v1375, %v1367
    %v1552 = vpack.c.b16 %v1376, %v1368
    %v1553 = vpack.c.b16 %v1377, %v1369
    %v1554 = vpack.c.b16 %v1378, %v1370
    %v1555 = vpack.c.b16 %v1379, %v1371
    %v1556 = vpack.c.b16 %v1388, %v1380
    %v1557 = vpack.c.b16 %v1389, %v1381
    %v1558 = vpack.c.b16 %v1390, %v1382
    %v1559 = vpack.c.b16 %v1391, %v1383
    %v1560 = vpack.c.b16 %v1392, %v1384
    %v1561 = vpack.c.b16 %v1393, %v1385
    %v1562 = vpack.c.b16 %v1394, %v1386
    %v1563 = vpack.c.b16 %v1395, %v1387
    %v1564 = vpack.c.b16 %v1404, %v1396
    %v1565 = vpack.c.b16 %v1405, %v1397
    %v1566 = vpack.c.b16 %v1406, %v1398
    %v1567 = vpack.c.b16 %v1407, %v1399
    %v1568 = vpack.c.b16 %v1408, %v1400
    %v1569 = vpack.c.b16 %v1409, %v1401
    %v1570 = vpack.c.b16 %v1410, %v1402
    %v1571 = vpack.c.b16 %v1411, %v1403
    %v1572 = vpack.c.b16 %v1420, %v1412
    %v1573 = vpack.c.b16 %v1421, %v1413
    %v1574 = vpack.c.b16 %v1422, %v1414
    %v1575 = vpack.c.b16 %v1423, %v1415
    %v1576 = vpack.c.b16 %v1424, %v1416
    %v1577 = vpack.c.b16 %v1425, %v1417
    %v1578 = vpack.c.b16 %v1426, %v1418
    %v1579 = vpack.c.b16 %v1427, %v1419
    %v1580 = vpack.c.b16 %v1436, %v1428
    %v1581 = vpack.c.b16 %v1437, %v1429
    %v1582 = vpack.c.b16 %v1438, %v1430
    %v1583 = vpack.c.b16 %v1439, %v1431
    %v1584 = vpack.c.b16 %v1440, %v1432
    %v1585 = vpack.c.b16 %v1441, %v1433
    %v1586 = vpack.c.b16 %v1442, %v1434
    %v1587 = vpack.c.b16 %v1443, %v1435
    %v1588 = vpack.c.b16 %v1452, %v1444
    %v1589 = vpack.c.b16 %v1453, %v1445
    %v1590 = vpack.c.b16 %v1454, %v1446
    %v1591 = vpack.c.b16 %v1455, %v1447
    %v1592 = vpack.c.b16 %v1456, %v1448
    %v1593 = vpack.c.b16 %v1457, %v1449
    %v1594 = vpack.c.b16 %v1458, %v1450
    %v1595 = vpack.c.b16 %v1459, %v1451
    %v1596 = vpack.c.b16 %v1468, %v1460
    %v1597 = vpack.c.b16 %v1469, %v1461
    %v1598 = vpack.c.b16 %v1470, %v1462
    %v1599 = vpack.c.b16 %v1471, %v1463
    %v1600 = vpack.c.b16 %v1472, %v1464
    %v1601 = vpack.c.b16 %v1473, %v1465
    %v1602 = vpack.c.b16 %v1474, %v1466
    %v1603 = vpack.c.b16 %v1475, %v1467
    %1732 = vmatpush.bf16.msra.mxu0 %v1532
    %1733 = vmatpush.bf16.msra.mxu0 %v1524
    %1734 = vmatpush.bf16.msra.mxu0 %v1516
    %1735 = vmatpush.bf16.msra.mxu0 %v1508
    %1736 = vmatpush.bf16.msra.mxu0 %v1500
    %1737 = vmatpush.bf16.msra.mxu0 %v1492
    %1738 = vmatpush.bf16.msra.mxu0 %v1484
    %1739 = vmatpush.bf16.msra.mxu0 %v1476
    %1740 = vmatmul.bf16.gmra.mxu0 %v954
    %v1741 = vpop.f32.mrf.mxu0
    %v1742 = vadd.f32 %v1084, %v1741
    %v1743 = vpop.f32.mrf.mxu0
    %1744 = vdwg.mxu0
    %1745 = vmatpush.bf16.msra.mxu0 %v1596
    %1746 = vmatpush.bf16.msra.mxu0 %v1588
    %1747 = vmatpush.bf16.msra.mxu0 %v1580
    %1748 = vmatpush.bf16.msra.mxu0 %v1572
    %1749 = vmatpush.bf16.msra.mxu0 %v1564
    %1750 = vmatpush.bf16.msra.mxu0 %v1556
    %1751 = vmatpush.bf16.msra.mxu0 %v1548
    %1752 = vmatpush.bf16.msra.mxu0 %v1540
    %1753 = vmatmul.bf16.gmra.mxu0 %v955
    %v1754 = vpop.f32.mrf.mxu0
    %v1755 = vadd.f32 %v1742, %v1754
    %v1756 = vpop.f32.mrf.mxu0
    %1757 = vdwg.mxu0
    %1758 = vmatpush.bf16.msra.mxu0 %v1533
    %1759 = vmatpush.bf16.msra.mxu0 %v1525
    %1760 = vmatpush.bf16.msra.mxu0 %v1517
    %1761 = vmatpush.bf16.msra.mxu0 %v1509
    %1762 = vmatpush.bf16.msra.mxu0 %v1501
    %1763 = vmatpush.bf16.msra.mxu0 %v1493
    %1764 = vmatpush.bf16.msra.mxu0 %v1485
    %1765 = vmatpush.bf16.msra.mxu0 %v1477
    %1766 = vmatmul.bf16.gmra.mxu0 %v954
    %v1767 = vpop.f32.mrf.mxu0
    %v1768 = vadd.f32 %v1085, %v1767
    %v1769 = vpop.f32.mrf.mxu0
    %1770 = vdwg.mxu0
    %1771 = vmatpush.bf16.msra.mxu0 %v1597
    %1772 = vmatpush.bf16.msra.mxu0 %v1589
    %1773 = vmatpush.bf16.msra.mxu0 %v1581
    %1774 = vmatpush.bf16.msra.mxu0 %v1573
    %1775 = vmatpush.bf16.msra.mxu0 %v1565
    %1776 = vmatpush.bf16.msra.mxu0 %v1557
    %1777 = vmatpush.bf16.msra.mxu0 %v1549
    %1778 = vmatpush.bf16.msra.mxu0 %v1541
    %1779 = vmatmul.bf16.gmra.mxu0 %v955
    %v1780 = vpop.f32.mrf.mxu0
    %v1781 = vadd.f32 %v1768, %v1780
    %v1782 = vpop.f32.mrf.mxu0
    %1783 = vdwg.mxu0
    %1784 = vmatpush.bf16.msra.mxu0 %v1534
    %1785 = vmatpush.bf16.msra.mxu0 %v1526
    %1786 = vmatpush.bf16.msra.mxu0 %v1518
    %1787 = vmatpush.bf16.msra.mxu0 %v1510
    %1788 = vmatpush.bf16.msra.mxu0 %v1502
    %1789 = vmatpush.bf16.msra.mxu0 %v1494
    %1790 = vmatpush.bf16.msra.mxu0 %v1486
    %1791 = vmatpush.bf16.msra.mxu0 %v1478
    %1792 = vmatmul.bf16.gmra.mxu0 %v954
    %v1793 = vpop.f32.mrf.mxu0
    %v1794 = vadd.f32 %v1086, %v1793
    %v1795 = vpop.f32.mrf.mxu0
    %1796 = vdwg.mxu0
    %1797 = vmatpush.bf16.msra.mxu0 %v1598
    %1798 = vmatpush.bf16.msra.mxu0 %v1590
    %1799 = vmatpush.bf16.msra.mxu0 %v1582
    %1800 = vmatpush.bf16.msra.mxu0 %v1574
    %1801 = vmatpush.bf16.msra.mxu0 %v1566
    %1802 = vmatpush.bf16.msra.mxu0 %v1558
    %1803 = vmatpush.bf16.msra.mxu0 %v1550
    %1804 = vmatpush.bf16.msra.mxu0 %v1542
    %1805 = vmatmul.bf16.gmra.mxu0 %v955
    %v1806 = vpop.f32.mrf.mxu0
    %v1807 = vadd.f32 %v1794, %v1806
    %v1808 = vpop.f32.mrf.mxu0
    %1809 = vdwg.mxu0
    %1810 = vmatpush.bf16.msra.mxu0 %v1535
    %1811 = vmatpush.bf16.msra.mxu0 %v1527
    %1812 = vmatpush.bf16.msra.mxu0 %v1519
    %1813 = vmatpush.bf16.msra.mxu0 %v1511
    %1814 = vmatpush.bf16.msra.mxu0 %v1503
    %1815 = vmatpush.bf16.msra.mxu0 %v1495
    %1816 = vmatpush.bf16.msra.mxu0 %v1487
    %1817 = vmatpush.bf16.msra.mxu0 %v1479
    %1818 = vmatmul.bf16.gmra.mxu0 %v954
    %v1819 = vpop.f32.mrf.mxu0
    %v1820 = vadd.f32 %v1087, %v1819
    %v1821 = vpop.f32.mrf.mxu0
    %1822 = vdwg.mxu0
    %1823 = vmatpush.bf16.msra.mxu0 %v1599
    %1824 = vmatpush.bf16.msra.mxu0 %v1591
    %1825 = vmatpush.bf16.msra.mxu0 %v1583
    %1826 = vmatpush.bf16.msra.mxu0 %v1575
    %1827 = vmatpush.bf16.msra.mxu0 %v1567
    %1828 = vmatpush.bf16.msra.mxu0 %v1559
    %1829 = vmatpush.bf16.msra.mxu0 %v1551
    %1830 = vmatpush.bf16.msra.mxu0 %v1543
    %1831 = vmatmul.bf16.gmra.mxu0 %v955
    %v1832 = vpop.f32.mrf.mxu0
    %v1833 = vadd.f32 %v1820, %v1832
    %v1834 = vpop.f32.mrf.mxu0
    %1835 = vdwg.mxu0
    %1836 = vmatpush.bf16.msra.mxu0 %v1536
    %1837 = vmatpush.bf16.msra.mxu0 %v1528
    %1838 = vmatpush.bf16.msra.mxu0 %v1520
    %1839 = vmatpush.bf16.msra.mxu0 %v1512
    %1840 = vmatpush.bf16.msra.mxu0 %v1504
    %1841 = vmatpush.bf16.msra.mxu0 %v1496
    %1842 = vmatpush.bf16.msra.mxu0 %v1488
    %1843 = vmatpush.bf16.msra.mxu0 %v1480
    %1844 = vmatmul.bf16.gmra.mxu0 %v954
    %v1845 = vpop.f32.mrf.mxu0
    %v1846 = vadd.f32 %v1088, %v1845
    %v1847 = vpop.f32.mrf.mxu0
    %1848 = vdwg.mxu0
    %1849 = vmatpush.bf16.msra.mxu0 %v1600
    %1850 = vmatpush.bf16.msra.mxu0 %v1592
    %1851 = vmatpush.bf16.msra.mxu0 %v1584
    %1852 = vmatpush.bf16.msra.mxu0 %v1576
    %1853 = vmatpush.bf16.msra.mxu0 %v1568
    %1854 = vmatpush.bf16.msra.mxu0 %v1560
    %1855 = vmatpush.bf16.msra.mxu0 %v1552
    %1856 = vmatpush.bf16.msra.mxu0 %v1544
    %1857 = vmatmul.bf16.gmra.mxu0 %v955
    %v1858 = vpop.f32.mrf.mxu0
    %v1859 = vadd.f32 %v1846, %v1858
    %v1860 = vpop.f32.mrf.mxu0
    %1861 = vdwg.mxu0
    %1862 = vmatpush.bf16.msra.mxu0 %v1537
    %1863 = vmatpush.bf16.msra.mxu0 %v1529
    %1864 = vmatpush.bf16.msra.mxu0 %v1521
    %1865 = vmatpush.bf16.msra.mxu0 %v1513
    %1866 = vmatpush.bf16.msra.mxu0 %v1505
    %1867 = vmatpush.bf16.msra.mxu0 %v1497
    %1868 = vmatpush.bf16.msra.mxu0 %v1489
    %1869 = vmatpush.bf16.msra.mxu0 %v1481
    %1870 = vmatmul.bf16.gmra.mxu0 %v954
    %v1871 = vpop.f32.mrf.mxu0
    %v1872 = vadd.f32 %v1089, %v1871
    %v1873 = vpop.f32.mrf.mxu0
    %1874 = vdwg.mxu0
    %1875 = vmatpush.bf16.msra.mxu0 %v1601
    %1876 = vmatpush.bf16.msra.mxu0 %v1593
    %1877 = vmatpush.bf16.msra.mxu0 %v1585
    %1878 = vmatpush.bf16.msra.mxu0 %v1577
    %1879 = vmatpush.bf16.msra.mxu0 %v1569
    %1880 = vmatpush.bf16.msra.mxu0 %v1561
    %1881 = vmatpush.bf16.msra.mxu0 %v1553
    %1882 = vmatpush.bf16.msra.mxu0 %v1545
    %1883 = vmatmul.bf16.gmra.mxu0 %v955
    %v1884 = vpop.f32.mrf.mxu0
    %v1885 = vadd.f32 %v1872, %v1884
    %v1886 = vpop.f32.mrf.mxu0
    %1887 = vdwg.mxu0
    %1888 = vmatpush.bf16.msra.mxu0 %v1538
    %1889 = vmatpush.bf16.msra.mxu0 %v1530
    %1890 = vmatpush.bf16.msra.mxu0 %v1522
    %1891 = vmatpush.bf16.msra.mxu0 %v1514
    %1892 = vmatpush.bf16.msra.mxu0 %v1506
    %1893 = vmatpush.bf16.msra.mxu0 %v1498
    %1894 = vmatpush.bf16.msra.mxu0 %v1490
    %1895 = vmatpush.bf16.msra.mxu0 %v1482
    %1896 = vmatmul.bf16.gmra.mxu0 %v954
    %v1897 = vpop.f32.mrf.mxu0
    %v1898 = vadd.f32 %v1090, %v1897
    %v1899 = vpop.f32.mrf.mxu0
    %1900 = vdwg.mxu0
    %1901 = vmatpush.bf16.msra.mxu0 %v1602
    %1902 = vmatpush.bf16.msra.mxu0 %v1594
    %1903 = vmatpush.bf16.msra.mxu0 %v1586
    %1904 = vmatpush.bf16.msra.mxu0 %v1578
    %1905 = vmatpush.bf16.msra.mxu0 %v1570
    %1906 = vmatpush.bf16.msra.mxu0 %v1562
    %1907 = vmatpush.bf16.msra.mxu0 %v1554
    %1908 = vmatpush.bf16.msra.mxu0 %v1546
    %1909 = vmatmul.bf16.gmra.mxu0 %v955
    %v1910 = vpop.f32.mrf.mxu0
    %v1911 = vadd.f32 %v1898, %v1910
    %v1912 = vpop.f32.mrf.mxu0
    %1913 = vdwg.mxu0
    %1914 = vmatpush.bf16.msra.mxu0 %v1539
    %1915 = vmatpush.bf16.msra.mxu0 %v1531
    %1916 = vmatpush.bf16.msra.mxu0 %v1523
    %1917 = vmatpush.bf16.msra.mxu0 %v1515
    %1918 = vmatpush.bf16.msra.mxu0 %v1507
    %1919 = vmatpush.bf16.msra.mxu0 %v1499
    %1920 = vmatpush.bf16.msra.mxu0 %v1491
    %1921 = vmatpush.bf16.msra.mxu0 %v1483
    %1922 = vmatmul.bf16.gmra.mxu0 %v954
    %v1923 = vpop.f32.mrf.mxu0
    %v1924 = vadd.f32 %v1091, %v1923
    %v1925 = vpop.f32.mrf.mxu0
    %1926 = vdwg.mxu0
    %1927 = vmatpush.bf16.msra.mxu0 %v1603
    %1928 = vmatpush.bf16.msra.mxu0 %v1595
    %1929 = vmatpush.bf16.msra.mxu0 %v1587
    %1930 = vmatpush.bf16.msra.mxu0 %v1579
    %1931 = vmatpush.bf16.msra.mxu0 %v1571
    %1932 = vmatpush.bf16.msra.mxu0 %v1563
    %1933 = vmatpush.bf16.msra.mxu0 %v1555
    %1934 = vmatpush.bf16.msra.mxu0 %v1547
    %1935 = vmatmul.bf16.gmra.mxu0 %v955
    %v1936 = vpop.f32.mrf.mxu0
    %v1937 = vadd.f32 %v1924, %v1936
    %v1938 = vpop.f32.mrf.mxu0
    %1939 = vdwg.mxu0
    %s1940 = scalar_lea.vmem [#allocation6], 448
    %v1941 = vld [vmem:[%s1940] sm:$0xff]
    %v1942 = vld [vmem:[%s1940 + $0x8] sm:$0xff]
    %v1943 = vld [vmem:[%s1940 + $0x10] sm:$0xff]
    %v1944 = vld [vmem:[%s1940 + $0x18] sm:$0xff]
    %v1945 = vld [vmem:[%s1940 + $0x20] sm:$0xff]
    %v1946 = vld [vmem:[%s1940 + $0x28] sm:$0xff]
    %v1947 = vld [vmem:[%s1940 + $0x30] sm:$0xff]
    %v1948 = vld [vmem:[%s1940 + $0x38] sm:$0xff]
    %v1949 = vadd.f32 %v1755, %v1941
    %v1950 = vadd.f32 %v1781, %v1942
    %v1951 = vadd.f32 %v1807, %v1943
    %v1952 = vadd.f32 %v1833, %v1944
    %v1953 = vadd.f32 %v1859, %v1945
    %v1954 = vadd.f32 %v1885, %v1946
    %v1955 = vadd.f32 %v1911, %v1947
    %v1956 = vadd.f32 %v1937, %v1948
    %v1957 = vxor.u32 %v1949, 2147483648
    %v1958 = vxor.u32 %v1950, 2147483648
    %v1959 = vmul.f32 %v1957, 1.442695
    %v1960 = vpow.pop %v1959
    %v1961 = vmul.f32 %v1958, 1.442695
    %v1962 = vpow.pop %v1961
    %v1963 = vadd.f32 %v1960, 1.0
    %v1964 = vadd.f32 %v1962, 1.0
    %v1965 = vrcp.pop %v1963
    %v1966 = vmul.f32 %v1963, %v1965
    %v1967 = vsub.f32 1.0, %v1966
    %v1968 = vmul.f32 %v1965, %v1967
    %v1969 = vadd.f32 %v1965, %v1968
    %vm1970 = vweird.f32 %v1963
    %vm1971 = vweird.f32 %v1965
    %vm1972 = vmor %vm1970, %vm1971
    %v1973 = vsel %vm1972, %v1965, %v1969
    %v1974 = vand.u32 2147483647, %v1963
    %vm1975 = vcmp.eq.f32.partialorder %v1974, 8.507059e+37
    %v1976 = vand.u32 %v1963, 2147483648
    %v1977 = vor.u32 1.1754944e-38, %v1976
    %v1978 = vsel %vm1975, %v1977, %v1973
    %v1979 = vmul.f32 1.0, %v1978
    %v1980 = vrcp.pop %v1964
    %v1981 = vmul.f32 %v1964, %v1980
    %v1982 = vsub.f32 1.0, %v1981
    %v1983 = vmul.f32 %v1980, %v1982
    %v1984 = vadd.f32 %v1980, %v1983
    %vm1985 = vweird.f32 %v1964
    %vm1986 = vweird.f32 %v1980
    %vm1987 = vmor %vm1985, %vm1986
    %v1988 = vsel %vm1987, %v1980, %v1984
    %v1989 = vand.u32 2147483647, %v1964
    %vm1990 = vcmp.eq.f32.partialorder %v1989, 8.507059e+37
    %v1991 = vand.u32 %v1964, 2147483648
    %v1992 = vor.u32 1.1754944e-38, %v1991
    %v1993 = vsel %vm1990, %v1992, %v1988
    %v1994 = vmul.f32 1.0, %v1993
    %v1995 = vxor.u32 %v1951, 2147483648
    %v1996 = vxor.u32 %v1952, 2147483648
    %v1997 = vmul.f32 %v1995, 1.442695
    %v1998 = vpow.pop %v1997
    %v1999 = vmul.f32 %v1996, 1.442695
    %v2000 = vpow.pop %v1999
    %v2001 = vadd.f32 %v1998, 1.0
    %v2002 = vadd.f32 %v2000, 1.0
    %v2003 = vrcp.pop %v2001
    %v2004 = vmul.f32 %v2001, %v2003
    %v2005 = vsub.f32 1.0, %v2004
    %v2006 = vmul.f32 %v2003, %v2005
    %v2007 = vadd.f32 %v2003, %v2006
    %vm2008 = vweird.f32 %v2001
    %vm2009 = vweird.f32 %v2003
    %vm2010 = vmor %vm2008, %vm2009
    %v2011 = vsel %vm2010, %v2003, %v2007
    %v2012 = vand.u32 2147483647, %v2001
    %vm2013 = vcmp.eq.f32.partialorder %v2012, 8.507059e+37
    %v2014 = vand.u32 %v2001, 2147483648
    %v2015 = vor.u32 1.1754944e-38, %v2014
    %v2016 = vsel %vm2013, %v2015, %v2011
    %v2017 = vmul.f32 1.0, %v2016
    %v2018 = vrcp.pop %v2002
    %v2019 = vmul.f32 %v2002, %v2018
    %v2020 = vsub.f32 1.0, %v2019
    %v2021 = vmul.f32 %v2018, %v2020
    %v2022 = vadd.f32 %v2018, %v2021
    %vm2023 = vweird.f32 %v2002
    %vm2024 = vweird.f32 %v2018
    %vm2025 = vmor %vm2023, %vm2024
    %v2026 = vsel %vm2025, %v2018, %v2022
    %v2027 = vand.u32 2147483647, %v2002
    %vm2028 = vcmp.eq.f32.partialorder %v2027, 8.507059e+37
    %v2029 = vand.u32 %v2002, 2147483648
    %v2030 = vor.u32 1.1754944e-38, %v2029
    %v2031 = vsel %vm2028, %v2030, %v2026
    %v2032 = vmul.f32 1.0, %v2031
    %v2033 = vtanh.pop %v1953
    %v2034 = vtanh.pop %v1954
    %v2035 = vxor.u32 %v1955, 2147483648
    %v2036 = vxor.u32 %v1956, 2147483648
    %v2037 = vmul.f32 %v2035, 1.442695
    %v2038 = vpow.pop %v2037
    %v2039 = vmul.f32 %v2036, 1.442695
    %v2040 = vpow.pop %v2039
    %v2041 = vadd.f32 %v2038, 1.0
    %v2042 = vadd.f32 %v2040, 1.0
    %v2043 = vrcp.pop %v2041
    %v2044 = vmul.f32 %v2041, %v2043
    %v2045 = vsub.f32 1.0, %v2044
    %v2046 = vmul.f32 %v2043, %v2045
    %v2047 = vadd.f32 %v2043, %v2046
    %vm2048 = vweird.f32 %v2041
    %vm2049 = vweird.f32 %v2043
    %vm2050 = vmor %vm2048, %vm2049
    %v2051 = vsel %vm2050, %v2043, %v2047
    %v2052 = vand.u32 2147483647, %v2041
    %vm2053 = vcmp.eq.f32.partialorder %v2052, 8.507059e+37
    %v2054 = vand.u32 %v2041, 2147483648
    %v2055 = vor.u32 1.1754944e-38, %v2054
    %v2056 = vsel %vm2053, %v2055, %v2051
    %v2057 = vmul.f32 1.0, %v2056
    %v2058 = vrcp.pop %v2042
    %v2059 = vmul.f32 %v2042, %v2058
    %v2060 = vsub.f32 1.0, %v2059
    %v2061 = vmul.f32 %v2058, %v2060
    %v2062 = vadd.f32 %v2058, %v2061
    %vm2063 = vweird.f32 %v2042
    %vm2064 = vweird.f32 %v2058
    %vm2065 = vmor %vm2063, %vm2064
    %v2066 = vsel %vm2065, %v2058, %v2062
    %v2067 = vand.u32 2147483647, %v2042
    %vm2068 = vcmp.eq.f32.partialorder %v2067, 8.507059e+37
    %v2069 = vand.u32 %v2042, 2147483648
    %v2070 = vor.u32 1.1754944e-38, %v2069
    %v2071 = vsel %vm2068, %v2070, %v2066
    %v2072 = vmul.f32 1.0, %v2071
    %v2073 = vmul.f32 %v2017, %v950
    %v2074 = vmul.f32 %v2032, %v951
    %v2075 = vmul.f32 %v1979, %v2033
    %v2076 = vmul.f32 %v1994, %v2034
    %v2077 = vadd.f32 %v2073, %v2075
    %v2078 = vadd.f32 %v2074, %v2076
    %v2079 = vtanh.pop %v2077
    %v2080 = vtanh.pop %v2078
    %v2081 = vmul.f32 %v2057, %v2079
    %v2082 = vmul.f32 %v2072, %v2080
    %2083 = vset.pattern.permute.xlu0 0
    %2084 = vperm.xlu0 %2083, %v932
    %v2085 = vpop.permute.xlu0 %2084
    %vm2086 = vcmp.eq.s32.totalorder %v2085, %v944
    %vm2087 = vcmp.eq.s32.totalorder %v2085, %v945
    %v2088 = vsel %vm2086, %v2081, %v952
    %v2089 = vsel %vm2087, %v2082, %v953
    %v2090 = vpack.c.bf16 %v2081, %v2081
    %v2091 = vpack.c.bf16 %v2082, %v2082
    %s2092 = scalar_lea.vmem [#allocation5], 64
    %v2093 = vld [vmem:[%s2092] sm:$0xff]
    %v2094 = vld [vmem:[%s2092 + $0x8] sm:$0xff]
    %v2095 = vld [vmem:[%s2092 + $0x10] sm:$0xff]
    %v2096 = vld [vmem:[%s2092 + $0x18] sm:$0xff]
    %v2097 = vld [vmem:[%s2092 + $0x20] sm:$0xff]
    %v2098 = vld [vmem:[%s2092 + $0x28] sm:$0xff]
    %v2099 = vld [vmem:[%s2092 + $0x30] sm:$0xff]
    %v2100 = vld [vmem:[%s2092 + $0x38] sm:$0xff]
    %2101 = vmatpush.bf16.msra.mxu0 %v1532
    %2102 = vmatpush.bf16.msra.mxu0 %v1524
    %2103 = vmatpush.bf16.msra.mxu0 %v1516
    %2104 = vmatpush.bf16.msra.mxu0 %v1508
    %2105 = vmatpush.bf16.msra.mxu0 %v1500
    %2106 = vmatpush.bf16.msra.mxu0 %v1492
    %2107 = vmatpush.bf16.msra.mxu0 %v1484
    %2108 = vmatpush.bf16.msra.mxu0 %v1476
    %2109 = vmatmul.bf16.gmra.mxu0 %v2090
    %v2110 = vpop.f32.mrf.mxu0
    %v2111 = vadd.f32 %v2093, %v2110
    %v2112 = vpop.f32.mrf.mxu0
    %2113 = vdwg.mxu0
    %2114 = vmatpush.bf16.msra.mxu0 %v1596
    %2115 = vmatpush.bf16.msra.mxu0 %v1588
    %2116 = vmatpush.bf16.msra.mxu0 %v1580
    %2117 = vmatpush.bf16.msra.mxu0 %v1572
    %2118 = vmatpush.bf16.msra.mxu0 %v1564
    %2119 = vmatpush.bf16.msra.mxu0 %v1556
    %2120 = vmatpush.bf16.msra.mxu0 %v1548
    %2121 = vmatpush.bf16.msra.mxu0 %v1540
    %2122 = vmatmul.bf16.gmra.mxu0 %v2091
    %v2123 = vpop.f32.mrf.mxu0
    %v2124 = vadd.f32 %v2111, %v2123
    %v2125 = vpop.f32.mrf.mxu0
    %2126 = vdwg.mxu0
    %2127 = vmatpush.bf16.msra.mxu0 %v1533
    %2128 = vmatpush.bf16.msra.mxu0 %v1525
    %2129 = vmatpush.bf16.msra.mxu0 %v1517
    %2130 = vmatpush.bf16.msra.mxu0 %v1509
    %2131 = vmatpush.bf16.msra.mxu0 %v1501
    %2132 = vmatpush.bf16.msra.mxu0 %v1493
    %2133 = vmatpush.bf16.msra.mxu0 %v1485
    %2134 = vmatpush.bf16.msra.mxu0 %v1477
    %2135 = vmatmul.bf16.gmra.mxu0 %v2090
    %v2136 = vpop.f32.mrf.mxu0
    %v2137 = vadd.f32 %v2094, %v2136
    %v2138 = vpop.f32.mrf.mxu0
    %2139 = vdwg.mxu0
    %2140 = vmatpush.bf16.msra.mxu0 %v1597
    %2141 = vmatpush.bf16.msra.mxu0 %v1589
    %2142 = vmatpush.bf16.msra.mxu0 %v1581
    %2143 = vmatpush.bf16.msra.mxu0 %v1573
    %2144 = vmatpush.bf16.msra.mxu0 %v1565
    %2145 = vmatpush.bf16.msra.mxu0 %v1557
    %2146 = vmatpush.bf16.msra.mxu0 %v1549
    %2147 = vmatpush.bf16.msra.mxu0 %v1541
    %2148 = vmatmul.bf16.gmra.mxu0 %v2091
    %v2149 = vpop.f32.mrf.mxu0
    %v2150 = vadd.f32 %v2137, %v2149
    %v2151 = vpop.f32.mrf.mxu0
    %2152 = vdwg.mxu0
    %2153 = vmatpush.bf16.msra.mxu0 %v1534
    %2154 = vmatpush.bf16.msra.mxu0 %v1526
    %2155 = vmatpush.bf16.msra.mxu0 %v1518
    %2156 = vmatpush.bf16.msra.mxu0 %v1510
    %2157 = vmatpush.bf16.msra.mxu0 %v1502
    %2158 = vmatpush.bf16.msra.mxu0 %v1494
    %2159 = vmatpush.bf16.msra.mxu0 %v1486
    %2160 = vmatpush.bf16.msra.mxu0 %v1478
    %2161 = vmatmul.bf16.gmra.mxu0 %v2090
    %v2162 = vpop.f32.mrf.mxu0
    %v2163 = vadd.f32 %v2095, %v2162
    %v2164 = vpop.f32.mrf.mxu0
    %2165 = vdwg.mxu0
    %2166 = vmatpush.bf16.msra.mxu0 %v1598
    %2167 = vmatpush.bf16.msra.mxu0 %v1590
    %2168 = vmatpush.bf16.msra.mxu0 %v1582
    %2169 = vmatpush.bf16.msra.mxu0 %v1574
    %2170 = vmatpush.bf16.msra.mxu0 %v1566
    %2171 = vmatpush.bf16.msra.mxu0 %v1558
    %2172 = vmatpush.bf16.msra.mxu0 %v1550
    %2173 = vmatpush.bf16.msra.mxu0 %v1542
    %2174 = vmatmul.bf16.gmra.mxu0 %v2091
    %v2175 = vpop.f32.mrf.mxu0
    %v2176 = vadd.f32 %v2163, %v2175
    %v2177 = vpop.f32.mrf.mxu0
    %2178 = vdwg.mxu0
    %2179 = vmatpush.bf16.msra.mxu0 %v1535
    %2180 = vmatpush.bf16.msra.mxu0 %v1527
    %2181 = vmatpush.bf16.msra.mxu0 %v1519
    %2182 = vmatpush.bf16.msra.mxu0 %v1511
    %2183 = vmatpush.bf16.msra.mxu0 %v1503
    %2184 = vmatpush.bf16.msra.mxu0 %v1495
    %2185 = vmatpush.bf16.msra.mxu0 %v1487
    %2186 = vmatpush.bf16.msra.mxu0 %v1479
    %2187 = vmatmul.bf16.gmra.mxu0 %v2090
    %v2188 = vpop.f32.mrf.mxu0
    %v2189 = vadd.f32 %v2096, %v2188
    %v2190 = vpop.f32.mrf.mxu0
    %2191 = vdwg.mxu0
    %2192 = vmatpush.bf16.msra.mxu0 %v1599
    %2193 = vmatpush.bf16.msra.mxu0 %v1591
    %2194 = vmatpush.bf16.msra.mxu0 %v1583
    %2195 = vmatpush.bf16.msra.mxu0 %v1575
    %2196 = vmatpush.bf16.msra.mxu0 %v1567
    %2197 = vmatpush.bf16.msra.mxu0 %v1559
    %2198 = vmatpush.bf16.msra.mxu0 %v1551
    %2199 = vmatpush.bf16.msra.mxu0 %v1543
    %2200 = vmatmul.bf16.gmra.mxu0 %v2091
    %v2201 = vpop.f32.mrf.mxu0
    %v2202 = vadd.f32 %v2189, %v2201
    %v2203 = vpop.f32.mrf.mxu0
    %2204 = vdwg.mxu0
    %2205 = vmatpush.bf16.msra.mxu0 %v1536
    %2206 = vmatpush.bf16.msra.mxu0 %v1528
    %2207 = vmatpush.bf16.msra.mxu0 %v1520
    %2208 = vmatpush.bf16.msra.mxu0 %v1512
    %2209 = vmatpush.bf16.msra.mxu0 %v1504
    %2210 = vmatpush.bf16.msra.mxu0 %v1496
    %2211 = vmatpush.bf16.msra.mxu0 %v1488
    %2212 = vmatpush.bf16.msra.mxu0 %v1480
    %2213 = vmatmul.bf16.gmra.mxu0 %v2090
    %v2214 = vpop.f32.mrf.mxu0
    %v2215 = vadd.f32 %v2097, %v2214
    %v2216 = vpop.f32.mrf.mxu0
    %2217 = vdwg.mxu0
    %2218 = vmatpush.bf16.msra.mxu0 %v1600
    %2219 = vmatpush.bf16.msra.mxu0 %v1592
    %2220 = vmatpush.bf16.msra.mxu0 %v1584
    %2221 = vmatpush.bf16.msra.mxu0 %v1576
    %2222 = vmatpush.bf16.msra.mxu0 %v1568
    %2223 = vmatpush.bf16.msra.mxu0 %v1560
    %2224 = vmatpush.bf16.msra.mxu0 %v1552
    %2225 = vmatpush.bf16.msra.mxu0 %v1544
    %2226 = vmatmul.bf16.gmra.mxu0 %v2091
    %v2227 = vpop.f32.mrf.mxu0
    %v2228 = vadd.f32 %v2215, %v2227
    %v2229 = vpop.f32.mrf.mxu0
    %2230 = vdwg.mxu0
    %2231 = vmatpush.bf16.msra.mxu0 %v1537
    %2232 = vmatpush.bf16.msra.mxu0 %v1529
    %2233 = vmatpush.bf16.msra.mxu0 %v1521
    %2234 = vmatpush.bf16.msra.mxu0 %v1513
    %2235 = vmatpush.bf16.msra.mxu0 %v1505
    %2236 = vmatpush.bf16.msra.mxu0 %v1497
    %2237 = vmatpush.bf16.msra.mxu0 %v1489
    %2238 = vmatpush.bf16.msra.mxu0 %v1481
    %2239 = vmatmul.bf16.gmra.mxu0 %v2090
    %v2240 = vpop.f32.mrf.mxu0
    %v2241 = vadd.f32 %v2098, %v2240
    %v2242 = vpop.f32.mrf.mxu0
    %2243 = vdwg.mxu0
    %2244 = vmatpush.bf16.msra.mxu0 %v1601
    %2245 = vmatpush.bf16.msra.mxu0 %v1593
    %2246 = vmatpush.bf16.msra.mxu0 %v1585
    %2247 = vmatpush.bf16.msra.mxu0 %v1577
    %2248 = vmatpush.bf16.msra.mxu0 %v1569
    %2249 = vmatpush.bf16.msra.mxu0 %v1561
    %2250 = vmatpush.bf16.msra.mxu0 %v1553
    %2251 = vmatpush.bf16.msra.mxu0 %v1545
    %2252 = vmatmul.bf16.gmra.mxu0 %v2091
    %v2253 = vpop.f32.mrf.mxu0
    %v2254 = vadd.f32 %v2241, %v2253
    %v2255 = vpop.f32.mrf.mxu0
    %2256 = vdwg.mxu0
    %2257 = vmatpush.bf16.msra.mxu0 %v1538
    %2258 = vmatpush.bf16.msra.mxu0 %v1530
    %2259 = vmatpush.bf16.msra.mxu0 %v1522
    %2260 = vmatpush.bf16.msra.mxu0 %v1514
    %2261 = vmatpush.bf16.msra.mxu0 %v1506
    %2262 = vmatpush.bf16.msra.mxu0 %v1498
    %2263 = vmatpush.bf16.msra.mxu0 %v1490
    %2264 = vmatpush.bf16.msra.mxu0 %v1482
    %2265 = vmatmul.bf16.gmra.mxu0 %v2090
    %v2266 = vpop.f32.mrf.mxu0
    %v2267 = vadd.f32 %v2099, %v2266
    %v2268 = vpop.f32.mrf.mxu0
    %2269 = vdwg.mxu0
    %2270 = vmatpush.bf16.msra.mxu0 %v1602
    %2271 = vmatpush.bf16.msra.mxu0 %v1594
    %2272 = vmatpush.bf16.msra.mxu0 %v1586
    %2273 = vmatpush.bf16.msra.mxu0 %v1578
    %2274 = vmatpush.bf16.msra.mxu0 %v1570
    %2275 = vmatpush.bf16.msra.mxu0 %v1562
    %2276 = vmatpush.bf16.msra.mxu0 %v1554
    %2277 = vmatpush.bf16.msra.mxu0 %v1546
    %2278 = vmatmul.bf16.gmra.mxu0 %v2091
    %v2279 = vpop.f32.mrf.mxu0
    %v2280 = vadd.f32 %v2267, %v2279
    %v2281 = vpop.f32.mrf.mxu0
    %2282 = vdwg.mxu0
    %2283 = vmatpush.bf16.msra.mxu0 %v1539
    %2284 = vmatpush.bf16.msra.mxu0 %v1531
    %2285 = vmatpush.bf16.msra.mxu0 %v1523
    %2286 = vmatpush.bf16.msra.mxu0 %v1515
    %2287 = vmatpush.bf16.msra.mxu0 %v1507
    %2288 = vmatpush.bf16.msra.mxu0 %v1499
    %2289 = vmatpush.bf16.msra.mxu0 %v1491
    %2290 = vmatpush.bf16.msra.mxu0 %v1483
    %2291 = vmatmul.bf16.gmra.mxu0 %v2090
    %v2292 = vpop.f32.mrf.mxu0
    %v2293 = vadd.f32 %v2100, %v2292
    %v2294 = vpop.f32.mrf.mxu0
    %2295 = vdwg.mxu0
    %2296 = vmatpush.bf16.msra.mxu0 %v1603
    %2297 = vmatpush.bf16.msra.mxu0 %v1595
    %2298 = vmatpush.bf16.msra.mxu0 %v1587
    %2299 = vmatpush.bf16.msra.mxu0 %v1579
    %2300 = vmatpush.bf16.msra.mxu0 %v1571
    %2301 = vmatpush.bf16.msra.mxu0 %v1563
    %2302 = vmatpush.bf16.msra.mxu0 %v1555
    %2303 = vmatpush.bf16.msra.mxu0 %v1547
    %2304 = vmatmul.bf16.gmra.mxu0 %v2091
    %v2305 = vpop.f32.mrf.mxu0
    %v2306 = vadd.f32 %v2293, %v2305
    %v2307 = vpop.f32.mrf.mxu0
    %2308 = vdwg.mxu0
    %s2309 = scalar_lea.vmem [#allocation6], 384
    %v2310 = vld [vmem:[%s2309] sm:$0xff]
    %v2311 = vld [vmem:[%s2309 + $0x8] sm:$0xff]
    %v2312 = vld [vmem:[%s2309 + $0x10] sm:$0xff]
    %v2313 = vld [vmem:[%s2309 + $0x18] sm:$0xff]
    %v2314 = vld [vmem:[%s2309 + $0x20] sm:$0xff]
    %v2315 = vld [vmem:[%s2309 + $0x28] sm:$0xff]
    %v2316 = vld [vmem:[%s2309 + $0x30] sm:$0xff]
    %v2317 = vld [vmem:[%s2309 + $0x38] sm:$0xff]
    %v2318 = vadd.f32 %v2124, %v2310
    %v2319 = vadd.f32 %v2150, %v2311
    %v2320 = vadd.f32 %v2176, %v2312
    %v2321 = vadd.f32 %v2202, %v2313
    %v2322 = vadd.f32 %v2228, %v2314
    %v2323 = vadd.f32 %v2254, %v2315
    %v2324 = vadd.f32 %v2280, %v2316
    %v2325 = vadd.f32 %v2306, %v2317
    %v2326 = vxor.u32 %v2318, 2147483648
    %v2327 = vxor.u32 %v2319, 2147483648
    %v2328 = vmul.f32 %v2326, 1.442695
    %v2329 = vpow.pop %v2328
    %v2330 = vmul.f32 %v2327, 1.442695
    %v2331 = vpow.pop %v2330
    %v2332 = vadd.f32 %v2329, 1.0
    %v2333 = vadd.f32 %v2331, 1.0
    %v2334 = vrcp.pop %v2332
    %v2335 = vmul.f32 %v2332, %v2334
    %v2336 = vsub.f32 1.0, %v2335
    %v2337 = vmul.f32 %v2334, %v2336
    %v2338 = vadd.f32 %v2334, %v2337
    %vm2339 = vweird.f32 %v2332
    %vm2340 = vweird.f32 %v2334
    %vm2341 = vmor %vm2339, %vm2340
    %v2342 = vsel %vm2341, %v2334, %v2338
    %v2343 = vand.u32 2147483647, %v2332
    %vm2344 = vcmp.eq.f32.partialorder %v2343, 8.507059e+37
    %v2345 = vand.u32 %v2332, 2147483648
    %v2346 = vor.u32 1.1754944e-38, %v2345
    %v2347 = vsel %vm2344, %v2346, %v2342
    %v2348 = vmul.f32 1.0, %v2347
    %v2349 = vrcp.pop %v2333
    %v2350 = vmul.f32 %v2333, %v2349
    %v2351 = vsub.f32 1.0, %v2350
    %v2352 = vmul.f32 %v2349, %v2351
    %v2353 = vadd.f32 %v2349, %v2352
    %vm2354 = vweird.f32 %v2333
    %vm2355 = vweird.f32 %v2349
    %vm2356 = vmor %vm2354, %vm2355
    %v2357 = vsel %vm2356, %v2349, %v2353
    %v2358 = vand.u32 2147483647, %v2333
    %vm2359 = vcmp.eq.f32.partialorder %v2358, 8.507059e+37
    %v2360 = vand.u32 %v2333, 2147483648
    %v2361 = vor.u32 1.1754944e-38, %v2360
    %v2362 = vsel %vm2359, %v2361, %v2357
    %v2363 = vmul.f32 1.0, %v2362
    %v2364 = vxor.u32 %v2320, 2147483648
    %v2365 = vxor.u32 %v2321, 2147483648
    %v2366 = vmul.f32 %v2364, 1.442695
    %v2367 = vpow.pop %v2366
    %v2368 = vmul.f32 %v2365, 1.442695
    %v2369 = vpow.pop %v2368
    %v2370 = vadd.f32 %v2367, 1.0
    %v2371 = vadd.f32 %v2369, 1.0
    %v2372 = vrcp.pop %v2370
    %v2373 = vmul.f32 %v2370, %v2372
    %v2374 = vsub.f32 1.0, %v2373
    %v2375 = vmul.f32 %v2372, %v2374
    %v2376 = vadd.f32 %v2372, %v2375
    %vm2377 = vweird.f32 %v2370
    %vm2378 = vweird.f32 %v2372
    %vm2379 = vmor %vm2377, %vm2378
    %v2380 = vsel %vm2379, %v2372, %v2376
    %v2381 = vand.u32 2147483647, %v2370
    %vm2382 = vcmp.eq.f32.partialorder %v2381, 8.507059e+37
    %v2383 = vand.u32 %v2370, 2147483648
    %v2384 = vor.u32 1.1754944e-38, %v2383
    %v2385 = vsel %vm2382, %v2384, %v2380
    %v2386 = vmul.f32 1.0, %v2385
    %v2387 = vrcp.pop %v2371
    %v2388 = vmul.f32 %v2371, %v2387
    %v2389 = vsub.f32 1.0, %v2388
    %v2390 = vmul.f32 %v2387, %v2389
    %v2391 = vadd.f32 %v2387, %v2390
    %vm2392 = vweird.f32 %v2371
    %vm2393 = vweird.f32 %v2387
    %vm2394 = vmor %vm2392, %vm2393
    %v2395 = vsel %vm2394, %v2387, %v2391
    %v2396 = vand.u32 2147483647, %v2371
    %vm2397 = vcmp.eq.f32.partialorder %v2396, 8.507059e+37
    %v2398 = vand.u32 %v2371, 2147483648
    %v2399 = vor.u32 1.1754944e-38, %v2398
    %v2400 = vsel %vm2397, %v2399, %v2395
    %v2401 = vmul.f32 1.0, %v2400
    %v2402 = vtanh.pop %v2322
    %v2403 = vtanh.pop %v2323
    %v2404 = vxor.u32 %v2324, 2147483648
    %v2405 = vxor.u32 %v2325, 2147483648
    %v2406 = vmul.f32 %v2404, 1.442695
    %v2407 = vpow.pop %v2406
    %v2408 = vmul.f32 %v2405, 1.442695
    %v2409 = vpow.pop %v2408
    %v2410 = vadd.f32 %v2407, 1.0
    %v2411 = vadd.f32 %v2409, 1.0
    %v2412 = vrcp.pop %v2410
    %v2413 = vmul.f32 %v2410, %v2412
    %v2414 = vsub.f32 1.0, %v2413
    %v2415 = vmul.f32 %v2412, %v2414
    %v2416 = vadd.f32 %v2412, %v2415
    %vm2417 = vweird.f32 %v2410
    %vm2418 = vweird.f32 %v2412
    %vm2419 = vmor %vm2417, %vm2418
    %v2420 = vsel %vm2419, %v2412, %v2416
    %v2421 = vand.u32 2147483647, %v2410
    %vm2422 = vcmp.eq.f32.partialorder %v2421, 8.507059e+37
    %v2423 = vand.u32 %v2410, 2147483648
    %v2424 = vor.u32 1.1754944e-38, %v2423
    %v2425 = vsel %vm2422, %v2424, %v2420
    %v2426 = vmul.f32 1.0, %v2425
    %v2427 = vrcp.pop %v2411
    %v2428 = vmul.f32 %v2411, %v2427
    %v2429 = vsub.f32 1.0, %v2428
    %v2430 = vmul.f32 %v2427, %v2429
    %v2431 = vadd.f32 %v2427, %v2430
    %vm2432 = vweird.f32 %v2411
    %vm2433 = vweird.f32 %v2427
    %vm2434 = vmor %vm2432, %vm2433
    %v2435 = vsel %vm2434, %v2427, %v2431
    %v2436 = vand.u32 2147483647, %v2411
    %vm2437 = vcmp.eq.f32.partialorder %v2436, 8.507059e+37
    %v2438 = vand.u32 %v2411, 2147483648
    %v2439 = vor.u32 1.1754944e-38, %v2438
    %v2440 = vsel %vm2437, %v2439, %v2435
    %v2441 = vmul.f32 1.0, %v2440
    %v2442 = vmul.f32 %v2386, %v2077
    %v2443 = vmul.f32 %v2401, %v2078
    %v2444 = vmul.f32 %v2348, %v2402
    %v2445 = vmul.f32 %v2363, %v2403
    %v2446 = vadd.f32 %v2442, %v2444
    %v2447 = vadd.f32 %v2443, %v2445
    %v2448 = vtanh.pop %v2446
    %v2449 = vtanh.pop %v2447
    %v2450 = vmul.f32 %v2426, %v2448
    %v2451 = vmul.f32 %v2441, %v2449
    %v2452 = vadd.s32 %v944, %v946
    %v2453 = vadd.s32 %v945, %v947
    %vm2454 = vcmp.eq.s32.totalorder %v2085, %v2452
    %vm2455 = vcmp.eq.s32.totalorder %v2085, %v2453
    %v2456 = vsel %vm2454, %v2450, %v2088
    %v2457 = vsel %vm2455, %v2451, %v2089
    %v2458 = vpack.c.bf16 %v2450, %v2450
    %v2459 = vpack.c.bf16 %v2451, %v2451
    %s2460 = scalar_lea.vmem [#allocation5], 128
    %v2461 = vld [vmem:[%s2460] sm:$0xff]
    %v2462 = vld [vmem:[%s2460 + $0x8] sm:$0xff]
    %v2463 = vld [vmem:[%s2460 + $0x10] sm:$0xff]
    %v2464 = vld [vmem:[%s2460 + $0x18] sm:$0xff]
    %v2465 = vld [vmem:[%s2460 + $0x20] sm:$0xff]
    %v2466 = vld [vmem:[%s2460 + $0x28] sm:$0xff]
    %v2467 = vld [vmem:[%s2460 + $0x30] sm:$0xff]
    %v2468 = vld [vmem:[%s2460 + $0x38] sm:$0xff]
    %2469 = vmatpush.bf16.msra.mxu0 %v1532
    %2470 = vmatpush.bf16.msra.mxu0 %v1524
    %2471 = vmatpush.bf16.msra.mxu0 %v1516
    %2472 = vmatpush.bf16.msra.mxu0 %v1508
    %2473 = vmatpush.bf16.msra.mxu0 %v1500
    %2474 = vmatpush.bf16.msra.mxu0 %v1492
    %2475 = vmatpush.bf16.msra.mxu0 %v1484
    %2476 = vmatpush.bf16.msra.mxu0 %v1476
    %2477 = vmatmul.bf16.gmra.mxu0 %v2458
    %v2478 = vpop.f32.mrf.mxu0
    %v2479 = vadd.f32 %v2461, %v2478
    %v2480 = vpop.f32.mrf.mxu0
    %2481 = vdwg.mxu0
    %2482 = vmatpush.bf16.msra.mxu0 %v1596
    %2483 = vmatpush.bf16.msra.mxu0 %v1588
    %2484 = vmatpush.bf16.msra.mxu0 %v1580
    %2485 = vmatpush.bf16.msra.mxu0 %v1572
    %2486 = vmatpush.bf16.msra.mxu0 %v1564
    %2487 = vmatpush.bf16.msra.mxu0 %v1556
    %2488 = vmatpush.bf16.msra.mxu0 %v1548
    %2489 = vmatpush.bf16.msra.mxu0 %v1540
    %2490 = vmatmul.bf16.gmra.mxu0 %v2459
    %v2491 = vpop.f32.mrf.mxu0
    %v2492 = vadd.f32 %v2479, %v2491
    %v2493 = vpop.f32.mrf.mxu0
    %2494 = vdwg.mxu0
    %2495 = vmatpush.bf16.msra.mxu0 %v1533
    %2496 = vmatpush.bf16.msra.mxu0 %v1525
    %2497 = vmatpush.bf16.msra.mxu0 %v1517
    %2498 = vmatpush.bf16.msra.mxu0 %v1509
    %2499 = vmatpush.bf16.msra.mxu0 %v1501
    %2500 = vmatpush.bf16.msra.mxu0 %v1493
    %2501 = vmatpush.bf16.msra.mxu0 %v1485
    %2502 = vmatpush.bf16.msra.mxu0 %v1477
    %2503 = vmatmul.bf16.gmra.mxu0 %v2458
    %v2504 = vpop.f32.mrf.mxu0
    %v2505 = vadd.f32 %v2462, %v2504
    %v2506 = vpop.f32.mrf.mxu0
    %2507 = vdwg.mxu0
    %2508 = vmatpush.bf16.msra.mxu0 %v1597
    %2509 = vmatpush.bf16.msra.mxu0 %v1589
    %2510 = vmatpush.bf16.msra.mxu0 %v1581
    %2511 = vmatpush.bf16.msra.mxu0 %v1573
    %2512 = vmatpush.bf16.msra.mxu0 %v1565
    %2513 = vmatpush.bf16.msra.mxu0 %v1557
    %2514 = vmatpush.bf16.msra.mxu0 %v1549
    %2515 = vmatpush.bf16.msra.mxu0 %v1541
    %2516 = vmatmul.bf16.gmra.mxu0 %v2459
    %v2517 = vpop.f32.mrf.mxu0
    %v2518 = vadd.f32 %v2505, %v2517
    %v2519 = vpop.f32.mrf.mxu0
    %2520 = vdwg.mxu0
    %2521 = vmatpush.bf16.msra.mxu0 %v1534
    %2522 = vmatpush.bf16.msra.mxu0 %v1526
    %2523 = vmatpush.bf16.msra.mxu0 %v1518
    %2524 = vmatpush.bf16.msra.mxu0 %v1510
    %2525 = vmatpush.bf16.msra.mxu0 %v1502
    %2526 = vmatpush.bf16.msra.mxu0 %v1494
    %2527 = vmatpush.bf16.msra.mxu0 %v1486
    %2528 = vmatpush.bf16.msra.mxu0 %v1478
    %2529 = vmatmul.bf16.gmra.mxu0 %v2458
    %v2530 = vpop.f32.mrf.mxu0
    %v2531 = vadd.f32 %v2463, %v2530
    %v2532 = vpop.f32.mrf.mxu0
    %2533 = vdwg.mxu0
    %2534 = vmatpush.bf16.msra.mxu0 %v1598
    %2535 = vmatpush.bf16.msra.mxu0 %v1590
    %2536 = vmatpush.bf16.msra.mxu0 %v1582
    %2537 = vmatpush.bf16.msra.mxu0 %v1574
    %2538 = vmatpush.bf16.msra.mxu0 %v1566
    %2539 = vmatpush.bf16.msra.mxu0 %v1558
    %2540 = vmatpush.bf16.msra.mxu0 %v1550
    %2541 = vmatpush.bf16.msra.mxu0 %v1542
    %2542 = vmatmul.bf16.gmra.mxu0 %v2459
    %v2543 = vpop.f32.mrf.mxu0
    %v2544 = vadd.f32 %v2531, %v2543
    %v2545 = vpop.f32.mrf.mxu0
    %2546 = vdwg.mxu0
    %2547 = vmatpush.bf16.msra.mxu0 %v1535
    %2548 = vmatpush.bf16.msra.mxu0 %v1527
    %2549 = vmatpush.bf16.msra.mxu0 %v1519
    %2550 = vmatpush.bf16.msra.mxu0 %v1511
    %2551 = vmatpush.bf16.msra.mxu0 %v1503
    %2552 = vmatpush.bf16.msra.mxu0 %v1495
    %2553 = vmatpush.bf16.msra.mxu0 %v1487
    %2554 = vmatpush.bf16.msra.mxu0 %v1479
    %2555 = vmatmul.bf16.gmra.mxu0 %v2458
    %v2556 = vpop.f32.mrf.mxu0
    %v2557 = vadd.f32 %v2464, %v2556
    %v2558 = vpop.f32.mrf.mxu0
    %2559 = vdwg.mxu0
    %2560 = vmatpush.bf16.msra.mxu0 %v1599
    %2561 = vmatpush.bf16.msra.mxu0 %v1591
    %2562 = vmatpush.bf16.msra.mxu0 %v1583
    %2563 = vmatpush.bf16.msra.mxu0 %v1575
    %2564 = vmatpush.bf16.msra.mxu0 %v1567
    %2565 = vmatpush.bf16.msra.mxu0 %v1559
    %2566 = vmatpush.bf16.msra.mxu0 %v1551
    %2567 = vmatpush.bf16.msra.mxu0 %v1543
    %2568 = vmatmul.bf16.gmra.mxu0 %v2459
    %v2569 = vpop.f32.mrf.mxu0
    %v2570 = vadd.f32 %v2557, %v2569
    %v2571 = vpop.f32.mrf.mxu0
    %2572 = vdwg.mxu0
    %2573 = vmatpush.bf16.msra.mxu0 %v1536
    %2574 = vmatpush.bf16.msra.mxu0 %v1528
    %2575 = vmatpush.bf16.msra.mxu0 %v1520
    %2576 = vmatpush.bf16.msra.mxu0 %v1512
    %2577 = vmatpush.bf16.msra.mxu0 %v1504
    %2578 = vmatpush.bf16.msra.mxu0 %v1496
    %2579 = vmatpush.bf16.msra.mxu0 %v1488
    %2580 = vmatpush.bf16.msra.mxu0 %v1480
    %2581 = vmatmul.bf16.gmra.mxu0 %v2458
    %v2582 = vpop.f32.mrf.mxu0
    %v2583 = vadd.f32 %v2465, %v2582
    %v2584 = vpop.f32.mrf.mxu0
    %2585 = vdwg.mxu0
    %2586 = vmatpush.bf16.msra.mxu0 %v1600
    %2587 = vmatpush.bf16.msra.mxu0 %v1592
    %2588 = vmatpush.bf16.msra.mxu0 %v1584
    %2589 = vmatpush.bf16.msra.mxu0 %v1576
    %2590 = vmatpush.bf16.msra.mxu0 %v1568
    %2591 = vmatpush.bf16.msra.mxu0 %v1560
    %2592 = vmatpush.bf16.msra.mxu0 %v1552
    %2593 = vmatpush.bf16.msra.mxu0 %v1544
    %2594 = vmatmul.bf16.gmra.mxu0 %v2459
    %v2595 = vpop.f32.mrf.mxu0
    %v2596 = vadd.f32 %v2583, %v2595
    %v2597 = vpop.f32.mrf.mxu0
    %2598 = vdwg.mxu0
    %2599 = vmatpush.bf16.msra.mxu0 %v1537
    %2600 = vmatpush.bf16.msra.mxu0 %v1529
    %2601 = vmatpush.bf16.msra.mxu0 %v1521
    %2602 = vmatpush.bf16.msra.mxu0 %v1513
    %2603 = vmatpush.bf16.msra.mxu0 %v1505
    %2604 = vmatpush.bf16.msra.mxu0 %v1497
    %2605 = vmatpush.bf16.msra.mxu0 %v1489
    %2606 = vmatpush.bf16.msra.mxu0 %v1481
    %2607 = vmatmul.bf16.gmra.mxu0 %v2458
    %v2608 = vpop.f32.mrf.mxu0
    %v2609 = vadd.f32 %v2466, %v2608
    %v2610 = vpop.f32.mrf.mxu0
    %2611 = vdwg.mxu0
    %2612 = vmatpush.bf16.msra.mxu0 %v1601
    %2613 = vmatpush.bf16.msra.mxu0 %v1593
    %2614 = vmatpush.bf16.msra.mxu0 %v1585
    %2615 = vmatpush.bf16.msra.mxu0 %v1577
    %2616 = vmatpush.bf16.msra.mxu0 %v1569
    %2617 = vmatpush.bf16.msra.mxu0 %v1561
    %2618 = vmatpush.bf16.msra.mxu0 %v1553
    %2619 = vmatpush.bf16.msra.mxu0 %v1545
    %2620 = vmatmul.bf16.gmra.mxu0 %v2459
    %v2621 = vpop.f32.mrf.mxu0
    %v2622 = vadd.f32 %v2609, %v2621
    %v2623 = vpop.f32.mrf.mxu0
    %2624 = vdwg.mxu0
    %2625 = vmatpush.bf16.msra.mxu0 %v1538
    %2626 = vmatpush.bf16.msra.mxu0 %v1530
    %2627 = vmatpush.bf16.msra.mxu0 %v1522
    %2628 = vmatpush.bf16.msra.mxu0 %v1514
    %2629 = vmatpush.bf16.msra.mxu0 %v1506
    %2630 = vmatpush.bf16.msra.mxu0 %v1498
    %2631 = vmatpush.bf16.msra.mxu0 %v1490
    %2632 = vmatpush.bf16.msra.mxu0 %v1482
    %2633 = vmatmul.bf16.gmra.mxu0 %v2458
    %v2634 = vpop.f32.mrf.mxu0
    %v2635 = vadd.f32 %v2467, %v2634
    %v2636 = vpop.f32.mrf.mxu0
    %2637 = vdwg.mxu0
    %2638 = vmatpush.bf16.msra.mxu0 %v1602
    %2639 = vmatpush.bf16.msra.mxu0 %v1594
    %2640 = vmatpush.bf16.msra.mxu0 %v1586
    %2641 = vmatpush.bf16.msra.mxu0 %v1578
    %2642 = vmatpush.bf16.msra.mxu0 %v1570
    %2643 = vmatpush.bf16.msra.mxu0 %v1562
    %2644 = vmatpush.bf16.msra.mxu0 %v1554
    %2645 = vmatpush.bf16.msra.mxu0 %v1546
    %2646 = vmatmul.bf16.gmra.mxu0 %v2459
    %v2647 = vpop.f32.mrf.mxu0
    %v2648 = vadd.f32 %v2635, %v2647
    %v2649 = vpop.f32.mrf.mxu0
    %2650 = vdwg.mxu0
    %2651 = vmatpush.bf16.msra.mxu0 %v1539
    %2652 = vmatpush.bf16.msra.mxu0 %v1531
    %2653 = vmatpush.bf16.msra.mxu0 %v1523
    %2654 = vmatpush.bf16.msra.mxu0 %v1515
    %2655 = vmatpush.bf16.msra.mxu0 %v1507
    %2656 = vmatpush.bf16.msra.mxu0 %v1499
    %2657 = vmatpush.bf16.msra.mxu0 %v1491
    %2658 = vmatpush.bf16.msra.mxu0 %v1483
    %2659 = vmatmul.bf16.gmra.mxu0 %v2458
    %v2660 = vpop.f32.mrf.mxu0
    %v2661 = vadd.f32 %v2468, %v2660
    %v2662 = vpop.f32.mrf.mxu0
    %2663 = vdwg.mxu0
    %2664 = vmatpush.bf16.msra.mxu0 %v1603
    %2665 = vmatpush.bf16.msra.mxu0 %v1595
    %2666 = vmatpush.bf16.msra.mxu0 %v1587
    %2667 = vmatpush.bf16.msra.mxu0 %v1579
    %2668 = vmatpush.bf16.msra.mxu0 %v1571
    %2669 = vmatpush.bf16.msra.mxu0 %v1563
    %2670 = vmatpush.bf16.msra.mxu0 %v1555
    %2671 = vmatpush.bf16.msra.mxu0 %v1547
    %2672 = vmatmul.bf16.gmra.mxu0 %v2459
    %v2673 = vpop.f32.mrf.mxu0
    %v2674 = vadd.f32 %v2661, %v2673
    %v2675 = vpop.f32.mrf.mxu0
    %2676 = vdwg.mxu0
    %s2677 = scalar_lea.vmem [#allocation6], 320
    %v2678 = vld [vmem:[%s2677] sm:$0xff]
    %v2679 = vld [vmem:[%s2677 + $0x8] sm:$0xff]
    %v2680 = vld [vmem:[%s2677 + $0x10] sm:$0xff]
    %v2681 = vld [vmem:[%s2677 + $0x18] sm:$0xff]
    %v2682 = vld [vmem:[%s2677 + $0x20] sm:$0xff]
    %v2683 = vld [vmem:[%s2677 + $0x28] sm:$0xff]
    %v2684 = vld [vmem:[%s2677 + $0x30] sm:$0xff]
    %v2685 = vld [vmem:[%s2677 + $0x38] sm:$0xff]
    %v2686 = vadd.f32 %v2492, %v2678
    %v2687 = vadd.f32 %v2518, %v2679
    %v2688 = vadd.f32 %v2544, %v2680
    %v2689 = vadd.f32 %v2570, %v2681
    %v2690 = vadd.f32 %v2596, %v2682
    %v2691 = vadd.f32 %v2622, %v2683
    %v2692 = vadd.f32 %v2648, %v2684
    %v2693 = vadd.f32 %v2674, %v2685
    %v2694 = vxor.u32 %v2686, 2147483648
    %v2695 = vxor.u32 %v2687, 2147483648
    %v2696 = vmul.f32 %v2694, 1.442695
    %v2697 = vpow.pop %v2696
    %v2698 = vmul.f32 %v2695, 1.442695
    %v2699 = vpow.pop %v2698
    %v2700 = vadd.f32 %v2697, 1.0
    %v2701 = vadd.f32 %v2699, 1.0
    %v2702 = vrcp.pop %v2700
    %v2703 = vmul.f32 %v2700, %v2702
    %v2704 = vsub.f32 1.0, %v2703
    %v2705 = vmul.f32 %v2702, %v2704
    %v2706 = vadd.f32 %v2702, %v2705
    %vm2707 = vweird.f32 %v2700
    %vm2708 = vweird.f32 %v2702
    %vm2709 = vmor %vm2707, %vm2708
    %v2710 = vsel %vm2709, %v2702, %v2706
    %v2711 = vand.u32 2147483647, %v2700
    %vm2712 = vcmp.eq.f32.partialorder %v2711, 8.507059e+37
    %v2713 = vand.u32 %v2700, 2147483648
    %v2714 = vor.u32 1.1754944e-38, %v2713
    %v2715 = vsel %vm2712, %v2714, %v2710
    %v2716 = vmul.f32 1.0, %v2715
    %v2717 = vrcp.pop %v2701
    %v2718 = vmul.f32 %v2701, %v2717
    %v2719 = vsub.f32 1.0, %v2718
    %v2720 = vmul.f32 %v2717, %v2719
    %v2721 = vadd.f32 %v2717, %v2720
    %vm2722 = vweird.f32 %v2701
    %vm2723 = vweird.f32 %v2717
    %vm2724 = vmor %vm2722, %vm2723
    %v2725 = vsel %vm2724, %v2717, %v2721
    %v2726 = vand.u32 2147483647, %v2701
    %vm2727 = vcmp.eq.f32.partialorder %v2726, 8.507059e+37
    %v2728 = vand.u32 %v2701, 2147483648
    %v2729 = vor.u32 1.1754944e-38, %v2728
    %v2730 = vsel %vm2727, %v2729, %v2725
    %v2731 = vmul.f32 1.0, %v2730
    %v2732 = vxor.u32 %v2688, 2147483648
    %v2733 = vxor.u32 %v2689, 2147483648
    %v2734 = vmul.f32 %v2732, 1.442695
    %v2735 = vpow.pop %v2734
    %v2736 = vmul.f32 %v2733, 1.442695
    %v2737 = vpow.pop %v2736
    %v2738 = vadd.f32 %v2735, 1.0
    %v2739 = vadd.f32 %v2737, 1.0
    %v2740 = vrcp.pop %v2738
    %v2741 = vmul.f32 %v2738, %v2740
    %v2742 = vsub.f32 1.0, %v2741
    %v2743 = vmul.f32 %v2740, %v2742
    %v2744 = vadd.f32 %v2740, %v2743
    %vm2745 = vweird.f32 %v2738
    %vm2746 = vweird.f32 %v2740
    %vm2747 = vmor %vm2745, %vm2746
    %v2748 = vsel %vm2747, %v2740, %v2744
    %v2749 = vand.u32 2147483647, %v2738
    %vm2750 = vcmp.eq.f32.partialorder %v2749, 8.507059e+37
    %v2751 = vand.u32 %v2738, 2147483648
    %v2752 = vor.u32 1.1754944e-38, %v2751
    %v2753 = vsel %vm2750, %v2752, %v2748
    %v2754 = vmul.f32 1.0, %v2753
    %v2755 = vrcp.pop %v2739
    %v2756 = vmul.f32 %v2739, %v2755
    %v2757 = vsub.f32 1.0, %v2756
    %v2758 = vmul.f32 %v2755, %v2757
    %v2759 = vadd.f32 %v2755, %v2758
    %vm2760 = vweird.f32 %v2739
    %vm2761 = vweird.f32 %v2755
    %vm2762 = vmor %vm2760, %vm2761
    %v2763 = vsel %vm2762, %v2755, %v2759
    %v2764 = vand.u32 2147483647, %v2739
    %vm2765 = vcmp.eq.f32.partialorder %v2764, 8.507059e+37
    %v2766 = vand.u32 %v2739, 2147483648
    %v2767 = vor.u32 1.1754944e-38, %v2766
    %v2768 = vsel %vm2765, %v2767, %v2763
    %v2769 = vmul.f32 1.0, %v2768
    %v2770 = vtanh.pop %v2690
    %v2771 = vtanh.pop %v2691
    %v2772 = vxor.u32 %v2692, 2147483648
    %v2773 = vxor.u32 %v2693, 2147483648
    %v2774 = vmul.f32 %v2772, 1.442695
    %v2775 = vpow.pop %v2774
    %v2776 = vmul.f32 %v2773, 1.442695
    %v2777 = vpow.pop %v2776
    %v2778 = vadd.f32 %v2775, 1.0
    %v2779 = vadd.f32 %v2777, 1.0
    %v2780 = vrcp.pop %v2778
    %v2781 = vmul.f32 %v2778, %v2780
    %v2782 = vsub.f32 1.0, %v2781
    %v2783 = vmul.f32 %v2780, %v2782
    %v2784 = vadd.f32 %v2780, %v2783
    %vm2785 = vweird.f32 %v2778
    %vm2786 = vweird.f32 %v2780
    %vm2787 = vmor %vm2785, %vm2786
    %v2788 = vsel %vm2787, %v2780, %v2784
    %v2789 = vand.u32 2147483647, %v2778
    %vm2790 = vcmp.eq.f32.partialorder %v2789, 8.507059e+37
    %v2791 = vand.u32 %v2778, 2147483648
    %v2792 = vor.u32 1.1754944e-38, %v2791
    %v2793 = vsel %vm2790, %v2792, %v2788
    %v2794 = vmul.f32 1.0, %v2793
    %v2795 = vrcp.pop %v2779
    %v2796 = vmul.f32 %v2779, %v2795
    %v2797 = vsub.f32 1.0, %v2796
    %v2798 = vmul.f32 %v2795, %v2797
    %v2799 = vadd.f32 %v2795, %v2798
    %vm2800 = vweird.f32 %v2779
    %vm2801 = vweird.f32 %v2795
    %vm2802 = vmor %vm2800, %vm2801
    %v2803 = vsel %vm2802, %v2795, %v2799
    %v2804 = vand.u32 2147483647, %v2779
    %vm2805 = vcmp.eq.f32.partialorder %v2804, 8.507059e+37
    %v2806 = vand.u32 %v2779, 2147483648
    %v2807 = vor.u32 1.1754944e-38, %v2806
    %v2808 = vsel %vm2805, %v2807, %v2803
    %v2809 = vmul.f32 1.0, %v2808
    %v2810 = vmul.f32 %v2754, %v2446
    %v2811 = vmul.f32 %v2769, %v2447
    %v2812 = vmul.f32 %v2716, %v2770
    %v2813 = vmul.f32 %v2731, %v2771
    %v2814 = vadd.f32 %v2810, %v2812
    %v2815 = vadd.f32 %v2811, %v2813
    %v2816 = vtanh.pop %v2814
    %v2817 = vtanh.pop %v2815
    %v2818 = vmul.f32 %v2794, %v2816
    %v2819 = vmul.f32 %v2809, %v2817
    %v2820 = vmul.u32 %v946, 2
    %v2821 = vmul.u32 %v947, 2
    %v2822 = vadd.s32 %v944, %v2820
    %v2823 = vadd.s32 %v945, %v2821
    %vm2824 = vcmp.eq.s32.totalorder %v2085, %v2822
    %vm2825 = vcmp.eq.s32.totalorder %v2085, %v2823
    %v2826 = vsel %vm2824, %v2818, %v2456
    %v2827 = vsel %vm2825, %v2819, %v2457
    %v2828 = vpack.c.bf16 %v2818, %v2818
    %v2829 = vpack.c.bf16 %v2819, %v2819
    %s2830 = scalar_lea.vmem [#allocation5], 192
    %v2831 = vld [vmem:[%s2830] sm:$0xff]
    %v2832 = vld [vmem:[%s2830 + $0x8] sm:$0xff]
    %v2833 = vld [vmem:[%s2830 + $0x10] sm:$0xff]
    %v2834 = vld [vmem:[%s2830 + $0x18] sm:$0xff]
    %v2835 = vld [vmem:[%s2830 + $0x20] sm:$0xff]
    %v2836 = vld [vmem:[%s2830 + $0x28] sm:$0xff]
    %v2837 = vld [vmem:[%s2830 + $0x30] sm:$0xff]
    %v2838 = vld [vmem:[%s2830 + $0x38] sm:$0xff]
    %2839 = vmatpush.bf16.msra.mxu0 %v1532
    %2840 = vmatpush.bf16.msra.mxu0 %v1524
    %2841 = vmatpush.bf16.msra.mxu0 %v1516
    %2842 = vmatpush.bf16.msra.mxu0 %v1508
    %2843 = vmatpush.bf16.msra.mxu0 %v1500
    %2844 = vmatpush.bf16.msra.mxu0 %v1492
    %2845 = vmatpush.bf16.msra.mxu0 %v1484
    %2846 = vmatpush.bf16.msra.mxu0 %v1476
    %2847 = vmatmul.bf16.gmra.mxu0 %v2828
    %v2848 = vpop.f32.mrf.mxu0
    %v2849 = vadd.f32 %v2831, %v2848
    %v2850 = vpop.f32.mrf.mxu0
    %2851 = vdwg.mxu0
    %2852 = vmatpush.bf16.msra.mxu0 %v1596
    %2853 = vmatpush.bf16.msra.mxu0 %v1588
    %2854 = vmatpush.bf16.msra.mxu0 %v1580
    %2855 = vmatpush.bf16.msra.mxu0 %v1572
    %2856 = vmatpush.bf16.msra.mxu0 %v1564
    %2857 = vmatpush.bf16.msra.mxu0 %v1556
    %2858 = vmatpush.bf16.msra.mxu0 %v1548
    %2859 = vmatpush.bf16.msra.mxu0 %v1540
    %2860 = vmatmul.bf16.gmra.mxu0 %v2829
    %v2861 = vpop.f32.mrf.mxu0
    %v2862 = vadd.f32 %v2849, %v2861
    %v2863 = vpop.f32.mrf.mxu0
    %2864 = vdwg.mxu0
    %2865 = vmatpush.bf16.msra.mxu0 %v1533
    %2866 = vmatpush.bf16.msra.mxu0 %v1525
    %2867 = vmatpush.bf16.msra.mxu0 %v1517
    %2868 = vmatpush.bf16.msra.mxu0 %v1509
    %2869 = vmatpush.bf16.msra.mxu0 %v1501
    %2870 = vmatpush.bf16.msra.mxu0 %v1493
    %2871 = vmatpush.bf16.msra.mxu0 %v1485
    %2872 = vmatpush.bf16.msra.mxu0 %v1477
    %2873 = vmatmul.bf16.gmra.mxu0 %v2828
    %v2874 = vpop.f32.mrf.mxu0
    %v2875 = vadd.f32 %v2832, %v2874
    %v2876 = vpop.f32.mrf.mxu0
    %2877 = vdwg.mxu0
    %2878 = vmatpush.bf16.msra.mxu0 %v1597
    %2879 = vmatpush.bf16.msra.mxu0 %v1589
    %2880 = vmatpush.bf16.msra.mxu0 %v1581
    %2881 = vmatpush.bf16.msra.mxu0 %v1573
    %2882 = vmatpush.bf16.msra.mxu0 %v1565
    %2883 = vmatpush.bf16.msra.mxu0 %v1557
    %2884 = vmatpush.bf16.msra.mxu0 %v1549
    %2885 = vmatpush.bf16.msra.mxu0 %v1541
    %2886 = vmatmul.bf16.gmra.mxu0 %v2829
    %v2887 = vpop.f32.mrf.mxu0
    %v2888 = vadd.f32 %v2875, %v2887
    %v2889 = vpop.f32.mrf.mxu0
    %2890 = vdwg.mxu0
    %2891 = vmatpush.bf16.msra.mxu0 %v1534
    %2892 = vmatpush.bf16.msra.mxu0 %v1526
    %2893 = vmatpush.bf16.msra.mxu0 %v1518
    %2894 = vmatpush.bf16.msra.mxu0 %v1510
    %2895 = vmatpush.bf16.msra.mxu0 %v1502
    %2896 = vmatpush.bf16.msra.mxu0 %v1494
    %2897 = vmatpush.bf16.msra.mxu0 %v1486
    %2898 = vmatpush.bf16.msra.mxu0 %v1478
    %2899 = vmatmul.bf16.gmra.mxu0 %v2828
    %v2900 = vpop.f32.mrf.mxu0
    %v2901 = vadd.f32 %v2833, %v2900
    %v2902 = vpop.f32.mrf.mxu0
    %2903 = vdwg.mxu0
    %2904 = vmatpush.bf16.msra.mxu0 %v1598
    %2905 = vmatpush.bf16.msra.mxu0 %v1590
    %2906 = vmatpush.bf16.msra.mxu0 %v1582
    %2907 = vmatpush.bf16.msra.mxu0 %v1574
    %2908 = vmatpush.bf16.msra.mxu0 %v1566
    %2909 = vmatpush.bf16.msra.mxu0 %v1558
    %2910 = vmatpush.bf16.msra.mxu0 %v1550
    %2911 = vmatpush.bf16.msra.mxu0 %v1542
    %2912 = vmatmul.bf16.gmra.mxu0 %v2829
    %v2913 = vpop.f32.mrf.mxu0
    %v2914 = vadd.f32 %v2901, %v2913
    %v2915 = vpop.f32.mrf.mxu0
    %2916 = vdwg.mxu0
    %2917 = vmatpush.bf16.msra.mxu0 %v1535
    %2918 = vmatpush.bf16.msra.mxu0 %v1527
    %2919 = vmatpush.bf16.msra.mxu0 %v1519
    %2920 = vmatpush.bf16.msra.mxu0 %v1511
    %2921 = vmatpush.bf16.msra.mxu0 %v1503
    %2922 = vmatpush.bf16.msra.mxu0 %v1495
    %2923 = vmatpush.bf16.msra.mxu0 %v1487
    %2924 = vmatpush.bf16.msra.mxu0 %v1479
    %2925 = vmatmul.bf16.gmra.mxu0 %v2828
    %v2926 = vpop.f32.mrf.mxu0
    %v2927 = vadd.f32 %v2834, %v2926
    %v2928 = vpop.f32.mrf.mxu0
    %2929 = vdwg.mxu0
    %2930 = vmatpush.bf16.msra.mxu0 %v1599
    %2931 = vmatpush.bf16.msra.mxu0 %v1591
    %2932 = vmatpush.bf16.msra.mxu0 %v1583
    %2933 = vmatpush.bf16.msra.mxu0 %v1575
    %2934 = vmatpush.bf16.msra.mxu0 %v1567
    %2935 = vmatpush.bf16.msra.mxu0 %v1559
    %2936 = vmatpush.bf16.msra.mxu0 %v1551
    %2937 = vmatpush.bf16.msra.mxu0 %v1543
    %2938 = vmatmul.bf16.gmra.mxu0 %v2829
    %v2939 = vpop.f32.mrf.mxu0
    %v2940 = vadd.f32 %v2927, %v2939
    %v2941 = vpop.f32.mrf.mxu0
    %2942 = vdwg.mxu0
    %2943 = vmatpush.bf16.msra.mxu0 %v1536
    %2944 = vmatpush.bf16.msra.mxu0 %v1528
    %2945 = vmatpush.bf16.msra.mxu0 %v1520
    %2946 = vmatpush.bf16.msra.mxu0 %v1512
    %2947 = vmatpush.bf16.msra.mxu0 %v1504
    %2948 = vmatpush.bf16.msra.mxu0 %v1496
    %2949 = vmatpush.bf16.msra.mxu0 %v1488
    %2950 = vmatpush.bf16.msra.mxu0 %v1480
    %2951 = vmatmul.bf16.gmra.mxu0 %v2828
    %v2952 = vpop.f32.mrf.mxu0
    %v2953 = vadd.f32 %v2835, %v2952
    %v2954 = vpop.f32.mrf.mxu0
    %2955 = vdwg.mxu0
    %2956 = vmatpush.bf16.msra.mxu0 %v1600
    %2957 = vmatpush.bf16.msra.mxu0 %v1592
    %2958 = vmatpush.bf16.msra.mxu0 %v1584
    %2959 = vmatpush.bf16.msra.mxu0 %v1576
    %2960 = vmatpush.bf16.msra.mxu0 %v1568
    %2961 = vmatpush.bf16.msra.mxu0 %v1560
    %2962 = vmatpush.bf16.msra.mxu0 %v1552
    %2963 = vmatpush.bf16.msra.mxu0 %v1544
    %2964 = vmatmul.bf16.gmra.mxu0 %v2829
    %v2965 = vpop.f32.mrf.mxu0
    %v2966 = vadd.f32 %v2953, %v2965
    %v2967 = vpop.f32.mrf.mxu0
    %2968 = vdwg.mxu0
    %2969 = vmatpush.bf16.msra.mxu0 %v1537
    %2970 = vmatpush.bf16.msra.mxu0 %v1529
    %2971 = vmatpush.bf16.msra.mxu0 %v1521
    %2972 = vmatpush.bf16.msra.mxu0 %v1513
    %2973 = vmatpush.bf16.msra.mxu0 %v1505
    %2974 = vmatpush.bf16.msra.mxu0 %v1497
    %2975 = vmatpush.bf16.msra.mxu0 %v1489
    %2976 = vmatpush.bf16.msra.mxu0 %v1481
    %2977 = vmatmul.bf16.gmra.mxu0 %v2828
    %v2978 = vpop.f32.mrf.mxu0
    %v2979 = vadd.f32 %v2836, %v2978
    %v2980 = vpop.f32.mrf.mxu0
    %2981 = vdwg.mxu0
    %2982 = vmatpush.bf16.msra.mxu0 %v1601
    %2983 = vmatpush.bf16.msra.mxu0 %v1593
    %2984 = vmatpush.bf16.msra.mxu0 %v1585
    %2985 = vmatpush.bf16.msra.mxu0 %v1577
    %2986 = vmatpush.bf16.msra.mxu0 %v1569
    %2987 = vmatpush.bf16.msra.mxu0 %v1561
    %2988 = vmatpush.bf16.msra.mxu0 %v1553
    %2989 = vmatpush.bf16.msra.mxu0 %v1545
    %2990 = vmatmul.bf16.gmra.mxu0 %v2829
    %v2991 = vpop.f32.mrf.mxu0
    %v2992 = vadd.f32 %v2979, %v2991
    %v2993 = vpop.f32.mrf.mxu0
    %2994 = vdwg.mxu0
    %2995 = vmatpush.bf16.msra.mxu0 %v1538
    %2996 = vmatpush.bf16.msra.mxu0 %v1530
    %2997 = vmatpush.bf16.msra.mxu0 %v1522
    %2998 = vmatpush.bf16.msra.mxu0 %v1514
    %2999 = vmatpush.bf16.msra.mxu0 %v1506
    %3000 = vmatpush.bf16.msra.mxu0 %v1498
    %3001 = vmatpush.bf16.msra.mxu0 %v1490
    %3002 = vmatpush.bf16.msra.mxu0 %v1482
    %3003 = vmatmul.bf16.gmra.mxu0 %v2828
    %v3004 = vpop.f32.mrf.mxu0
    %v3005 = vadd.f32 %v2837, %v3004
    %v3006 = vpop.f32.mrf.mxu0
    %3007 = vdwg.mxu0
    %3008 = vmatpush.bf16.msra.mxu0 %v1602
    %3009 = vmatpush.bf16.msra.mxu0 %v1594
    %3010 = vmatpush.bf16.msra.mxu0 %v1586
    %3011 = vmatpush.bf16.msra.mxu0 %v1578
    %3012 = vmatpush.bf16.msra.mxu0 %v1570
    %3013 = vmatpush.bf16.msra.mxu0 %v1562
    %3014 = vmatpush.bf16.msra.mxu0 %v1554
    %3015 = vmatpush.bf16.msra.mxu0 %v1546
    %3016 = vmatmul.bf16.gmra.mxu0 %v2829
    %v3017 = vpop.f32.mrf.mxu0
    %v3018 = vadd.f32 %v3005, %v3017
    %v3019 = vpop.f32.mrf.mxu0
    %3020 = vdwg.mxu0
    %3021 = vmatpush.bf16.msra.mxu0 %v1539
    %3022 = vmatpush.bf16.msra.mxu0 %v1531
    %3023 = vmatpush.bf16.msra.mxu0 %v1523
    %3024 = vmatpush.bf16.msra.mxu0 %v1515
    %3025 = vmatpush.bf16.msra.mxu0 %v1507
    %3026 = vmatpush.bf16.msra.mxu0 %v1499
    %3027 = vmatpush.bf16.msra.mxu0 %v1491
    %3028 = vmatpush.bf16.msra.mxu0 %v1483
    %3029 = vmatmul.bf16.gmra.mxu0 %v2828
    %v3030 = vpop.f32.mrf.mxu0
    %v3031 = vadd.f32 %v2838, %v3030
    %v3032 = vpop.f32.mrf.mxu0
    %3033 = vdwg.mxu0
    %3034 = vmatpush.bf16.msra.mxu0 %v1603
    %3035 = vmatpush.bf16.msra.mxu0 %v1595
    %3036 = vmatpush.bf16.msra.mxu0 %v1587
    %3037 = vmatpush.bf16.msra.mxu0 %v1579
    %3038 = vmatpush.bf16.msra.mxu0 %v1571
    %3039 = vmatpush.bf16.msra.mxu0 %v1563
    %3040 = vmatpush.bf16.msra.mxu0 %v1555
    %3041 = vmatpush.bf16.msra.mxu0 %v1547
    %3042 = vmatmul.bf16.gmra.mxu0 %v2829
    %v3043 = vpop.f32.mrf.mxu0
    %v3044 = vadd.f32 %v3031, %v3043
    %v3045 = vpop.f32.mrf.mxu0
    %3046 = vdwg.mxu0
    %s3047 = scalar_lea.vmem [#allocation6], 256
    %v3048 = vld [vmem:[%s3047] sm:$0xff]
    %v3049 = vld [vmem:[%s3047 + $0x8] sm:$0xff]
    %v3050 = vld [vmem:[%s3047 + $0x10] sm:$0xff]
    %v3051 = vld [vmem:[%s3047 + $0x18] sm:$0xff]
    %v3052 = vld [vmem:[%s3047 + $0x20] sm:$0xff]
    %v3053 = vld [vmem:[%s3047 + $0x28] sm:$0xff]
    %v3054 = vld [vmem:[%s3047 + $0x30] sm:$0xff]
    %v3055 = vld [vmem:[%s3047 + $0x38] sm:$0xff]
    %v3056 = vadd.f32 %v2862, %v3048
    %v3057 = vadd.f32 %v2888, %v3049
    %v3058 = vadd.f32 %v2914, %v3050
    %v3059 = vadd.f32 %v2940, %v3051
    %v3060 = vadd.f32 %v2966, %v3052
    %v3061 = vadd.f32 %v2992, %v3053
    %v3062 = vadd.f32 %v3018, %v3054
    %v3063 = vadd.f32 %v3044, %v3055
    %v3064 = vxor.u32 %v3056, 2147483648
    %v3065 = vxor.u32 %v3057, 2147483648
    %v3066 = vmul.f32 %v3064, 1.442695
    %v3067 = vpow.pop %v3066
    %v3068 = vmul.f32 %v3065, 1.442695
    %v3069 = vpow.pop %v3068
    %v3070 = vadd.f32 %v3067, 1.0
    %v3071 = vadd.f32 %v3069, 1.0
    %v3072 = vrcp.pop %v3070
    %v3073 = vmul.f32 %v3070, %v3072
    %v3074 = vsub.f32 1.0, %v3073
    %v3075 = vmul.f32 %v3072, %v3074
    %v3076 = vadd.f32 %v3072, %v3075
    %vm3077 = vweird.f32 %v3070
    %vm3078 = vweird.f32 %v3072
    %vm3079 = vmor %vm3077, %vm3078
    %v3080 = vsel %vm3079, %v3072, %v3076
    %v3081 = vand.u32 2147483647, %v3070
    %vm3082 = vcmp.eq.f32.partialorder %v3081, 8.507059e+37
    %v3083 = vand.u32 %v3070, 2147483648
    %v3084 = vor.u32 1.1754944e-38, %v3083
    %v3085 = vsel %vm3082, %v3084, %v3080
    %v3086 = vmul.f32 1.0, %v3085
    %v3087 = vrcp.pop %v3071
    %v3088 = vmul.f32 %v3071, %v3087
    %v3089 = vsub.f32 1.0, %v3088
    %v3090 = vmul.f32 %v3087, %v3089
    %v3091 = vadd.f32 %v3087, %v3090
    %vm3092 = vweird.f32 %v3071
    %vm3093 = vweird.f32 %v3087
    %vm3094 = vmor %vm3092, %vm3093
    %v3095 = vsel %vm3094, %v3087, %v3091
    %v3096 = vand.u32 2147483647, %v3071
    %vm3097 = vcmp.eq.f32.partialorder %v3096, 8.507059e+37
    %v3098 = vand.u32 %v3071, 2147483648
    %v3099 = vor.u32 1.1754944e-38, %v3098
    %v3100 = vsel %vm3097, %v3099, %v3095
    %v3101 = vmul.f32 1.0, %v3100
    %v3102 = vxor.u32 %v3058, 2147483648
    %v3103 = vxor.u32 %v3059, 2147483648
    %v3104 = vmul.f32 %v3102, 1.442695
    %v3105 = vpow.pop %v3104
    %v3106 = vmul.f32 %v3103, 1.442695
    %v3107 = vpow.pop %v3106
    %v3108 = vadd.f32 %v3105, 1.0
    %v3109 = vadd.f32 %v3107, 1.0
    %v3110 = vrcp.pop %v3108
    %v3111 = vmul.f32 %v3108, %v3110
    %v3112 = vsub.f32 1.0, %v3111
    %v3113 = vmul.f32 %v3110, %v3112
    %v3114 = vadd.f32 %v3110, %v3113
    %vm3115 = vweird.f32 %v3108
    %vm3116 = vweird.f32 %v3110
    %vm3117 = vmor %vm3115, %vm3116
    %v3118 = vsel %vm3117, %v3110, %v3114
    %v3119 = vand.u32 2147483647, %v3108
    %vm3120 = vcmp.eq.f32.partialorder %v3119, 8.507059e+37
    %v3121 = vand.u32 %v3108, 2147483648
    %v3122 = vor.u32 1.1754944e-38, %v3121
    %v3123 = vsel %vm3120, %v3122, %v3118
    %v3124 = vmul.f32 1.0, %v3123
    %v3125 = vrcp.pop %v3109
    %v3126 = vmul.f32 %v3109, %v3125
    %v3127 = vsub.f32 1.0, %v3126
    %v3128 = vmul.f32 %v3125, %v3127
    %v3129 = vadd.f32 %v3125, %v3128
    %vm3130 = vweird.f32 %v3109
    %vm3131 = vweird.f32 %v3125
    %vm3132 = vmor %vm3130, %vm3131
    %v3133 = vsel %vm3132, %v3125, %v3129
    %v3134 = vand.u32 2147483647, %v3109
    %vm3135 = vcmp.eq.f32.partialorder %v3134, 8.507059e+37
    %v3136 = vand.u32 %v3109, 2147483648
    %v3137 = vor.u32 1.1754944e-38, %v3136
    %v3138 = vsel %vm3135, %v3137, %v3133
    %v3139 = vmul.f32 1.0, %v3138
    %v3140 = vtanh.pop %v3060
    %v3141 = vtanh.pop %v3061
    %v3142 = vxor.u32 %v3062, 2147483648
    %v3143 = vxor.u32 %v3063, 2147483648
    %v3144 = vmul.f32 %v3142, 1.442695
    %v3145 = vpow.pop %v3144
    %v3146 = vmul.f32 %v3143, 1.442695
    %v3147 = vpow.pop %v3146
    %v3148 = vadd.f32 %v3145, 1.0
    %v3149 = vadd.f32 %v3147, 1.0
    %v3150 = vrcp.pop %v3148
    %v3151 = vmul.f32 %v3148, %v3150
    %v3152 = vsub.f32 1.0, %v3151
    %v3153 = vmul.f32 %v3150, %v3152
    %v3154 = vadd.f32 %v3150, %v3153
    %vm3155 = vweird.f32 %v3148
    %vm3156 = vweird.f32 %v3150
    %vm3157 = vmor %vm3155, %vm3156
    %v3158 = vsel %vm3157, %v3150, %v3154
    %v3159 = vand.u32 2147483647, %v3148
    %vm3160 = vcmp.eq.f32.partialorder %v3159, 8.507059e+37
    %v3161 = vand.u32 %v3148, 2147483648
    %v3162 = vor.u32 1.1754944e-38, %v3161
    %v3163 = vsel %vm3160, %v3162, %v3158
    %v3164 = vmul.f32 1.0, %v3163
    %v3165 = vrcp.pop %v3149
    %v3166 = vmul.f32 %v3149, %v3165
    %v3167 = vsub.f32 1.0, %v3166
    %v3168 = vmul.f32 %v3165, %v3167
    %v3169 = vadd.f32 %v3165, %v3168
    %vm3170 = vweird.f32 %v3149
    %vm3171 = vweird.f32 %v3165
    %vm3172 = vmor %vm3170, %vm3171
    %v3173 = vsel %vm3172, %v3165, %v3169
    %v3174 = vand.u32 2147483647, %v3149
    %vm3175 = vcmp.eq.f32.partialorder %v3174, 8.507059e+37
    %v3176 = vand.u32 %v3149, 2147483648
    %v3177 = vor.u32 1.1754944e-38, %v3176
    %v3178 = vsel %vm3175, %v3177, %v3173
    %v3179 = vmul.f32 1.0, %v3178
    %v3180 = vmul.f32 %v3124, %v2814
    %v3181 = vmul.f32 %v3139, %v2815
    %v3182 = vmul.f32 %v3086, %v3140
    %v3183 = vmul.f32 %v3101, %v3141
    %v3184 = vadd.f32 %v3180, %v3182
    %v3185 = vadd.f32 %v3181, %v3183
    %v3186 = vtanh.pop %v3184
    %v3187 = vtanh.pop %v3185
    %v3188 = vmul.f32 %v3164, %v3186
    %v3189 = vmul.f32 %v3179, %v3187
    %v3190 = vmul.u32 %v946, 3
    %v3191 = vmul.u32 %v947, 3
    %v3192 = vadd.s32 %v944, %v3190
    %v3193 = vadd.s32 %v945, %v3191
    %vm3194 = vcmp.eq.s32.totalorder %v2085, %v3192
    %vm3195 = vcmp.eq.s32.totalorder %v2085, %v3193
    %v3196 = vsel %vm3194, %v3188, %v2826
    %v3197 = vsel %vm3195, %v3189, %v2827
    %v3198 = vpack.c.bf16 %v3188, %v3188
    %v3199 = vpack.c.bf16 %v3189, %v3189
    %s3200 = scalar_lea.vmem [#allocation5], 256
    %v3201 = vld [vmem:[%s3200] sm:$0xff]
    %v3202 = vld [vmem:[%s3200 + $0x8] sm:$0xff]
    %v3203 = vld [vmem:[%s3200 + $0x10] sm:$0xff]
    %v3204 = vld [vmem:[%s3200 + $0x18] sm:$0xff]
    %v3205 = vld [vmem:[%s3200 + $0x20] sm:$0xff]
    %v3206 = vld [vmem:[%s3200 + $0x28] sm:$0xff]
    %v3207 = vld [vmem:[%s3200 + $0x30] sm:$0xff]
    %v3208 = vld [vmem:[%s3200 + $0x38] sm:$0xff]
    %3209 = vmatpush.bf16.msra.mxu0 %v1532
    %3210 = vmatpush.bf16.msra.mxu0 %v1524
    %3211 = vmatpush.bf16.msra.mxu0 %v1516
    %3212 = vmatpush.bf16.msra.mxu0 %v1508
    %3213 = vmatpush.bf16.msra.mxu0 %v1500
    %3214 = vmatpush.bf16.msra.mxu0 %v1492
    %3215 = vmatpush.bf16.msra.mxu0 %v1484
    %3216 = vmatpush.bf16.msra.mxu0 %v1476
    %3217 = vmatmul.bf16.gmra.mxu0 %v3198
    %v3218 = vpop.f32.mrf.mxu0
    %v3219 = vadd.f32 %v3201, %v3218
    %v3220 = vpop.f32.mrf.mxu0
    %3221 = vdwg.mxu0
    %3222 = vmatpush.bf16.msra.mxu0 %v1596
    %3223 = vmatpush.bf16.msra.mxu0 %v1588
    %3224 = vmatpush.bf16.msra.mxu0 %v1580
    %3225 = vmatpush.bf16.msra.mxu0 %v1572
    %3226 = vmatpush.bf16.msra.mxu0 %v1564
    %3227 = vmatpush.bf16.msra.mxu0 %v1556
    %3228 = vmatpush.bf16.msra.mxu0 %v1548
    %3229 = vmatpush.bf16.msra.mxu0 %v1540
    %3230 = vmatmul.bf16.gmra.mxu0 %v3199
    %v3231 = vpop.f32.mrf.mxu0
    %v3232 = vadd.f32 %v3219, %v3231
    %v3233 = vpop.f32.mrf.mxu0
    %3234 = vdwg.mxu0
    %3235 = vmatpush.bf16.msra.mxu0 %v1533
    %3236 = vmatpush.bf16.msra.mxu0 %v1525
    %3237 = vmatpush.bf16.msra.mxu0 %v1517
    %3238 = vmatpush.bf16.msra.mxu0 %v1509
    %3239 = vmatpush.bf16.msra.mxu0 %v1501
    %3240 = vmatpush.bf16.msra.mxu0 %v1493
    %3241 = vmatpush.bf16.msra.mxu0 %v1485
    %3242 = vmatpush.bf16.msra.mxu0 %v1477
    %3243 = vmatmul.bf16.gmra.mxu0 %v3198
    %v3244 = vpop.f32.mrf.mxu0
    %v3245 = vadd.f32 %v3202, %v3244
    %v3246 = vpop.f32.mrf.mxu0
    %3247 = vdwg.mxu0
    %3248 = vmatpush.bf16.msra.mxu0 %v1597
    %3249 = vmatpush.bf16.msra.mxu0 %v1589
    %3250 = vmatpush.bf16.msra.mxu0 %v1581
    %3251 = vmatpush.bf16.msra.mxu0 %v1573
    %3252 = vmatpush.bf16.msra.mxu0 %v1565
    %3253 = vmatpush.bf16.msra.mxu0 %v1557
    %3254 = vmatpush.bf16.msra.mxu0 %v1549
    %3255 = vmatpush.bf16.msra.mxu0 %v1541
    %3256 = vmatmul.bf16.gmra.mxu0 %v3199
    %v3257 = vpop.f32.mrf.mxu0
    %v3258 = vadd.f32 %v3245, %v3257
    %v3259 = vpop.f32.mrf.mxu0
    %3260 = vdwg.mxu0
    %3261 = vmatpush.bf16.msra.mxu0 %v1534
    %3262 = vmatpush.bf16.msra.mxu0 %v1526
    %3263 = vmatpush.bf16.msra.mxu0 %v1518
    %3264 = vmatpush.bf16.msra.mxu0 %v1510
    %3265 = vmatpush.bf16.msra.mxu0 %v1502
    %3266 = vmatpush.bf16.msra.mxu0 %v1494
    %3267 = vmatpush.bf16.msra.mxu0 %v1486
    %3268 = vmatpush.bf16.msra.mxu0 %v1478
    %3269 = vmatmul.bf16.gmra.mxu0 %v3198
    %v3270 = vpop.f32.mrf.mxu0
    %v3271 = vadd.f32 %v3203, %v3270
    %v3272 = vpop.f32.mrf.mxu0
    %3273 = vdwg.mxu0
    %3274 = vmatpush.bf16.msra.mxu0 %v1598
    %3275 = vmatpush.bf16.msra.mxu0 %v1590
    %3276 = vmatpush.bf16.msra.mxu0 %v1582
    %3277 = vmatpush.bf16.msra.mxu0 %v1574
    %3278 = vmatpush.bf16.msra.mxu0 %v1566
    %3279 = vmatpush.bf16.msra.mxu0 %v1558
    %3280 = vmatpush.bf16.msra.mxu0 %v1550
    %3281 = vmatpush.bf16.msra.mxu0 %v1542
    %3282 = vmatmul.bf16.gmra.mxu0 %v3199
    %v3283 = vpop.f32.mrf.mxu0
    %v3284 = vadd.f32 %v3271, %v3283
    %v3285 = vpop.f32.mrf.mxu0
    %3286 = vdwg.mxu0
    %3287 = vmatpush.bf16.msra.mxu0 %v1535
    %3288 = vmatpush.bf16.msra.mxu0 %v1527
    %3289 = vmatpush.bf16.msra.mxu0 %v1519
    %3290 = vmatpush.bf16.msra.mxu0 %v1511
    %3291 = vmatpush.bf16.msra.mxu0 %v1503
    %3292 = vmatpush.bf16.msra.mxu0 %v1495
    %3293 = vmatpush.bf16.msra.mxu0 %v1487
    %3294 = vmatpush.bf16.msra.mxu0 %v1479
    %3295 = vmatmul.bf16.gmra.mxu0 %v3198
    %v3296 = vpop.f32.mrf.mxu0
    %v3297 = vadd.f32 %v3204, %v3296
    %v3298 = vpop.f32.mrf.mxu0
    %3299 = vdwg.mxu0
    %3300 = vmatpush.bf16.msra.mxu0 %v1599
    %3301 = vmatpush.bf16.msra.mxu0 %v1591
    %3302 = vmatpush.bf16.msra.mxu0 %v1583
    %3303 = vmatpush.bf16.msra.mxu0 %v1575
    %3304 = vmatpush.bf16.msra.mxu0 %v1567
    %3305 = vmatpush.bf16.msra.mxu0 %v1559
    %3306 = vmatpush.bf16.msra.mxu0 %v1551
    %3307 = vmatpush.bf16.msra.mxu0 %v1543
    %3308 = vmatmul.bf16.gmra.mxu0 %v3199
    %v3309 = vpop.f32.mrf.mxu0
    %v3310 = vadd.f32 %v3297, %v3309
    %v3311 = vpop.f32.mrf.mxu0
    %3312 = vdwg.mxu0
    %3313 = vmatpush.bf16.msra.mxu0 %v1536
    %3314 = vmatpush.bf16.msra.mxu0 %v1528
    %3315 = vmatpush.bf16.msra.mxu0 %v1520
    %3316 = vmatpush.bf16.msra.mxu0 %v1512
    %3317 = vmatpush.bf16.msra.mxu0 %v1504
    %3318 = vmatpush.bf16.msra.mxu0 %v1496
    %3319 = vmatpush.bf16.msra.mxu0 %v1488
    %3320 = vmatpush.bf16.msra.mxu0 %v1480
    %3321 = vmatmul.bf16.gmra.mxu0 %v3198
    %v3322 = vpop.f32.mrf.mxu0
    %v3323 = vadd.f32 %v3205, %v3322
    %v3324 = vpop.f32.mrf.mxu0
    %3325 = vdwg.mxu0
    %3326 = vmatpush.bf16.msra.mxu0 %v1600
    %3327 = vmatpush.bf16.msra.mxu0 %v1592
    %3328 = vmatpush.bf16.msra.mxu0 %v1584
    %3329 = vmatpush.bf16.msra.mxu0 %v1576
    %3330 = vmatpush.bf16.msra.mxu0 %v1568
    %3331 = vmatpush.bf16.msra.mxu0 %v1560
    %3332 = vmatpush.bf16.msra.mxu0 %v1552
    %3333 = vmatpush.bf16.msra.mxu0 %v1544
    %3334 = vmatmul.bf16.gmra.mxu0 %v3199
    %v3335 = vpop.f32.mrf.mxu0
    %v3336 = vadd.f32 %v3323, %v3335
    %v3337 = vpop.f32.mrf.mxu0
    %3338 = vdwg.mxu0
    %3339 = vmatpush.bf16.msra.mxu0 %v1537
    %3340 = vmatpush.bf16.msra.mxu0 %v1529
    %3341 = vmatpush.bf16.msra.mxu0 %v1521
    %3342 = vmatpush.bf16.msra.mxu0 %v1513
    %3343 = vmatpush.bf16.msra.mxu0 %v1505
    %3344 = vmatpush.bf16.msra.mxu0 %v1497
    %3345 = vmatpush.bf16.msra.mxu0 %v1489
    %3346 = vmatpush.bf16.msra.mxu0 %v1481
    %3347 = vmatmul.bf16.gmra.mxu0 %v3198
    %v3348 = vpop.f32.mrf.mxu0
    %v3349 = vadd.f32 %v3206, %v3348
    %v3350 = vpop.f32.mrf.mxu0
    %3351 = vdwg.mxu0
    %3352 = vmatpush.bf16.msra.mxu0 %v1601
    %3353 = vmatpush.bf16.msra.mxu0 %v1593
    %3354 = vmatpush.bf16.msra.mxu0 %v1585
    %3355 = vmatpush.bf16.msra.mxu0 %v1577
    %3356 = vmatpush.bf16.msra.mxu0 %v1569
    %3357 = vmatpush.bf16.msra.mxu0 %v1561
    %3358 = vmatpush.bf16.msra.mxu0 %v1553
    %3359 = vmatpush.bf16.msra.mxu0 %v1545
    %3360 = vmatmul.bf16.gmra.mxu0 %v3199
    %v3361 = vpop.f32.mrf.mxu0
    %v3362 = vadd.f32 %v3349, %v3361
    %v3363 = vpop.f32.mrf.mxu0
    %3364 = vdwg.mxu0
    %3365 = vmatpush.bf16.msra.mxu0 %v1538
    %3366 = vmatpush.bf16.msra.mxu0 %v1530
    %3367 = vmatpush.bf16.msra.mxu0 %v1522
    %3368 = vmatpush.bf16.msra.mxu0 %v1514
    %3369 = vmatpush.bf16.msra.mxu0 %v1506
    %3370 = vmatpush.bf16.msra.mxu0 %v1498
    %3371 = vmatpush.bf16.msra.mxu0 %v1490
    %3372 = vmatpush.bf16.msra.mxu0 %v1482
    %3373 = vmatmul.bf16.gmra.mxu0 %v3198
    %v3374 = vpop.f32.mrf.mxu0
    %v3375 = vadd.f32 %v3207, %v3374
    %v3376 = vpop.f32.mrf.mxu0
    %3377 = vdwg.mxu0
    %3378 = vmatpush.bf16.msra.mxu0 %v1602
    %3379 = vmatpush.bf16.msra.mxu0 %v1594
    %3380 = vmatpush.bf16.msra.mxu0 %v1586
    %3381 = vmatpush.bf16.msra.mxu0 %v1578
    %3382 = vmatpush.bf16.msra.mxu0 %v1570
    %3383 = vmatpush.bf16.msra.mxu0 %v1562
    %3384 = vmatpush.bf16.msra.mxu0 %v1554
    %3385 = vmatpush.bf16.msra.mxu0 %v1546
    %3386 = vmatmul.bf16.gmra.mxu0 %v3199
    %v3387 = vpop.f32.mrf.mxu0
    %v3388 = vadd.f32 %v3375, %v3387
    %v3389 = vpop.f32.mrf.mxu0
    %3390 = vdwg.mxu0
    %3391 = vmatpush.bf16.msra.mxu0 %v1539
    %3392 = vmatpush.bf16.msra.mxu0 %v1531
    %3393 = vmatpush.bf16.msra.mxu0 %v1523
    %3394 = vmatpush.bf16.msra.mxu0 %v1515
    %3395 = vmatpush.bf16.msra.mxu0 %v1507
    %3396 = vmatpush.bf16.msra.mxu0 %v1499
    %3397 = vmatpush.bf16.msra.mxu0 %v1491
    %3398 = vmatpush.bf16.msra.mxu0 %v1483
    %3399 = vmatmul.bf16.gmra.mxu0 %v3198
    %v3400 = vpop.f32.mrf.mxu0
    %v3401 = vadd.f32 %v3208, %v3400
    %v3402 = vpop.f32.mrf.mxu0
    %3403 = vdwg.mxu0
    %3404 = vmatpush.bf16.msra.mxu0 %v1603
    %3405 = vmatpush.bf16.msra.mxu0 %v1595
    %3406 = vmatpush.bf16.msra.mxu0 %v1587
    %3407 = vmatpush.bf16.msra.mxu0 %v1579
    %3408 = vmatpush.bf16.msra.mxu0 %v1571
    %3409 = vmatpush.bf16.msra.mxu0 %v1563
    %3410 = vmatpush.bf16.msra.mxu0 %v1555
    %3411 = vmatpush.bf16.msra.mxu0 %v1547
    %3412 = vmatmul.bf16.gmra.mxu0 %v3199
    %v3413 = vpop.f32.mrf.mxu0
    %v3414 = vadd.f32 %v3401, %v3413
    %v3415 = vpop.f32.mrf.mxu0
    %3416 = vdwg.mxu0
    %s3417 = scalar_lea.vmem [#allocation6], 192
    %v3418 = vld [vmem:[%s3417] sm:$0xff]
    %v3419 = vld [vmem:[%s3417 + $0x8] sm:$0xff]
    %v3420 = vld [vmem:[%s3417 + $0x10] sm:$0xff]
    %v3421 = vld [vmem:[%s3417 + $0x18] sm:$0xff]
    %v3422 = vld [vmem:[%s3417 + $0x20] sm:$0xff]
    %v3423 = vld [vmem:[%s3417 + $0x28] sm:$0xff]
    %v3424 = vld [vmem:[%s3417 + $0x30] sm:$0xff]
    %v3425 = vld [vmem:[%s3417 + $0x38] sm:$0xff]
    %v3426 = vadd.f32 %v3232, %v3418
    %v3427 = vadd.f32 %v3258, %v3419
    %v3428 = vadd.f32 %v3284, %v3420
    %v3429 = vadd.f32 %v3310, %v3421
    %v3430 = vadd.f32 %v3336, %v3422
    %v3431 = vadd.f32 %v3362, %v3423
    %v3432 = vadd.f32 %v3388, %v3424
    %v3433 = vadd.f32 %v3414, %v3425
    %v3434 = vxor.u32 %v3426, 2147483648
    %v3435 = vxor.u32 %v3427, 2147483648
    %v3436 = vmul.f32 %v3434, 1.442695
    %v3437 = vpow.pop %v3436
    %v3438 = vmul.f32 %v3435, 1.442695
    %v3439 = vpow.pop %v3438
    %v3440 = vadd.f32 %v3437, 1.0
    %v3441 = vadd.f32 %v3439, 1.0
    %v3442 = vrcp.pop %v3440
    %v3443 = vmul.f32 %v3440, %v3442
    %v3444 = vsub.f32 1.0, %v3443
    %v3445 = vmul.f32 %v3442, %v3444
    %v3446 = vadd.f32 %v3442, %v3445
    %vm3447 = vweird.f32 %v3440
    %vm3448 = vweird.f32 %v3442
    %vm3449 = vmor %vm3447, %vm3448
    %v3450 = vsel %vm3449, %v3442, %v3446
    %v3451 = vand.u32 2147483647, %v3440
    %vm3452 = vcmp.eq.f32.partialorder %v3451, 8.507059e+37
    %v3453 = vand.u32 %v3440, 2147483648
    %v3454 = vor.u32 1.1754944e-38, %v3453
    %v3455 = vsel %vm3452, %v3454, %v3450
    %v3456 = vmul.f32 1.0, %v3455
    %v3457 = vrcp.pop %v3441
    %v3458 = vmul.f32 %v3441, %v3457
    %v3459 = vsub.f32 1.0, %v3458
    %v3460 = vmul.f32 %v3457, %v3459
    %v3461 = vadd.f32 %v3457, %v3460
    %vm3462 = vweird.f32 %v3441
    %vm3463 = vweird.f32 %v3457
    %vm3464 = vmor %vm3462, %vm3463
    %v3465 = vsel %vm3464, %v3457, %v3461
    %v3466 = vand.u32 2147483647, %v3441
    %vm3467 = vcmp.eq.f32.partialorder %v3466, 8.507059e+37
    %v3468 = vand.u32 %v3441, 2147483648
    %v3469 = vor.u32 1.1754944e-38, %v3468
    %v3470 = vsel %vm3467, %v3469, %v3465
    %v3471 = vmul.f32 1.0, %v3470
    %v3472 = vxor.u32 %v3428, 2147483648
    %v3473 = vxor.u32 %v3429, 2147483648
    %v3474 = vmul.f32 %v3472, 1.442695
    %v3475 = vpow.pop %v3474
    %v3476 = vmul.f32 %v3473, 1.442695
    %v3477 = vpow.pop %v3476
    %v3478 = vadd.f32 %v3475, 1.0
    %v3479 = vadd.f32 %v3477, 1.0
    %v3480 = vrcp.pop %v3478
    %v3481 = vmul.f32 %v3478, %v3480
    %v3482 = vsub.f32 1.0, %v3481
    %v3483 = vmul.f32 %v3480, %v3482
    %v3484 = vadd.f32 %v3480, %v3483
    %vm3485 = vweird.f32 %v3478
    %vm3486 = vweird.f32 %v3480
    %vm3487 = vmor %vm3485, %vm3486
    %v3488 = vsel %vm3487, %v3480, %v3484
    %v3489 = vand.u32 2147483647, %v3478
    %vm3490 = vcmp.eq.f32.partialorder %v3489, 8.507059e+37
    %v3491 = vand.u32 %v3478, 2147483648
    %v3492 = vor.u32 1.1754944e-38, %v3491
    %v3493 = vsel %vm3490, %v3492, %v3488
    %v3494 = vmul.f32 1.0, %v3493
    %v3495 = vrcp.pop %v3479
    %v3496 = vmul.f32 %v3479, %v3495
    %v3497 = vsub.f32 1.0, %v3496
    %v3498 = vmul.f32 %v3495, %v3497
    %v3499 = vadd.f32 %v3495, %v3498
    %vm3500 = vweird.f32 %v3479
    %vm3501 = vweird.f32 %v3495
    %vm3502 = vmor %vm3500, %vm3501
    %v3503 = vsel %vm3502, %v3495, %v3499
    %v3504 = vand.u32 2147483647, %v3479
    %vm3505 = vcmp.eq.f32.partialorder %v3504, 8.507059e+37
    %v3506 = vand.u32 %v3479, 2147483648
    %v3507 = vor.u32 1.1754944e-38, %v3506
    %v3508 = vsel %vm3505, %v3507, %v3503
    %v3509 = vmul.f32 1.0, %v3508
    %v3510 = vtanh.pop %v3430
    %v3511 = vtanh.pop %v3431
    %v3512 = vxor.u32 %v3432, 2147483648
    %v3513 = vxor.u32 %v3433, 2147483648
    %v3514 = vmul.f32 %v3512, 1.442695
    %v3515 = vpow.pop %v3514
    %v3516 = vmul.f32 %v3513, 1.442695
    %v3517 = vpow.pop %v3516
    %v3518 = vadd.f32 %v3515, 1.0
    %v3519 = vadd.f32 %v3517, 1.0
    %v3520 = vrcp.pop %v3518
    %v3521 = vmul.f32 %v3518, %v3520
    %v3522 = vsub.f32 1.0, %v3521
    %v3523 = vmul.f32 %v3520, %v3522
    %v3524 = vadd.f32 %v3520, %v3523
    %vm3525 = vweird.f32 %v3518
    %vm3526 = vweird.f32 %v3520
    %vm3527 = vmor %vm3525, %vm3526
    %v3528 = vsel %vm3527, %v3520, %v3524
    %v3529 = vand.u32 2147483647, %v3518
    %vm3530 = vcmp.eq.f32.partialorder %v3529, 8.507059e+37
    %v3531 = vand.u32 %v3518, 2147483648
    %v3532 = vor.u32 1.1754944e-38, %v3531
    %v3533 = vsel %vm3530, %v3532, %v3528
    %v3534 = vmul.f32 1.0, %v3533
    %v3535 = vrcp.pop %v3519
    %v3536 = vmul.f32 %v3519, %v3535
    %v3537 = vsub.f32 1.0, %v3536
    %v3538 = vmul.f32 %v3535, %v3537
    %v3539 = vadd.f32 %v3535, %v3538
    %vm3540 = vweird.f32 %v3519
    %vm3541 = vweird.f32 %v3535
    %vm3542 = vmor %vm3540, %vm3541
    %v3543 = vsel %vm3542, %v3535, %v3539
    %v3544 = vand.u32 2147483647, %v3519
    %vm3545 = vcmp.eq.f32.partialorder %v3544, 8.507059e+37
    %v3546 = vand.u32 %v3519, 2147483648
    %v3547 = vor.u32 1.1754944e-38, %v3546
    %v3548 = vsel %vm3545, %v3547, %v3543
    %v3549 = vmul.f32 1.0, %v3548
    %v3550 = vmul.f32 %v3494, %v3184
    %v3551 = vmul.f32 %v3509, %v3185
    %v3552 = vmul.f32 %v3456, %v3510
    %v3553 = vmul.f32 %v3471, %v3511
    %v3554 = vadd.f32 %v3550, %v3552
    %v3555 = vadd.f32 %v3551, %v3553
    %v3556 = vtanh.pop %v3554
    %v3557 = vtanh.pop %v3555
    %v3558 = vmul.f32 %v3534, %v3556
    %v3559 = vmul.f32 %v3549, %v3557
    %v3560 = vmul.u32 %v946, 4
    %v3561 = vmul.u32 %v947, 4
    %v3562 = vadd.s32 %v944, %v3560
    %v3563 = vadd.s32 %v945, %v3561
    %vm3564 = vcmp.eq.s32.totalorder %v2085, %v3562
    %vm3565 = vcmp.eq.s32.totalorder %v2085, %v3563
    %v3566 = vsel %vm3564, %v3558, %v3196
    %v3567 = vsel %vm3565, %v3559, %v3197
    %v3568 = vpack.c.bf16 %v3558, %v3558
    %v3569 = vpack.c.bf16 %v3559, %v3559
    %s3570 = scalar_lea.vmem [#allocation5], 320
    %v3571 = vld [vmem:[%s3570] sm:$0xff]
    %v3572 = vld [vmem:[%s3570 + $0x8] sm:$0xff]
    %v3573 = vld [vmem:[%s3570 + $0x10] sm:$0xff]
    %v3574 = vld [vmem:[%s3570 + $0x18] sm:$0xff]
    %v3575 = vld [vmem:[%s3570 + $0x20] sm:$0xff]
    %v3576 = vld [vmem:[%s3570 + $0x28] sm:$0xff]
    %v3577 = vld [vmem:[%s3570 + $0x30] sm:$0xff]
    %v3578 = vld [vmem:[%s3570 + $0x38] sm:$0xff]
    %3579 = vmatpush.bf16.msra.mxu0 %v1532
    %3580 = vmatpush.bf16.msra.mxu0 %v1524
    %3581 = vmatpush.bf16.msra.mxu0 %v1516
    %3582 = vmatpush.bf16.msra.mxu0 %v1508
    %3583 = vmatpush.bf16.msra.mxu0 %v1500
    %3584 = vmatpush.bf16.msra.mxu0 %v1492
    %3585 = vmatpush.bf16.msra.mxu0 %v1484
    %3586 = vmatpush.bf16.msra.mxu0 %v1476
    %3587 = vmatmul.bf16.gmra.mxu0 %v3568
    %v3588 = vpop.f32.mrf.mxu0
    %v3589 = vadd.f32 %v3571, %v3588
    %v3590 = vpop.f32.mrf.mxu0
    %3591 = vdwg.mxu0
    %3592 = vmatpush.bf16.msra.mxu0 %v1596
    %3593 = vmatpush.bf16.msra.mxu0 %v1588
    %3594 = vmatpush.bf16.msra.mxu0 %v1580
    %3595 = vmatpush.bf16.msra.mxu0 %v1572
    %3596 = vmatpush.bf16.msra.mxu0 %v1564
    %3597 = vmatpush.bf16.msra.mxu0 %v1556
    %3598 = vmatpush.bf16.msra.mxu0 %v1548
    %3599 = vmatpush.bf16.msra.mxu0 %v1540
    %3600 = vmatmul.bf16.gmra.mxu0 %v3569
    %v3601 = vpop.f32.mrf.mxu0
    %v3602 = vadd.f32 %v3589, %v3601
    %v3603 = vpop.f32.mrf.mxu0
    %3604 = vdwg.mxu0
    %3605 = vmatpush.bf16.msra.mxu0 %v1533
    %3606 = vmatpush.bf16.msra.mxu0 %v1525
    %3607 = vmatpush.bf16.msra.mxu0 %v1517
    %3608 = vmatpush.bf16.msra.mxu0 %v1509
    %3609 = vmatpush.bf16.msra.mxu0 %v1501
    %3610 = vmatpush.bf16.msra.mxu0 %v1493
    %3611 = vmatpush.bf16.msra.mxu0 %v1485
    %3612 = vmatpush.bf16.msra.mxu0 %v1477
    %3613 = vmatmul.bf16.gmra.mxu0 %v3568
    %v3614 = vpop.f32.mrf.mxu0
    %v3615 = vadd.f32 %v3572, %v3614
    %v3616 = vpop.f32.mrf.mxu0
    %3617 = vdwg.mxu0
    %3618 = vmatpush.bf16.msra.mxu0 %v1597
    %3619 = vmatpush.bf16.msra.mxu0 %v1589
    %3620 = vmatpush.bf16.msra.mxu0 %v1581
    %3621 = vmatpush.bf16.msra.mxu0 %v1573
    %3622 = vmatpush.bf16.msra.mxu0 %v1565
    %3623 = vmatpush.bf16.msra.mxu0 %v1557
    %3624 = vmatpush.bf16.msra.mxu0 %v1549
    %3625 = vmatpush.bf16.msra.mxu0 %v1541
    %3626 = vmatmul.bf16.gmra.mxu0 %v3569
    %v3627 = vpop.f32.mrf.mxu0
    %v3628 = vadd.f32 %v3615, %v3627
    %v3629 = vpop.f32.mrf.mxu0
    %3630 = vdwg.mxu0
    %3631 = vmatpush.bf16.msra.mxu0 %v1534
    %3632 = vmatpush.bf16.msra.mxu0 %v1526
    %3633 = vmatpush.bf16.msra.mxu0 %v1518
    %3634 = vmatpush.bf16.msra.mxu0 %v1510
    %3635 = vmatpush.bf16.msra.mxu0 %v1502
    %3636 = vmatpush.bf16.msra.mxu0 %v1494
    %3637 = vmatpush.bf16.msra.mxu0 %v1486
    %3638 = vmatpush.bf16.msra.mxu0 %v1478
    %3639 = vmatmul.bf16.gmra.mxu0 %v3568
    %v3640 = vpop.f32.mrf.mxu0
    %v3641 = vadd.f32 %v3573, %v3640
    %v3642 = vpop.f32.mrf.mxu0
    %3643 = vdwg.mxu0
    %3644 = vmatpush.bf16.msra.mxu0 %v1598
    %3645 = vmatpush.bf16.msra.mxu0 %v1590
    %3646 = vmatpush.bf16.msra.mxu0 %v1582
    %3647 = vmatpush.bf16.msra.mxu0 %v1574
    %3648 = vmatpush.bf16.msra.mxu0 %v1566
    %3649 = vmatpush.bf16.msra.mxu0 %v1558
    %3650 = vmatpush.bf16.msra.mxu0 %v1550
    %3651 = vmatpush.bf16.msra.mxu0 %v1542
    %3652 = vmatmul.bf16.gmra.mxu0 %v3569
    %v3653 = vpop.f32.mrf.mxu0
    %v3654 = vadd.f32 %v3641, %v3653
    %v3655 = vpop.f32.mrf.mxu0
    %3656 = vdwg.mxu0
    %3657 = vmatpush.bf16.msra.mxu0 %v1535
    %3658 = vmatpush.bf16.msra.mxu0 %v1527
    %3659 = vmatpush.bf16.msra.mxu0 %v1519
    %3660 = vmatpush.bf16.msra.mxu0 %v1511
    %3661 = vmatpush.bf16.msra.mxu0 %v1503
    %3662 = vmatpush.bf16.msra.mxu0 %v1495
    %3663 = vmatpush.bf16.msra.mxu0 %v1487
    %3664 = vmatpush.bf16.msra.mxu0 %v1479
    %3665 = vmatmul.bf16.gmra.mxu0 %v3568
    %v3666 = vpop.f32.mrf.mxu0
    %v3667 = vadd.f32 %v3574, %v3666
    %v3668 = vpop.f32.mrf.mxu0
    %3669 = vdwg.mxu0
    %3670 = vmatpush.bf16.msra.mxu0 %v1599
    %3671 = vmatpush.bf16.msra.mxu0 %v1591
    %3672 = vmatpush.bf16.msra.mxu0 %v1583
    %3673 = vmatpush.bf16.msra.mxu0 %v1575
    %3674 = vmatpush.bf16.msra.mxu0 %v1567
    %3675 = vmatpush.bf16.msra.mxu0 %v1559
    %3676 = vmatpush.bf16.msra.mxu0 %v1551
    %3677 = vmatpush.bf16.msra.mxu0 %v1543
    %3678 = vmatmul.bf16.gmra.mxu0 %v3569
    %v3679 = vpop.f32.mrf.mxu0
    %v3680 = vadd.f32 %v3667, %v3679
    %v3681 = vpop.f32.mrf.mxu0
    %3682 = vdwg.mxu0
    %3683 = vmatpush.bf16.msra.mxu0 %v1536
    %3684 = vmatpush.bf16.msra.mxu0 %v1528
    %3685 = vmatpush.bf16.msra.mxu0 %v1520
    %3686 = vmatpush.bf16.msra.mxu0 %v1512
    %3687 = vmatpush.bf16.msra.mxu0 %v1504
    %3688 = vmatpush.bf16.msra.mxu0 %v1496
    %3689 = vmatpush.bf16.msra.mxu0 %v1488
    %3690 = vmatpush.bf16.msra.mxu0 %v1480
    %3691 = vmatmul.bf16.gmra.mxu0 %v3568
    %v3692 = vpop.f32.mrf.mxu0
    %v3693 = vadd.f32 %v3575, %v3692
    %v3694 = vpop.f32.mrf.mxu0
    %3695 = vdwg.mxu0
    %3696 = vmatpush.bf16.msra.mxu0 %v1600
    %3697 = vmatpush.bf16.msra.mxu0 %v1592
    %3698 = vmatpush.bf16.msra.mxu0 %v1584
    %3699 = vmatpush.bf16.msra.mxu0 %v1576
    %3700 = vmatpush.bf16.msra.mxu0 %v1568
    %3701 = vmatpush.bf16.msra.mxu0 %v1560
    %3702 = vmatpush.bf16.msra.mxu0 %v1552
    %3703 = vmatpush.bf16.msra.mxu0 %v1544
    %3704 = vmatmul.bf16.gmra.mxu0 %v3569
    %v3705 = vpop.f32.mrf.mxu0
    %v3706 = vadd.f32 %v3693, %v3705
    %v3707 = vpop.f32.mrf.mxu0
    %3708 = vdwg.mxu0
    %3709 = vmatpush.bf16.msra.mxu0 %v1537
    %3710 = vmatpush.bf16.msra.mxu0 %v1529
    %3711 = vmatpush.bf16.msra.mxu0 %v1521
    %3712 = vmatpush.bf16.msra.mxu0 %v1513
    %3713 = vmatpush.bf16.msra.mxu0 %v1505
    %3714 = vmatpush.bf16.msra.mxu0 %v1497
    %3715 = vmatpush.bf16.msra.mxu0 %v1489
    %3716 = vmatpush.bf16.msra.mxu0 %v1481
    %3717 = vmatmul.bf16.gmra.mxu0 %v3568
    %v3718 = vpop.f32.mrf.mxu0
    %v3719 = vadd.f32 %v3576, %v3718
    %v3720 = vpop.f32.mrf.mxu0
    %3721 = vdwg.mxu0
    %3722 = vmatpush.bf16.msra.mxu0 %v1601
    %3723 = vmatpush.bf16.msra.mxu0 %v1593
    %3724 = vmatpush.bf16.msra.mxu0 %v1585
    %3725 = vmatpush.bf16.msra.mxu0 %v1577
    %3726 = vmatpush.bf16.msra.mxu0 %v1569
    %3727 = vmatpush.bf16.msra.mxu0 %v1561
    %3728 = vmatpush.bf16.msra.mxu0 %v1553
    %3729 = vmatpush.bf16.msra.mxu0 %v1545
    %3730 = vmatmul.bf16.gmra.mxu0 %v3569
    %v3731 = vpop.f32.mrf.mxu0
    %v3732 = vadd.f32 %v3719, %v3731
    %v3733 = vpop.f32.mrf.mxu0
    %3734 = vdwg.mxu0
    %3735 = vmatpush.bf16.msra.mxu0 %v1538
    %3736 = vmatpush.bf16.msra.mxu0 %v1530
    %3737 = vmatpush.bf16.msra.mxu0 %v1522
    %3738 = vmatpush.bf16.msra.mxu0 %v1514
    %3739 = vmatpush.bf16.msra.mxu0 %v1506
    %3740 = vmatpush.bf16.msra.mxu0 %v1498
    %3741 = vmatpush.bf16.msra.mxu0 %v1490
    %3742 = vmatpush.bf16.msra.mxu0 %v1482
    %3743 = vmatmul.bf16.gmra.mxu0 %v3568
    %v3744 = vpop.f32.mrf.mxu0
    %v3745 = vadd.f32 %v3577, %v3744
    %v3746 = vpop.f32.mrf.mxu0
    %3747 = vdwg.mxu0
    %3748 = vmatpush.bf16.msra.mxu0 %v1602
    %3749 = vmatpush.bf16.msra.mxu0 %v1594
    %3750 = vmatpush.bf16.msra.mxu0 %v1586
    %3751 = vmatpush.bf16.msra.mxu0 %v1578
    %3752 = vmatpush.bf16.msra.mxu0 %v1570
    %3753 = vmatpush.bf16.msra.mxu0 %v1562
    %3754 = vmatpush.bf16.msra.mxu0 %v1554
    %3755 = vmatpush.bf16.msra.mxu0 %v1546
    %3756 = vmatmul.bf16.gmra.mxu0 %v3569
    %v3757 = vpop.f32.mrf.mxu0
    %v3758 = vadd.f32 %v3745, %v3757
    %v3759 = vpop.f32.mrf.mxu0
    %3760 = vdwg.mxu0
    %3761 = vmatpush.bf16.msra.mxu0 %v1539
    %3762 = vmatpush.bf16.msra.mxu0 %v1531
    %3763 = vmatpush.bf16.msra.mxu0 %v1523
    %3764 = vmatpush.bf16.msra.mxu0 %v1515
    %3765 = vmatpush.bf16.msra.mxu0 %v1507
    %3766 = vmatpush.bf16.msra.mxu0 %v1499
    %3767 = vmatpush.bf16.msra.mxu0 %v1491
    %3768 = vmatpush.bf16.msra.mxu0 %v1483
    %3769 = vmatmul.bf16.gmra.mxu0 %v3568
    %v3770 = vpop.f32.mrf.mxu0
    %v3771 = vadd.f32 %v3578, %v3770
    %v3772 = vpop.f32.mrf.mxu0
    %3773 = vdwg.mxu0
    %3774 = vmatpush.bf16.msra.mxu0 %v1603
    %3775 = vmatpush.bf16.msra.mxu0 %v1595
    %3776 = vmatpush.bf16.msra.mxu0 %v1587
    %3777 = vmatpush.bf16.msra.mxu0 %v1579
    %3778 = vmatpush.bf16.msra.mxu0 %v1571
    %3779 = vmatpush.bf16.msra.mxu0 %v1563
    %3780 = vmatpush.bf16.msra.mxu0 %v1555
    %3781 = vmatpush.bf16.msra.mxu0 %v1547
    %3782 = vmatmul.bf16.gmra.mxu0 %v3569
    %v3783 = vpop.f32.mrf.mxu0
    %v3784 = vadd.f32 %v3771, %v3783
    %v3785 = vpop.f32.mrf.mxu0
    %3786 = vdwg.mxu0
    %s3787 = scalar_lea.vmem [#allocation6], 128
    %v3788 = vld [vmem:[%s3787] sm:$0xff]
    %v3789 = vld [vmem:[%s3787 + $0x8] sm:$0xff]
    %v3790 = vld [vmem:[%s3787 + $0x10] sm:$0xff]
    %v3791 = vld [vmem:[%s3787 + $0x18] sm:$0xff]
    %v3792 = vld [vmem:[%s3787 + $0x20] sm:$0xff]
    %v3793 = vld [vmem:[%s3787 + $0x28] sm:$0xff]
    %v3794 = vld [vmem:[%s3787 + $0x30] sm:$0xff]
    %v3795 = vld [vmem:[%s3787 + $0x38] sm:$0xff]
    %v3796 = vadd.f32 %v3602, %v3788
    %v3797 = vadd.f32 %v3628, %v3789
    %v3798 = vadd.f32 %v3654, %v3790
    %v3799 = vadd.f32 %v3680, %v3791
    %v3800 = vadd.f32 %v3706, %v3792
    %v3801 = vadd.f32 %v3732, %v3793
    %v3802 = vadd.f32 %v3758, %v3794
    %v3803 = vadd.f32 %v3784, %v3795
    %v3804 = vxor.u32 %v3796, 2147483648
    %v3805 = vxor.u32 %v3797, 2147483648
    %v3806 = vmul.f32 %v3804, 1.442695
    %v3807 = vpow.pop %v3806
    %v3808 = vmul.f32 %v3805, 1.442695
    %v3809 = vpow.pop %v3808
    %v3810 = vadd.f32 %v3807, 1.0
    %v3811 = vadd.f32 %v3809, 1.0
    %v3812 = vrcp.pop %v3810
    %v3813 = vmul.f32 %v3810, %v3812
    %v3814 = vsub.f32 1.0, %v3813
    %v3815 = vmul.f32 %v3812, %v3814
    %v3816 = vadd.f32 %v3812, %v3815
    %vm3817 = vweird.f32 %v3810
    %vm3818 = vweird.f32 %v3812
    %vm3819 = vmor %vm3817, %vm3818
    %v3820 = vsel %vm3819, %v3812, %v3816
    %v3821 = vand.u32 2147483647, %v3810
    %vm3822 = vcmp.eq.f32.partialorder %v3821, 8.507059e+37
    %v3823 = vand.u32 %v3810, 2147483648
    %v3824 = vor.u32 1.1754944e-38, %v3823
    %v3825 = vsel %vm3822, %v3824, %v3820
    %v3826 = vmul.f32 1.0, %v3825
    %v3827 = vrcp.pop %v3811
    %v3828 = vmul.f32 %v3811, %v3827
    %v3829 = vsub.f32 1.0, %v3828
    %v3830 = vmul.f32 %v3827, %v3829
    %v3831 = vadd.f32 %v3827, %v3830
    %vm3832 = vweird.f32 %v3811
    %vm3833 = vweird.f32 %v3827
    %vm3834 = vmor %vm3832, %vm3833
    %v3835 = vsel %vm3834, %v3827, %v3831
    %v3836 = vand.u32 2147483647, %v3811
    %vm3837 = vcmp.eq.f32.partialorder %v3836, 8.507059e+37
    %v3838 = vand.u32 %v3811, 2147483648
    %v3839 = vor.u32 1.1754944e-38, %v3838
    %v3840 = vsel %vm3837, %v3839, %v3835
    %v3841 = vmul.f32 1.0, %v3840
    %v3842 = vxor.u32 %v3798, 2147483648
    %v3843 = vxor.u32 %v3799, 2147483648
    %v3844 = vmul.f32 %v3842, 1.442695
    %v3845 = vpow.pop %v3844
    %v3846 = vmul.f32 %v3843, 1.442695
    %v3847 = vpow.pop %v3846
    %v3848 = vadd.f32 %v3845, 1.0
    %v3849 = vadd.f32 %v3847, 1.0
    %v3850 = vrcp.pop %v3848
    %v3851 = vmul.f32 %v3848, %v3850
    %v3852 = vsub.f32 1.0, %v3851
    %v3853 = vmul.f32 %v3850, %v3852
    %v3854 = vadd.f32 %v3850, %v3853
    %vm3855 = vweird.f32 %v3848
    %vm3856 = vweird.f32 %v3850
    %vm3857 = vmor %vm3855, %vm3856
    %v3858 = vsel %vm3857, %v3850, %v3854
    %v3859 = vand.u32 2147483647, %v3848
    %vm3860 = vcmp.eq.f32.partialorder %v3859, 8.507059e+37
    %v3861 = vand.u32 %v3848, 2147483648
    %v3862 = vor.u32 1.1754944e-38, %v3861
    %v3863 = vsel %vm3860, %v3862, %v3858
    %v3864 = vmul.f32 1.0, %v3863
    %v3865 = vrcp.pop %v3849
    %v3866 = vmul.f32 %v3849, %v3865
    %v3867 = vsub.f32 1.0, %v3866
    %v3868 = vmul.f32 %v3865, %v3867
    %v3869 = vadd.f32 %v3865, %v3868
    %vm3870 = vweird.f32 %v3849
    %vm3871 = vweird.f32 %v3865
    %vm3872 = vmor %vm3870, %vm3871
    %v3873 = vsel %vm3872, %v3865, %v3869
    %v3874 = vand.u32 2147483647, %v3849
    %vm3875 = vcmp.eq.f32.partialorder %v3874, 8.507059e+37
    %v3876 = vand.u32 %v3849, 2147483648
    %v3877 = vor.u32 1.1754944e-38, %v3876
    %v3878 = vsel %vm3875, %v3877, %v3873
    %v3879 = vmul.f32 1.0, %v3878
    %v3880 = vtanh.pop %v3800
    %v3881 = vtanh.pop %v3801
    %v3882 = vxor.u32 %v3802, 2147483648
    %v3883 = vxor.u32 %v3803, 2147483648
    %v3884 = vmul.f32 %v3882, 1.442695
    %v3885 = vpow.pop %v3884
    %v3886 = vmul.f32 %v3883, 1.442695
    %v3887 = vpow.pop %v3886
    %v3888 = vadd.f32 %v3885, 1.0
    %v3889 = vadd.f32 %v3887, 1.0
    %v3890 = vrcp.pop %v3888
    %v3891 = vmul.f32 %v3888, %v3890
    %v3892 = vsub.f32 1.0, %v3891
    %v3893 = vmul.f32 %v3890, %v3892
    %v3894 = vadd.f32 %v3890, %v3893
    %vm3895 = vweird.f32 %v3888
    %vm3896 = vweird.f32 %v3890
    %vm3897 = vmor %vm3895, %vm3896
    %v3898 = vsel %vm3897, %v3890, %v3894
    %v3899 = vand.u32 2147483647, %v3888
    %vm3900 = vcmp.eq.f32.partialorder %v3899, 8.507059e+37
    %v3901 = vand.u32 %v3888, 2147483648
    %v3902 = vor.u32 1.1754944e-38, %v3901
    %v3903 = vsel %vm3900, %v3902, %v3898
    %v3904 = vmul.f32 1.0, %v3903
    %v3905 = vrcp.pop %v3889
    %v3906 = vmul.f32 %v3889, %v3905
    %v3907 = vsub.f32 1.0, %v3906
    %v3908 = vmul.f32 %v3905, %v3907
    %v3909 = vadd.f32 %v3905, %v3908
    %vm3910 = vweird.f32 %v3889
    %vm3911 = vweird.f32 %v3905
    %vm3912 = vmor %vm3910, %vm3911
    %v3913 = vsel %vm3912, %v3905, %v3909
    %v3914 = vand.u32 2147483647, %v3889
    %vm3915 = vcmp.eq.f32.partialorder %v3914, 8.507059e+37
    %v3916 = vand.u32 %v3889, 2147483648
    %v3917 = vor.u32 1.1754944e-38, %v3916
    %v3918 = vsel %vm3915, %v3917, %v3913
    %v3919 = vmul.f32 1.0, %v3918
    %v3920 = vmul.f32 %v3864, %v3554
    %v3921 = vmul.f32 %v3879, %v3555
    %v3922 = vmul.f32 %v3826, %v3880
    %v3923 = vmul.f32 %v3841, %v3881
    %v3924 = vadd.f32 %v3920, %v3922
    %v3925 = vadd.f32 %v3921, %v3923
    %v3926 = vtanh.pop %v3924
    %v3927 = vtanh.pop %v3925
    %v3928 = vmul.f32 %v3904, %v3926
    %v3929 = vmul.f32 %v3919, %v3927
    %v3930 = vmul.u32 %v946, 5
    %v3931 = vmul.u32 %v947, 5
    %v3932 = vadd.s32 %v944, %v3930
    %v3933 = vadd.s32 %v945, %v3931
    %vm3934 = vcmp.eq.s32.totalorder %v2085, %v3932
    %vm3935 = vcmp.eq.s32.totalorder %v2085, %v3933
    %v3936 = vsel %vm3934, %v3928, %v3566
    %v3937 = vsel %vm3935, %v3929, %v3567
    %v3938 = vpack.c.bf16 %v3928, %v3928
    %v3939 = vpack.c.bf16 %v3929, %v3929
    %s3940 = scalar_lea.vmem [#allocation5], 384
    %v3941 = vld [vmem:[%s3940] sm:$0xff]
    %v3942 = vld [vmem:[%s3940 + $0x8] sm:$0xff]
    %v3943 = vld [vmem:[%s3940 + $0x10] sm:$0xff]
    %v3944 = vld [vmem:[%s3940 + $0x18] sm:$0xff]
    %v3945 = vld [vmem:[%s3940 + $0x20] sm:$0xff]
    %v3946 = vld [vmem:[%s3940 + $0x28] sm:$0xff]
    %v3947 = vld [vmem:[%s3940 + $0x30] sm:$0xff]
    %v3948 = vld [vmem:[%s3940 + $0x38] sm:$0xff]
    %3949 = vmatpush.bf16.msra.mxu0 %v1532
    %3950 = vmatpush.bf16.msra.mxu0 %v1524
    %3951 = vmatpush.bf16.msra.mxu0 %v1516
    %3952 = vmatpush.bf16.msra.mxu0 %v1508
    %3953 = vmatpush.bf16.msra.mxu0 %v1500
    %3954 = vmatpush.bf16.msra.mxu0 %v1492
    %3955 = vmatpush.bf16.msra.mxu0 %v1484
    %3956 = vmatpush.bf16.msra.mxu0 %v1476
    %3957 = vmatmul.bf16.gmra.mxu0 %v3938
    %v3958 = vpop.f32.mrf.mxu0
    %v3959 = vadd.f32 %v3941, %v3958
    %v3960 = vpop.f32.mrf.mxu0
    %3961 = vdwg.mxu0
    %3962 = vmatpush.bf16.msra.mxu0 %v1596
    %3963 = vmatpush.bf16.msra.mxu0 %v1588
    %3964 = vmatpush.bf16.msra.mxu0 %v1580
    %3965 = vmatpush.bf16.msra.mxu0 %v1572
    %3966 = vmatpush.bf16.msra.mxu0 %v1564
    %3967 = vmatpush.bf16.msra.mxu0 %v1556
    %3968 = vmatpush.bf16.msra.mxu0 %v1548
    %3969 = vmatpush.bf16.msra.mxu0 %v1540
    %3970 = vmatmul.bf16.gmra.mxu0 %v3939
    %v3971 = vpop.f32.mrf.mxu0
    %v3972 = vadd.f32 %v3959, %v3971
    %v3973 = vpop.f32.mrf.mxu0
    %3974 = vdwg.mxu0
    %3975 = vmatpush.bf16.msra.mxu0 %v1533
    %3976 = vmatpush.bf16.msra.mxu0 %v1525
    %3977 = vmatpush.bf16.msra.mxu0 %v1517
    %3978 = vmatpush.bf16.msra.mxu0 %v1509
    %3979 = vmatpush.bf16.msra.mxu0 %v1501
    %3980 = vmatpush.bf16.msra.mxu0 %v1493
    %3981 = vmatpush.bf16.msra.mxu0 %v1485
    %3982 = vmatpush.bf16.msra.mxu0 %v1477
    %3983 = vmatmul.bf16.gmra.mxu0 %v3938
    %v3984 = vpop.f32.mrf.mxu0
    %v3985 = vadd.f32 %v3942, %v3984
    %v3986 = vpop.f32.mrf.mxu0
    %3987 = vdwg.mxu0
    %3988 = vmatpush.bf16.msra.mxu0 %v1597
    %3989 = vmatpush.bf16.msra.mxu0 %v1589
    %3990 = vmatpush.bf16.msra.mxu0 %v1581
    %3991 = vmatpush.bf16.msra.mxu0 %v1573
    %3992 = vmatpush.bf16.msra.mxu0 %v1565
    %3993 = vmatpush.bf16.msra.mxu0 %v1557
    %3994 = vmatpush.bf16.msra.mxu0 %v1549
    %3995 = vmatpush.bf16.msra.mxu0 %v1541
    %3996 = vmatmul.bf16.gmra.mxu0 %v3939
    %v3997 = vpop.f32.mrf.mxu0
    %v3998 = vadd.f32 %v3985, %v3997
    %v3999 = vpop.f32.mrf.mxu0
    %4000 = vdwg.mxu0
    %4001 = vmatpush.bf16.msra.mxu0 %v1534
    %4002 = vmatpush.bf16.msra.mxu0 %v1526
    %4003 = vmatpush.bf16.msra.mxu0 %v1518
    %4004 = vmatpush.bf16.msra.mxu0 %v1510
    %4005 = vmatpush.bf16.msra.mxu0 %v1502
    %4006 = vmatpush.bf16.msra.mxu0 %v1494
    %4007 = vmatpush.bf16.msra.mxu0 %v1486
    %4008 = vmatpush.bf16.msra.mxu0 %v1478
    %4009 = vmatmul.bf16.gmra.mxu0 %v3938
    %v4010 = vpop.f32.mrf.mxu0
    %v4011 = vadd.f32 %v3943, %v4010
    %v4012 = vpop.f32.mrf.mxu0
    %4013 = vdwg.mxu0
    %4014 = vmatpush.bf16.msra.mxu0 %v1598
    %4015 = vmatpush.bf16.msra.mxu0 %v1590
    %4016 = vmatpush.bf16.msra.mxu0 %v1582
    %4017 = vmatpush.bf16.msra.mxu0 %v1574
    %4018 = vmatpush.bf16.msra.mxu0 %v1566
    %4019 = vmatpush.bf16.msra.mxu0 %v1558
    %4020 = vmatpush.bf16.msra.mxu0 %v1550
    %4021 = vmatpush.bf16.msra.mxu0 %v1542
    %4022 = vmatmul.bf16.gmra.mxu0 %v3939
    %v4023 = vpop.f32.mrf.mxu0
    %v4024 = vadd.f32 %v4011, %v4023
    %v4025 = vpop.f32.mrf.mxu0
    %4026 = vdwg.mxu0
    %4027 = vmatpush.bf16.msra.mxu0 %v1535
    %4028 = vmatpush.bf16.msra.mxu0 %v1527
    %4029 = vmatpush.bf16.msra.mxu0 %v1519
    %4030 = vmatpush.bf16.msra.mxu0 %v1511
    %4031 = vmatpush.bf16.msra.mxu0 %v1503
    %4032 = vmatpush.bf16.msra.mxu0 %v1495
    %4033 = vmatpush.bf16.msra.mxu0 %v1487
    %4034 = vmatpush.bf16.msra.mxu0 %v1479
    %4035 = vmatmul.bf16.gmra.mxu0 %v3938
    %v4036 = vpop.f32.mrf.mxu0
    %v4037 = vadd.f32 %v3944, %v4036
    %v4038 = vpop.f32.mrf.mxu0
    %4039 = vdwg.mxu0
    %4040 = vmatpush.bf16.msra.mxu0 %v1599
    %4041 = vmatpush.bf16.msra.mxu0 %v1591
    %4042 = vmatpush.bf16.msra.mxu0 %v1583
    %4043 = vmatpush.bf16.msra.mxu0 %v1575
    %4044 = vmatpush.bf16.msra.mxu0 %v1567
    %4045 = vmatpush.bf16.msra.mxu0 %v1559
    %4046 = vmatpush.bf16.msra.mxu0 %v1551
    %4047 = vmatpush.bf16.msra.mxu0 %v1543
    %4048 = vmatmul.bf16.gmra.mxu0 %v3939
    %v4049 = vpop.f32.mrf.mxu0
    %v4050 = vadd.f32 %v4037, %v4049
    %v4051 = vpop.f32.mrf.mxu0
    %4052 = vdwg.mxu0
    %4053 = vmatpush.bf16.msra.mxu0 %v1536
    %4054 = vmatpush.bf16.msra.mxu0 %v1528
    %4055 = vmatpush.bf16.msra.mxu0 %v1520
    %4056 = vmatpush.bf16.msra.mxu0 %v1512
    %4057 = vmatpush.bf16.msra.mxu0 %v1504
    %4058 = vmatpush.bf16.msra.mxu0 %v1496
    %4059 = vmatpush.bf16.msra.mxu0 %v1488
    %4060 = vmatpush.bf16.msra.mxu0 %v1480
    %4061 = vmatmul.bf16.gmra.mxu0 %v3938
    %v4062 = vpop.f32.mrf.mxu0
    %v4063 = vadd.f32 %v3945, %v4062
    %v4064 = vpop.f32.mrf.mxu0
    %4065 = vdwg.mxu0
    %4066 = vmatpush.bf16.msra.mxu0 %v1600
    %4067 = vmatpush.bf16.msra.mxu0 %v1592
    %4068 = vmatpush.bf16.msra.mxu0 %v1584
    %4069 = vmatpush.bf16.msra.mxu0 %v1576
    %4070 = vmatpush.bf16.msra.mxu0 %v1568
    %4071 = vmatpush.bf16.msra.mxu0 %v1560
    %4072 = vmatpush.bf16.msra.mxu0 %v1552
    %4073 = vmatpush.bf16.msra.mxu0 %v1544
    %4074 = vmatmul.bf16.gmra.mxu0 %v3939
    %v4075 = vpop.f32.mrf.mxu0
    %v4076 = vadd.f32 %v4063, %v4075
    %v4077 = vpop.f32.mrf.mxu0
    %4078 = vdwg.mxu0
    %4079 = vmatpush.bf16.msra.mxu0 %v1537
    %4080 = vmatpush.bf16.msra.mxu0 %v1529
    %4081 = vmatpush.bf16.msra.mxu0 %v1521
    %4082 = vmatpush.bf16.msra.mxu0 %v1513
    %4083 = vmatpush.bf16.msra.mxu0 %v1505
    %4084 = vmatpush.bf16.msra.mxu0 %v1497
    %4085 = vmatpush.bf16.msra.mxu0 %v1489
    %4086 = vmatpush.bf16.msra.mxu0 %v1481
    %4087 = vmatmul.bf16.gmra.mxu0 %v3938
    %v4088 = vpop.f32.mrf.mxu0
    %v4089 = vadd.f32 %v3946, %v4088
    %v4090 = vpop.f32.mrf.mxu0
    %4091 = vdwg.mxu0
    %4092 = vmatpush.bf16.msra.mxu0 %v1601
    %4093 = vmatpush.bf16.msra.mxu0 %v1593
    %4094 = vmatpush.bf16.msra.mxu0 %v1585
    %4095 = vmatpush.bf16.msra.mxu0 %v1577
    %4096 = vmatpush.bf16.msra.mxu0 %v1569
    %4097 = vmatpush.bf16.msra.mxu0 %v1561
    %4098 = vmatpush.bf16.msra.mxu0 %v1553
    %4099 = vmatpush.bf16.msra.mxu0 %v1545
    %4100 = vmatmul.bf16.gmra.mxu0 %v3939
    %v4101 = vpop.f32.mrf.mxu0
    %v4102 = vadd.f32 %v4089, %v4101
    %v4103 = vpop.f32.mrf.mxu0
    %4104 = vdwg.mxu0
    %4105 = vmatpush.bf16.msra.mxu0 %v1538
    %4106 = vmatpush.bf16.msra.mxu0 %v1530
    %4107 = vmatpush.bf16.msra.mxu0 %v1522
    %4108 = vmatpush.bf16.msra.mxu0 %v1514
    %4109 = vmatpush.bf16.msra.mxu0 %v1506
    %4110 = vmatpush.bf16.msra.mxu0 %v1498
    %4111 = vmatpush.bf16.msra.mxu0 %v1490
    %4112 = vmatpush.bf16.msra.mxu0 %v1482
    %4113 = vmatmul.bf16.gmra.mxu0 %v3938
    %v4114 = vpop.f32.mrf.mxu0
    %v4115 = vadd.f32 %v3947, %v4114
    %v4116 = vpop.f32.mrf.mxu0
    %4117 = vdwg.mxu0
    %4118 = vmatpush.bf16.msra.mxu0 %v1602
    %4119 = vmatpush.bf16.msra.mxu0 %v1594
    %4120 = vmatpush.bf16.msra.mxu0 %v1586
    %4121 = vmatpush.bf16.msra.mxu0 %v1578
    %4122 = vmatpush.bf16.msra.mxu0 %v1570
    %4123 = vmatpush.bf16.msra.mxu0 %v1562
    %4124 = vmatpush.bf16.msra.mxu0 %v1554
    %4125 = vmatpush.bf16.msra.mxu0 %v1546
    %4126 = vmatmul.bf16.gmra.mxu0 %v3939
    %v4127 = vpop.f32.mrf.mxu0
    %v4128 = vadd.f32 %v4115, %v4127
    %v4129 = vpop.f32.mrf.mxu0
    %4130 = vdwg.mxu0
    %4131 = vmatpush.bf16.msra.mxu0 %v1539
    %4132 = vmatpush.bf16.msra.mxu0 %v1531
    %4133 = vmatpush.bf16.msra.mxu0 %v1523
    %4134 = vmatpush.bf16.msra.mxu0 %v1515
    %4135 = vmatpush.bf16.msra.mxu0 %v1507
    %4136 = vmatpush.bf16.msra.mxu0 %v1499
    %4137 = vmatpush.bf16.msra.mxu0 %v1491
    %4138 = vmatpush.bf16.msra.mxu0 %v1483
    %4139 = vmatmul.bf16.gmra.mxu0 %v3938
    %v4140 = vpop.f32.mrf.mxu0
    %v4141 = vadd.f32 %v3948, %v4140
    %v4142 = vpop.f32.mrf.mxu0
    %4143 = vdwg.mxu0
    %4144 = vmatpush.bf16.msra.mxu0 %v1603
    %4145 = vmatpush.bf16.msra.mxu0 %v1595
    %4146 = vmatpush.bf16.msra.mxu0 %v1587
    %4147 = vmatpush.bf16.msra.mxu0 %v1579
    %4148 = vmatpush.bf16.msra.mxu0 %v1571
    %4149 = vmatpush.bf16.msra.mxu0 %v1563
    %4150 = vmatpush.bf16.msra.mxu0 %v1555
    %4151 = vmatpush.bf16.msra.mxu0 %v1547
    %4152 = vmatmul.bf16.gmra.mxu0 %v3939
    %v4153 = vpop.f32.mrf.mxu0
    %v4154 = vadd.f32 %v4141, %v4153
    %v4155 = vpop.f32.mrf.mxu0
    %4156 = vdwg.mxu0
    %s4157 = scalar_lea.vmem [#allocation6], 64
    %v4158 = vld [vmem:[%s4157] sm:$0xff]
    %v4159 = vld [vmem:[%s4157 + $0x8] sm:$0xff]
    %v4160 = vld [vmem:[%s4157 + $0x10] sm:$0xff]
    %v4161 = vld [vmem:[%s4157 + $0x18] sm:$0xff]
    %v4162 = vld [vmem:[%s4157 + $0x20] sm:$0xff]
    %v4163 = vld [vmem:[%s4157 + $0x28] sm:$0xff]
    %v4164 = vld [vmem:[%s4157 + $0x30] sm:$0xff]
    %v4165 = vld [vmem:[%s4157 + $0x38] sm:$0xff]
    %v4166 = vadd.f32 %v3972, %v4158
    %v4167 = vadd.f32 %v3998, %v4159
    %v4168 = vadd.f32 %v4024, %v4160
    %v4169 = vadd.f32 %v4050, %v4161
    %v4170 = vadd.f32 %v4076, %v4162
    %v4171 = vadd.f32 %v4102, %v4163
    %v4172 = vadd.f32 %v4128, %v4164
    %v4173 = vadd.f32 %v4154, %v4165
    %v4174 = vxor.u32 %v4166, 2147483648
    %v4175 = vxor.u32 %v4167, 2147483648
    %v4176 = vmul.f32 %v4174, 1.442695
    %v4177 = vpow.pop %v4176
    %v4178 = vmul.f32 %v4175, 1.442695
    %v4179 = vpow.pop %v4178
    %v4180 = vadd.f32 %v4177, 1.0
    %v4181 = vadd.f32 %v4179, 1.0
    %v4182 = vrcp.pop %v4180
    %v4183 = vmul.f32 %v4180, %v4182
    %v4184 = vsub.f32 1.0, %v4183
    %v4185 = vmul.f32 %v4182, %v4184
    %v4186 = vadd.f32 %v4182, %v4185
    %vm4187 = vweird.f32 %v4180
    %vm4188 = vweird.f32 %v4182
    %vm4189 = vmor %vm4187, %vm4188
    %v4190 = vsel %vm4189, %v4182, %v4186
    %v4191 = vand.u32 2147483647, %v4180
    %vm4192 = vcmp.eq.f32.partialorder %v4191, 8.507059e+37
    %v4193 = vand.u32 %v4180, 2147483648
    %v4194 = vor.u32 1.1754944e-38, %v4193
    %v4195 = vsel %vm4192, %v4194, %v4190
    %v4196 = vmul.f32 1.0, %v4195
    %v4197 = vrcp.pop %v4181
    %v4198 = vmul.f32 %v4181, %v4197
    %v4199 = vsub.f32 1.0, %v4198
    %v4200 = vmul.f32 %v4197, %v4199
    %v4201 = vadd.f32 %v4197, %v4200
    %vm4202 = vweird.f32 %v4181
    %vm4203 = vweird.f32 %v4197
    %vm4204 = vmor %vm4202, %vm4203
    %v4205 = vsel %vm4204, %v4197, %v4201
    %v4206 = vand.u32 2147483647, %v4181
    %vm4207 = vcmp.eq.f32.partialorder %v4206, 8.507059e+37
    %v4208 = vand.u32 %v4181, 2147483648
    %v4209 = vor.u32 1.1754944e-38, %v4208
    %v4210 = vsel %vm4207, %v4209, %v4205
    %v4211 = vmul.f32 1.0, %v4210
    %v4212 = vxor.u32 %v4168, 2147483648
    %v4213 = vxor.u32 %v4169, 2147483648
    %v4214 = vmul.f32 %v4212, 1.442695
    %v4215 = vpow.pop %v4214
    %v4216 = vmul.f32 %v4213, 1.442695
    %v4217 = vpow.pop %v4216
    %v4218 = vadd.f32 %v4215, 1.0
    %v4219 = vadd.f32 %v4217, 1.0
    %v4220 = vrcp.pop %v4218
    %v4221 = vmul.f32 %v4218, %v4220
    %v4222 = vsub.f32 1.0, %v4221
    %v4223 = vmul.f32 %v4220, %v4222
    %v4224 = vadd.f32 %v4220, %v4223
    %vm4225 = vweird.f32 %v4218
    %vm4226 = vweird.f32 %v4220
    %vm4227 = vmor %vm4225, %vm4226
    %v4228 = vsel %vm4227, %v4220, %v4224
    %v4229 = vand.u32 2147483647, %v4218
    %vm4230 = vcmp.eq.f32.partialorder %v4229, 8.507059e+37
    %v4231 = vand.u32 %v4218, 2147483648
    %v4232 = vor.u32 1.1754944e-38, %v4231
    %v4233 = vsel %vm4230, %v4232, %v4228
    %v4234 = vmul.f32 1.0, %v4233
    %v4235 = vrcp.pop %v4219
    %v4236 = vmul.f32 %v4219, %v4235
    %v4237 = vsub.f32 1.0, %v4236
    %v4238 = vmul.f32 %v4235, %v4237
    %v4239 = vadd.f32 %v4235, %v4238
    %vm4240 = vweird.f32 %v4219
    %vm4241 = vweird.f32 %v4235
    %vm4242 = vmor %vm4240, %vm4241
    %v4243 = vsel %vm4242, %v4235, %v4239
    %v4244 = vand.u32 2147483647, %v4219
    %vm4245 = vcmp.eq.f32.partialorder %v4244, 8.507059e+37
    %v4246 = vand.u32 %v4219, 2147483648
    %v4247 = vor.u32 1.1754944e-38, %v4246
    %v4248 = vsel %vm4245, %v4247, %v4243
    %v4249 = vmul.f32 1.0, %v4248
    %v4250 = vtanh.pop %v4170
    %v4251 = vtanh.pop %v4171
    %v4252 = vxor.u32 %v4172, 2147483648
    %v4253 = vxor.u32 %v4173, 2147483648
    %v4254 = vmul.f32 %v4252, 1.442695
    %v4255 = vpow.pop %v4254
    %v4256 = vmul.f32 %v4253, 1.442695
    %v4257 = vpow.pop %v4256
    %v4258 = vadd.f32 %v4255, 1.0
    %v4259 = vadd.f32 %v4257, 1.0
    %v4260 = vrcp.pop %v4258
    %v4261 = vmul.f32 %v4258, %v4260
    %v4262 = vsub.f32 1.0, %v4261
    %v4263 = vmul.f32 %v4260, %v4262
    %v4264 = vadd.f32 %v4260, %v4263
    %vm4265 = vweird.f32 %v4258
    %vm4266 = vweird.f32 %v4260
    %vm4267 = vmor %vm4265, %vm4266
    %v4268 = vsel %vm4267, %v4260, %v4264
    %v4269 = vand.u32 2147483647, %v4258
    %vm4270 = vcmp.eq.f32.partialorder %v4269, 8.507059e+37
    %v4271 = vand.u32 %v4258, 2147483648
    %v4272 = vor.u32 1.1754944e-38, %v4271
    %v4273 = vsel %vm4270, %v4272, %v4268
    %v4274 = vmul.f32 1.0, %v4273
    %v4275 = vrcp.pop %v4259
    %v4276 = vmul.f32 %v4259, %v4275
    %v4277 = vsub.f32 1.0, %v4276
    %v4278 = vmul.f32 %v4275, %v4277
    %v4279 = vadd.f32 %v4275, %v4278
    %vm4280 = vweird.f32 %v4259
    %vm4281 = vweird.f32 %v4275
    %vm4282 = vmor %vm4280, %vm4281
    %v4283 = vsel %vm4282, %v4275, %v4279
    %v4284 = vand.u32 2147483647, %v4259
    %vm4285 = vcmp.eq.f32.partialorder %v4284, 8.507059e+37
    %v4286 = vand.u32 %v4259, 2147483648
    %v4287 = vor.u32 1.1754944e-38, %v4286
    %v4288 = vsel %vm4285, %v4287, %v4283
    %v4289 = vmul.f32 1.0, %v4288
    %v4290 = vmul.f32 %v4234, %v3924
    %v4291 = vmul.f32 %v4249, %v3925
    %v4292 = vmul.f32 %v4196, %v4250
    %v4293 = vmul.f32 %v4211, %v4251
    %v4294 = vadd.f32 %v4290, %v4292
    %v4295 = vadd.f32 %v4291, %v4293
    %v4296 = vtanh.pop %v4294
    %v4297 = vtanh.pop %v4295
    %v4298 = vmul.f32 %v4274, %v4296
    %v4299 = vmul.f32 %v4289, %v4297
    %v4300 = vmul.u32 %v946, 6
    %v4301 = vmul.u32 %v947, 6
    %v4302 = vadd.s32 %v944, %v4300
    %v4303 = vadd.s32 %v945, %v4301
    %vm4304 = vcmp.eq.s32.totalorder %v2085, %v4302
    %vm4305 = vcmp.eq.s32.totalorder %v2085, %v4303
    %v4306 = vsel %vm4304, %v4298, %v3936
    %v4307 = vsel %vm4305, %v4299, %v3937
    %v4308 = vpack.c.bf16 %v4298, %v4298
    %v4309 = vpack.c.bf16 %v4299, %v4299
    %s4310 = scalar_lea.vmem [#allocation5], 448
    %v4311 = vld [vmem:[%s4310] sm:$0xff]
    %v4312 = vld [vmem:[%s4310 + $0x8] sm:$0xff]
    %v4313 = vld [vmem:[%s4310 + $0x10] sm:$0xff]
    %v4314 = vld [vmem:[%s4310 + $0x18] sm:$0xff]
    %v4315 = vld [vmem:[%s4310 + $0x20] sm:$0xff]
    %v4316 = vld [vmem:[%s4310 + $0x28] sm:$0xff]
    %v4317 = vld [vmem:[%s4310 + $0x30] sm:$0xff]
    %v4318 = vld [vmem:[%s4310 + $0x38] sm:$0xff]
    %4319 = vmatpush.bf16.msra.mxu0 %v1532
    %4320 = vmatpush.bf16.msra.mxu0 %v1524
    %4321 = vmatpush.bf16.msra.mxu0 %v1516
    %4322 = vmatpush.bf16.msra.mxu0 %v1508
    %4323 = vmatpush.bf16.msra.mxu0 %v1500
    %4324 = vmatpush.bf16.msra.mxu0 %v1492
    %4325 = vmatpush.bf16.msra.mxu0 %v1484
    %4326 = vmatpush.bf16.msra.mxu0 %v1476
    %4327 = vmatmul.bf16.gmra.mxu0 %v4308
    %v4328 = vpop.f32.mrf.mxu0
    %v4329 = vadd.f32 %v4311, %v4328
    %v4330 = vpop.f32.mrf.mxu0
    %4331 = vdwg.mxu0
    %4332 = vmatpush.bf16.msra.mxu0 %v1596
    %4333 = vmatpush.bf16.msra.mxu0 %v1588
    %4334 = vmatpush.bf16.msra.mxu0 %v1580
    %4335 = vmatpush.bf16.msra.mxu0 %v1572
    %4336 = vmatpush.bf16.msra.mxu0 %v1564
    %4337 = vmatpush.bf16.msra.mxu0 %v1556
    %4338 = vmatpush.bf16.msra.mxu0 %v1548
    %4339 = vmatpush.bf16.msra.mxu0 %v1540
    %4340 = vmatmul.bf16.gmra.mxu0 %v4309
    %v4341 = vpop.f32.mrf.mxu0
    %v4342 = vadd.f32 %v4329, %v4341
    %v4343 = vpop.f32.mrf.mxu0
    %4344 = vdwg.mxu0
    %4345 = vmatpush.bf16.msra.mxu0 %v1533
    %4346 = vmatpush.bf16.msra.mxu0 %v1525
    %4347 = vmatpush.bf16.msra.mxu0 %v1517
    %4348 = vmatpush.bf16.msra.mxu0 %v1509
    %4349 = vmatpush.bf16.msra.mxu0 %v1501
    %4350 = vmatpush.bf16.msra.mxu0 %v1493
    %4351 = vmatpush.bf16.msra.mxu0 %v1485
    %4352 = vmatpush.bf16.msra.mxu0 %v1477
    %4353 = vmatmul.bf16.gmra.mxu0 %v4308
    %v4354 = vpop.f32.mrf.mxu0
    %v4355 = vadd.f32 %v4312, %v4354
    %v4356 = vpop.f32.mrf.mxu0
    %4357 = vdwg.mxu0
    %4358 = vmatpush.bf16.msra.mxu0 %v1597
    %4359 = vmatpush.bf16.msra.mxu0 %v1589
    %4360 = vmatpush.bf16.msra.mxu0 %v1581
    %4361 = vmatpush.bf16.msra.mxu0 %v1573
    %4362 = vmatpush.bf16.msra.mxu0 %v1565
    %4363 = vmatpush.bf16.msra.mxu0 %v1557
    %4364 = vmatpush.bf16.msra.mxu0 %v1549
    %4365 = vmatpush.bf16.msra.mxu0 %v1541
    %4366 = vmatmul.bf16.gmra.mxu0 %v4309
    %v4367 = vpop.f32.mrf.mxu0
    %v4368 = vadd.f32 %v4355, %v4367
    %v4369 = vpop.f32.mrf.mxu0
    %4370 = vdwg.mxu0
    %4371 = vmatpush.bf16.msra.mxu0 %v1534
    %4372 = vmatpush.bf16.msra.mxu0 %v1526
    %4373 = vmatpush.bf16.msra.mxu0 %v1518
    %4374 = vmatpush.bf16.msra.mxu0 %v1510
    %4375 = vmatpush.bf16.msra.mxu0 %v1502
    %4376 = vmatpush.bf16.msra.mxu0 %v1494
    %4377 = vmatpush.bf16.msra.mxu0 %v1486
    %4378 = vmatpush.bf16.msra.mxu0 %v1478
    %4379 = vmatmul.bf16.gmra.mxu0 %v4308
    %v4380 = vpop.f32.mrf.mxu0
    %v4381 = vadd.f32 %v4313, %v4380
    %v4382 = vpop.f32.mrf.mxu0
    %4383 = vdwg.mxu0
    %4384 = vmatpush.bf16.msra.mxu0 %v1598
    %4385 = vmatpush.bf16.msra.mxu0 %v1590
    %4386 = vmatpush.bf16.msra.mxu0 %v1582
    %4387 = vmatpush.bf16.msra.mxu0 %v1574
    %4388 = vmatpush.bf16.msra.mxu0 %v1566
    %4389 = vmatpush.bf16.msra.mxu0 %v1558
    %4390 = vmatpush.bf16.msra.mxu0 %v1550
    %4391 = vmatpush.bf16.msra.mxu0 %v1542
    %4392 = vmatmul.bf16.gmra.mxu0 %v4309
    %v4393 = vpop.f32.mrf.mxu0
    %v4394 = vadd.f32 %v4381, %v4393
    %v4395 = vpop.f32.mrf.mxu0
    %4396 = vdwg.mxu0
    %4397 = vmatpush.bf16.msra.mxu0 %v1535
    %4398 = vmatpush.bf16.msra.mxu0 %v1527
    %4399 = vmatpush.bf16.msra.mxu0 %v1519
    %4400 = vmatpush.bf16.msra.mxu0 %v1511
    %4401 = vmatpush.bf16.msra.mxu0 %v1503
    %4402 = vmatpush.bf16.msra.mxu0 %v1495
    %4403 = vmatpush.bf16.msra.mxu0 %v1487
    %4404 = vmatpush.bf16.msra.mxu0 %v1479
    %4405 = vmatmul.bf16.gmra.mxu0 %v4308
    %v4406 = vpop.f32.mrf.mxu0
    %v4407 = vadd.f32 %v4314, %v4406
    %v4408 = vpop.f32.mrf.mxu0
    %4409 = vdwg.mxu0
    %4410 = vmatpush.bf16.msra.mxu0 %v1599
    %4411 = vmatpush.bf16.msra.mxu0 %v1591
    %4412 = vmatpush.bf16.msra.mxu0 %v1583
    %4413 = vmatpush.bf16.msra.mxu0 %v1575
    %4414 = vmatpush.bf16.msra.mxu0 %v1567
    %4415 = vmatpush.bf16.msra.mxu0 %v1559
    %4416 = vmatpush.bf16.msra.mxu0 %v1551
    %4417 = vmatpush.bf16.msra.mxu0 %v1543
    %4418 = vmatmul.bf16.gmra.mxu0 %v4309
    %v4419 = vpop.f32.mrf.mxu0
    %v4420 = vadd.f32 %v4407, %v4419
    %v4421 = vpop.f32.mrf.mxu0
    %4422 = vdwg.mxu0
    %4423 = vmatpush.bf16.msra.mxu0 %v1536
    %4424 = vmatpush.bf16.msra.mxu0 %v1528
    %4425 = vmatpush.bf16.msra.mxu0 %v1520
    %4426 = vmatpush.bf16.msra.mxu0 %v1512
    %4427 = vmatpush.bf16.msra.mxu0 %v1504
    %4428 = vmatpush.bf16.msra.mxu0 %v1496
    %4429 = vmatpush.bf16.msra.mxu0 %v1488
    %4430 = vmatpush.bf16.msra.mxu0 %v1480
    %4431 = vmatmul.bf16.gmra.mxu0 %v4308
    %v4432 = vpop.f32.mrf.mxu0
    %v4433 = vadd.f32 %v4315, %v4432
    %v4434 = vpop.f32.mrf.mxu0
    %4435 = vdwg.mxu0
    %4436 = vmatpush.bf16.msra.mxu0 %v1600
    %4437 = vmatpush.bf16.msra.mxu0 %v1592
    %4438 = vmatpush.bf16.msra.mxu0 %v1584
    %4439 = vmatpush.bf16.msra.mxu0 %v1576
    %4440 = vmatpush.bf16.msra.mxu0 %v1568
    %4441 = vmatpush.bf16.msra.mxu0 %v1560
    %4442 = vmatpush.bf16.msra.mxu0 %v1552
    %4443 = vmatpush.bf16.msra.mxu0 %v1544
    %4444 = vmatmul.bf16.gmra.mxu0 %v4309
    %v4445 = vpop.f32.mrf.mxu0
    %v4446 = vadd.f32 %v4433, %v4445
    %v4447 = vpop.f32.mrf.mxu0
    %4448 = vdwg.mxu0
    %4449 = vmatpush.bf16.msra.mxu0 %v1537
    %4450 = vmatpush.bf16.msra.mxu0 %v1529
    %4451 = vmatpush.bf16.msra.mxu0 %v1521
    %4452 = vmatpush.bf16.msra.mxu0 %v1513
    %4453 = vmatpush.bf16.msra.mxu0 %v1505
    %4454 = vmatpush.bf16.msra.mxu0 %v1497
    %4455 = vmatpush.bf16.msra.mxu0 %v1489
    %4456 = vmatpush.bf16.msra.mxu0 %v1481
    %4457 = vmatmul.bf16.gmra.mxu0 %v4308
    %v4458 = vpop.f32.mrf.mxu0
    %v4459 = vadd.f32 %v4316, %v4458
    %v4460 = vpop.f32.mrf.mxu0
    %4461 = vdwg.mxu0
    %4462 = vmatpush.bf16.msra.mxu0 %v1601
    %4463 = vmatpush.bf16.msra.mxu0 %v1593
    %4464 = vmatpush.bf16.msra.mxu0 %v1585
    %4465 = vmatpush.bf16.msra.mxu0 %v1577
    %4466 = vmatpush.bf16.msra.mxu0 %v1569
    %4467 = vmatpush.bf16.msra.mxu0 %v1561
    %4468 = vmatpush.bf16.msra.mxu0 %v1553
    %4469 = vmatpush.bf16.msra.mxu0 %v1545
    %4470 = vmatmul.bf16.gmra.mxu0 %v4309
    %v4471 = vpop.f32.mrf.mxu0
    %v4472 = vadd.f32 %v4459, %v4471
    %v4473 = vpop.f32.mrf.mxu0
    %4474 = vdwg.mxu0
    %4475 = vmatpush.bf16.msra.mxu0 %v1538
    %4476 = vmatpush.bf16.msra.mxu0 %v1530
    %4477 = vmatpush.bf16.msra.mxu0 %v1522
    %4478 = vmatpush.bf16.msra.mxu0 %v1514
    %4479 = vmatpush.bf16.msra.mxu0 %v1506
    %4480 = vmatpush.bf16.msra.mxu0 %v1498
    %4481 = vmatpush.bf16.msra.mxu0 %v1490
    %4482 = vmatpush.bf16.msra.mxu0 %v1482
    %4483 = vmatmul.bf16.gmra.mxu0 %v4308
    %v4484 = vpop.f32.mrf.mxu0
    %v4485 = vadd.f32 %v4317, %v4484
    %v4486 = vpop.f32.mrf.mxu0
    %4487 = vdwg.mxu0
    %4488 = vmatpush.bf16.msra.mxu0 %v1602
    %4489 = vmatpush.bf16.msra.mxu0 %v1594
    %4490 = vmatpush.bf16.msra.mxu0 %v1586
    %4491 = vmatpush.bf16.msra.mxu0 %v1578
    %4492 = vmatpush.bf16.msra.mxu0 %v1570
    %4493 = vmatpush.bf16.msra.mxu0 %v1562
    %4494 = vmatpush.bf16.msra.mxu0 %v1554
    %4495 = vmatpush.bf16.msra.mxu0 %v1546
    %4496 = vmatmul.bf16.gmra.mxu0 %v4309
    %v4497 = vpop.f32.mrf.mxu0
    %v4498 = vadd.f32 %v4485, %v4497
    %v4499 = vpop.f32.mrf.mxu0
    %4500 = vdwg.mxu0
    %4501 = vmatpush.bf16.msra.mxu0 %v1539
    %4502 = vmatpush.bf16.msra.mxu0 %v1531
    %4503 = vmatpush.bf16.msra.mxu0 %v1523
    %4504 = vmatpush.bf16.msra.mxu0 %v1515
    %4505 = vmatpush.bf16.msra.mxu0 %v1507
    %4506 = vmatpush.bf16.msra.mxu0 %v1499
    %4507 = vmatpush.bf16.msra.mxu0 %v1491
    %4508 = vmatpush.bf16.msra.mxu0 %v1483
    %4509 = vmatmul.bf16.gmra.mxu0 %v4308
    %v4510 = vpop.f32.mrf.mxu0
    %v4511 = vadd.f32 %v4318, %v4510
    %v4512 = vpop.f32.mrf.mxu0
    %4513 = vdwg.mxu0
    %4514 = vmatpush.bf16.msra.mxu0 %v1603
    %4515 = vmatpush.bf16.msra.mxu0 %v1595
    %4516 = vmatpush.bf16.msra.mxu0 %v1587
    %4517 = vmatpush.bf16.msra.mxu0 %v1579
    %4518 = vmatpush.bf16.msra.mxu0 %v1571
    %4519 = vmatpush.bf16.msra.mxu0 %v1563
    %4520 = vmatpush.bf16.msra.mxu0 %v1555
    %4521 = vmatpush.bf16.msra.mxu0 %v1547
    %4522 = vmatmul.bf16.gmra.mxu0 %v4309
    %v4523 = vpop.f32.mrf.mxu0
    %v4524 = vadd.f32 %v4511, %v4523
    %v4525 = vpop.f32.mrf.mxu0
    %4526 = vdwg.mxu0
    %v4527 = vld [vmem:[#allocation6] sm:$0xff]
    %v4528 = vld [vmem:[#allocation6 + $0x8] sm:$0xff]
    %v4529 = vld [vmem:[#allocation6 + $0x10] sm:$0xff]
    %v4530 = vld [vmem:[#allocation6 + $0x18] sm:$0xff]
    %v4531 = vld [vmem:[#allocation6 + $0x20] sm:$0xff]
    %v4532 = vld [vmem:[#allocation6 + $0x28] sm:$0xff]
    %v4533 = vld [vmem:[#allocation6 + $0x30] sm:$0xff]
    %v4534 = vld [vmem:[#allocation6 + $0x38] sm:$0xff]
    %v4535 = vadd.f32 %v4342, %v4527
    %v4536 = vadd.f32 %v4368, %v4528
    %v4537 = vadd.f32 %v4394, %v4529
    %v4538 = vadd.f32 %v4420, %v4530
    %v4539 = vadd.f32 %v4446, %v4531
    %v4540 = vadd.f32 %v4472, %v4532
    %v4541 = vadd.f32 %v4498, %v4533
    %v4542 = vadd.f32 %v4524, %v4534
    %v4543 = vxor.u32 %v4535, 2147483648
    %v4544 = vxor.u32 %v4536, 2147483648
    %v4545 = vmul.f32 %v4543, 1.442695
    %v4546 = vpow.pop %v4545
    %v4547 = vmul.f32 %v4544, 1.442695
    %v4548 = vpow.pop %v4547
    %v4549 = vadd.f32 %v4546, 1.0
    %v4550 = vadd.f32 %v4548, 1.0
    %v4551 = vrcp.pop %v4549
    %v4552 = vmul.f32 %v4549, %v4551
    %v4553 = vsub.f32 1.0, %v4552
    %v4554 = vmul.f32 %v4551, %v4553
    %v4555 = vadd.f32 %v4551, %v4554
    %vm4556 = vweird.f32 %v4549
    %vm4557 = vweird.f32 %v4551
    %vm4558 = vmor %vm4556, %vm4557
    %v4559 = vsel %vm4558, %v4551, %v4555
    %v4560 = vand.u32 2147483647, %v4549
    %vm4561 = vcmp.eq.f32.partialorder %v4560, 8.507059e+37
    %v4562 = vand.u32 %v4549, 2147483648
    %v4563 = vor.u32 1.1754944e-38, %v4562
    %v4564 = vsel %vm4561, %v4563, %v4559
    %v4565 = vmul.f32 1.0, %v4564
    %v4566 = vrcp.pop %v4550
    %v4567 = vmul.f32 %v4550, %v4566
    %v4568 = vsub.f32 1.0, %v4567
    %v4569 = vmul.f32 %v4566, %v4568
    %v4570 = vadd.f32 %v4566, %v4569
    %vm4571 = vweird.f32 %v4550
    %vm4572 = vweird.f32 %v4566
    %vm4573 = vmor %vm4571, %vm4572
    %v4574 = vsel %vm4573, %v4566, %v4570
    %v4575 = vand.u32 2147483647, %v4550
    %vm4576 = vcmp.eq.f32.partialorder %v4575, 8.507059e+37
    %v4577 = vand.u32 %v4550, 2147483648
    %v4578 = vor.u32 1.1754944e-38, %v4577
    %v4579 = vsel %vm4576, %v4578, %v4574
    %v4580 = vmul.f32 1.0, %v4579
    %v4581 = vxor.u32 %v4537, 2147483648
    %v4582 = vxor.u32 %v4538, 2147483648
    %v4583 = vmul.f32 %v4581, 1.442695
    %v4584 = vpow.pop %v4583
    %v4585 = vmul.f32 %v4582, 1.442695
    %v4586 = vpow.pop %v4585
    %v4587 = vadd.f32 %v4584, 1.0
    %v4588 = vadd.f32 %v4586, 1.0
    %v4589 = vrcp.pop %v4587
    %v4590 = vmul.f32 %v4587, %v4589
    %v4591 = vsub.f32 1.0, %v4590
    %v4592 = vmul.f32 %v4589, %v4591
    %v4593 = vadd.f32 %v4589, %v4592
    %vm4594 = vweird.f32 %v4587
    %vm4595 = vweird.f32 %v4589
    %vm4596 = vmor %vm4594, %vm4595
    %v4597 = vsel %vm4596, %v4589, %v4593
    %v4598 = vand.u32 2147483647, %v4587
    %vm4599 = vcmp.eq.f32.partialorder %v4598, 8.507059e+37
    %v4600 = vand.u32 %v4587, 2147483648
    %v4601 = vor.u32 1.1754944e-38, %v4600
    %v4602 = vsel %vm4599, %v4601, %v4597
    %v4603 = vmul.f32 1.0, %v4602
    %v4604 = vrcp.pop %v4588
    %v4605 = vmul.f32 %v4588, %v4604
    %v4606 = vsub.f32 1.0, %v4605
    %v4607 = vmul.f32 %v4604, %v4606
    %v4608 = vadd.f32 %v4604, %v4607
    %vm4609 = vweird.f32 %v4588
    %vm4610 = vweird.f32 %v4604
    %vm4611 = vmor %vm4609, %vm4610
    %v4612 = vsel %vm4611, %v4604, %v4608
    %v4613 = vand.u32 2147483647, %v4588
    %vm4614 = vcmp.eq.f32.partialorder %v4613, 8.507059e+37
    %v4615 = vand.u32 %v4588, 2147483648
    %v4616 = vor.u32 1.1754944e-38, %v4615
    %v4617 = vsel %vm4614, %v4616, %v4612
    %v4618 = vmul.f32 1.0, %v4617
    %v4619 = vtanh.pop %v4539
    %v4620 = vtanh.pop %v4540
    %v4621 = vxor.u32 %v4541, 2147483648
    %v4622 = vxor.u32 %v4542, 2147483648
    %v4623 = vmul.f32 %v4621, 1.442695
    %v4624 = vpow.pop %v4623
    %v4625 = vmul.f32 %v4622, 1.442695
    %v4626 = vpow.pop %v4625
    %v4627 = vadd.f32 %v4624, 1.0
    %v4628 = vadd.f32 %v4626, 1.0
    %v4629 = vrcp.pop %v4627
    %v4630 = vmul.f32 %v4627, %v4629
    %v4631 = vsub.f32 1.0, %v4630
    %v4632 = vmul.f32 %v4629, %v4631
    %v4633 = vadd.f32 %v4629, %v4632
    %vm4634 = vweird.f32 %v4627
    %vm4635 = vweird.f32 %v4629
    %vm4636 = vmor %vm4634, %vm4635
    %v4637 = vsel %vm4636, %v4629, %v4633
    %v4638 = vand.u32 2147483647, %v4627
    %vm4639 = vcmp.eq.f32.partialorder %v4638, 8.507059e+37
    %v4640 = vand.u32 %v4627, 2147483648
    %v4641 = vor.u32 1.1754944e-38, %v4640
    %v4642 = vsel %vm4639, %v4641, %v4637
    %v4643 = vmul.f32 1.0, %v4642
    %v4644 = vrcp.pop %v4628
    %v4645 = vmul.f32 %v4628, %v4644
    %v4646 = vsub.f32 1.0, %v4645
    %v4647 = vmul.f32 %v4644, %v4646
    %v4648 = vadd.f32 %v4644, %v4647
    %vm4649 = vweird.f32 %v4628
    %vm4650 = vweird.f32 %v4644
    %vm4651 = vmor %vm4649, %vm4650
    %v4652 = vsel %vm4651, %v4644, %v4648
    %v4653 = vand.u32 2147483647, %v4628
    %vm4654 = vcmp.eq.f32.partialorder %v4653, 8.507059e+37
    %v4655 = vand.u32 %v4628, 2147483648
    %v4656 = vor.u32 1.1754944e-38, %v4655
    %v4657 = vsel %vm4654, %v4656, %v4652
    %v4658 = vmul.f32 1.0, %v4657
    %v4659 = vmul.f32 %v4603, %v4294
    %v4660 = vmul.f32 %v4618, %v4295
    %v4661 = vmul.f32 %v4565, %v4619
    %v4662 = vmul.f32 %v4580, %v4620
    %v4663 = vadd.f32 %v4659, %v4661
    %v4664 = vadd.f32 %v4660, %v4662
    %v4665 = vtanh.pop %v4663
    %v4666 = vtanh.pop %v4664
    %v4667 = vmul.f32 %v4643, %v4665
    %v4668 = vmul.f32 %v4658, %v4666
    %v4669 = vmul.u32 %v946, 7
    %v4670 = vmul.u32 %v947, 7
    %v4671 = vadd.s32 %v944, %v4669
    %v4672 = vadd.s32 %v945, %v4670
    %vm4673 = vcmp.eq.s32.totalorder %v2085, %v4671
    %vm4674 = vcmp.eq.s32.totalorder %v2085, %v4672
    %v4675 = vsel %vm4673, %v4667, %v4306
    %v4676 = vsel %vm4674, %v4668, %v4307
    %4677 = vst [vmem:[#allocation2] sm:$0xff] %v4667
    %4678 = vst [vmem:[#allocation2 + $0x8] sm:$0xff] %v4668
    %4679 = vst [vmem:[#allocation3] sm:$0xff] %v4663
    %4680 = vst [vmem:[#allocation3 + $0x8] sm:$0xff] %v4664
    %4681 = vst [vmem:[#allocation4] sm:$0xff] %v4675
    %4682 = vst [vmem:[#allocation4 + $0x8] sm:$0xff] %v4676
    // Predicated region
    $region66: #{tpu_custom_call.1} parent=1 // pred_check
      %p4683 = pneg %p134
    $region67: #{tpu_custom_call.1} parent=1 // pred_check_branch
      %4685 = sbr.rel (%p4683) target = $region69
    $region68: #{tpu_custom_call.1} parent=1 // pred_region
      %v4686 = vpack.c.bf16 %v4675, %v4675
      %v4687 = vpack.c.bf16 %v4676, %v4676
      %v4688 = vld [vmem:[#allocation16] sm:$0xf]
      %v4689 = vld [vmem:[#allocation16 + $0x4] sm:$0xf]
      %v4690 = vld [vmem:[#allocation16 + $0x8] sm:$0xf]
      %v4691 = vld [vmem:[#allocation16 + $0xc] sm:$0xf]
      %v4692 = vld [vmem:[#allocation16 + $0x10] sm:$0xf]
      %v4693 = vld [vmem:[#allocation16 + $0x14] sm:$0xf]
      %v4694 = vld [vmem:[#allocation16 + $0x18] sm:$0xf]
      %v4695 = vld [vmem:[#allocation16 + $0x1c] sm:$0xf]
      %v4696 = vld [vmem:[#allocation16 + $0x20] sm:$0xf]
      %v4697 = vld [vmem:[#allocation16 + $0x24] sm:$0xf]
      %v4698 = vld [vmem:[#allocation16 + $0x28] sm:$0xf]
      %v4699 = vld [vmem:[#allocation16 + $0x2c] sm:$0xf]
      %v4700 = vld [vmem:[#allocation16 + $0x30] sm:$0xf]
      %v4701 = vld [vmem:[#allocation16 + $0x34] sm:$0xf]
      %v4702 = vld [vmem:[#allocation16 + $0x38] sm:$0xf]
      %v4703 = vld [vmem:[#allocation16 + $0x3c] sm:$0xf]
      %v4704 = vld [vmem:[#allocation16 + $0x40] sm:$0xf]
      %v4705 = vld [vmem:[#allocation16 + $0x44] sm:$0xf]
      %v4706 = vld [vmem:[#allocation16 + $0x48] sm:$0xf]
      %v4707 = vld [vmem:[#allocation16 + $0x4c] sm:$0xf]
      %v4708 = vld [vmem:[#allocation16 + $0x50] sm:$0xf]
      %v4709 = vld [vmem:[#allocation16 + $0x54] sm:$0xf]
      %v4710 = vld [vmem:[#allocation16 + $0x58] sm:$0xf]
      %v4711 = vld [vmem:[#allocation16 + $0x5c] sm:$0xf]
      %v4712 = vld [vmem:[#allocation16 + $0x60] sm:$0xf]
      %v4713 = vld [vmem:[#allocation16 + $0x64] sm:$0xf]
      %v4714 = vld [vmem:[#allocation16 + $0x68] sm:$0xf]
      %v4715 = vld [vmem:[#allocation16 + $0x6c] sm:$0xf]
      %v4716 = vld [vmem:[#allocation16 + $0x70] sm:$0xf]
      %v4717 = vld [vmem:[#allocation16 + $0x74] sm:$0xf]
      %v4718 = vld [vmem:[#allocation16 + $0x78] sm:$0xf]
      %v4719 = vld [vmem:[#allocation16 + $0x7c] sm:$0xf]
      %v4720 = vld [vmem:[%s8] sm:$0x1]
      %v4722 = vperm.slane %v4720, 0
      %v4756 = vunpack.c.l.b16 %v4688
      %v4757 = vunpack.c.l.b16 %v4689
      %v4758 = vunpack.c.l.b16 %v4690
      %v4759 = vunpack.c.l.b16 %v4691
      %v4760 = vunpack.c.l.b16 %v4692
      %v4761 = vunpack.c.l.b16 %v4693
      %v4762 = vunpack.c.l.b16 %v4694
      %v4763 = vunpack.c.l.b16 %v4695
      %v4764 = vunpack.c.l.b16 %v4696
      %v4765 = vunpack.c.l.b16 %v4697
      %v4766 = vunpack.c.l.b16 %v4698
      %v4767 = vunpack.c.l.b16 %v4699
      %v4768 = vunpack.c.l.b16 %v4700
      %v4769 = vunpack.c.l.b16 %v4701
      %v4770 = vunpack.c.l.b16 %v4702
      %v4771 = vunpack.c.l.b16 %v4703
      %v4772 = vunpack.c.l.b16 %v4704
      %v4773 = vunpack.c.l.b16 %v4705
      %v4774 = vunpack.c.l.b16 %v4706
      %v4775 = vunpack.c.l.b16 %v4707
      %v4776 = vunpack.c.l.b16 %v4708
      %v4777 = vunpack.c.l.b16 %v4709
      %v4778 = vunpack.c.l.b16 %v4710
      %v4779 = vunpack.c.l.b16 %v4711
      %v4780 = vunpack.c.l.b16 %v4712
      %v4781 = vunpack.c.l.b16 %v4713
      %v4782 = vunpack.c.l.b16 %v4714
      %v4783 = vunpack.c.l.b16 %v4715
      %v4784 = vunpack.c.l.b16 %v4716
      %v4785 = vunpack.c.l.b16 %v4717
      %v4786 = vunpack.c.l.b16 %v4718
      %v4787 = vunpack.c.l.b16 %v4719
      %v4788 = vpack.c.b16 %v4757, %v4756
      %v4789 = vpack.c.b16 %v4759, %v4758
      %v4790 = vpack.c.b16 %v4761, %v4760
      %v4791 = vpack.c.b16 %v4763, %v4762
      %v4792 = vpack.c.b16 %v4765, %v4764
      %v4793 = vpack.c.b16 %v4767, %v4766
      %v4794 = vpack.c.b16 %v4769, %v4768
      %v4795 = vpack.c.b16 %v4771, %v4770
      %v4796 = vpack.c.b16 %v4773, %v4772
      %v4797 = vpack.c.b16 %v4775, %v4774
      %v4798 = vpack.c.b16 %v4777, %v4776
      %v4799 = vpack.c.b16 %v4779, %v4778
      %v4800 = vpack.c.b16 %v4781, %v4780
      %v4801 = vpack.c.b16 %v4783, %v4782
      %v4802 = vpack.c.b16 %v4785, %v4784
      %v4803 = vpack.c.b16 %v4787, %v4786
      %4820 = vmatpush.bf16.msra.mxu0 %v4795
      %4821 = vmatpush.bf16.msra.mxu0 %v4794
      %4822 = vmatpush.bf16.msra.mxu0 %v4793
      %4823 = vmatpush.bf16.msra.mxu0 %v4792
      %4824 = vmatpush.bf16.msra.mxu0 %v4791
      %4825 = vmatpush.bf16.msra.mxu0 %v4790
      %4826 = vmatpush.bf16.msra.mxu0 %v4789
      %4827 = vmatpush.bf16.msra.mxu0 %v4788
      %4828 = vmatmul.bf16.gmra.mxu0 %v4686
      %v4829 = vpop.f32.mrf.mxu0
      %v4830 = vadd.f32 %v4722, %v4829
      %v4831 = vpop.f32.mrf.mxu0
      %4832 = vdwg.mxu0
      %4833 = vmatpush.bf16.msra.mxu0 %v4803
      %4834 = vmatpush.bf16.msra.mxu0 %v4802
      %4835 = vmatpush.bf16.msra.mxu0 %v4801
      %4836 = vmatpush.bf16.msra.mxu0 %v4800
      %4837 = vmatpush.bf16.msra.mxu0 %v4799
      %4838 = vmatpush.bf16.msra.mxu0 %v4798
      %4839 = vmatpush.bf16.msra.mxu0 %v4797
      %4840 = vmatpush.bf16.msra.mxu0 %v4796
      %4841 = vmatmul.bf16.gmra.mxu0 %v4687
      %v4842 = vpop.f32.mrf.mxu0
      %v4843 = vadd.f32 %v4830, %v4842
      %v4844 = vpop.f32.mrf.mxu0
      %4845 = vdwg.mxu0
      %vm4846 = vcmp.lt.s32.totalorder %v938, 14
      %v4847 = vsel %vm4846, %v4843, -1e+30
      %4848 = vmax.xlane.f32.xlu0 %v4847
      %v4849 = vpop.xlane.xlu0 %4848
      %v4850 = vsub.f32 %v4847, %v4849
      %v4851 = vmul.f32 %v4850, 1.442695
      %v4852 = vpow.pop %v4851
      %4853 = vadd.xlane.f32.xlu0 %v4852
      %v4854 = vpop.xlane.xlu0 %4853
      %v4855 = vlog2.pop %v4854
      %v4856 = vmul.f32 %v4855, 0.6931472
      %v4857 = vsub.f32 %v4850, %v4856
      %v4858 = vsel %vm4846, %v4857, 0.0
      %4859 = vst [vmem:[#allocation18] sm:$0xff] %v4858
    $region69: #{tpu_custom_call.1} parent=1 // pred_fallthru
      _
    // Predicated region
    $region70: #{tpu_custom_call.1} parent=1 // pred_check
      _
    $region71: #{tpu_custom_call.1} parent=1 // pred_check_branch
      %4861 = sbr.rel (0) target = $region73
    $region72: #{tpu_custom_call.1} parent=1 // pred_region
      %4863 = vsyncadd [#allocation9], 0
      %s4865 = sshll.u32 [#allocation18], 4
      %s4866 = int_to_ptr.vmem [resolvable:$true] %s4865
      %s4867 = sshll.u32 %s9, 4
      %s4868 = int_to_ptr.hbm [resolvable:$true] %s4867
      %4870 = dma.vmem_to_hbm [thread:$0]  %s4866, 128, %s4868, [#allocation9]
    $region73: #{tpu_custom_call.1} parent=1 // pred_fallthru
      _
    // Predicated region
    $region74: #{tpu_custom_call.1} parent=1 // pred_check
      _
    $region75: #{tpu_custom_call.1} parent=1 // pred_check_branch
      %4872 = sbr.rel (0) target = $region77
    $region76: #{tpu_custom_call.1} parent=1 // pred_region
      %4874 = dma.done [#allocation9], 128
    $region77: #{tpu_custom_call.1} parent=1 // pred_fallthru
      _
    %4875 = vsyncpa [#allocation8], 1
    %4876 = vsyncpa [#allocation11], 1
    %4877 = vsyncpa [#allocation14], 1
    %4878 = vsyncpa [#allocation17], 1
    %4879 = vsyncpa [#allocation9], 1

</llo_original>
